<compile_context>
chip_gen: v7x
topology: tpu7x:2x2x1
jax: 0.10.0
libtpu: 0.0.40
codegen_flags: <defaults>
</compile_context>

<pallas_src>
import functools

import jax
import jax.numpy as jnp
from jax import lax
from jax.experimental import pallas as pl
from jax.experimental.pallas import tpu as pltpu

_LANE = 128
_SUBLANE = 8


def _round_up(x, m):
    return ((x + m - 1) // m) * m


# ----------------------------- Pallas kernel -------------------------------

def _net_kernel(x_ref, w_ih_ref, w_hh_ref, b_ref, w_fc_ref, b_fc_ref,
                out_ref, gates_ref):
    """Fused stacked-LSTM + FC forward (wavefront-scheduled over layers).

    x_ref     : (T, BP, KP)   f32  time-major, batch-/lane-padded input
    w_ih_ref  : (L, KP, G)    bf16 input->gate weights, gate blocks [i,f,o,g]
    w_hh_ref  : (L, HP, G)    bf16 hidden->gate weights
    b_ref     : (L, 1, G)     f32  fused b_ih + b_hh
    w_fc_ref  : (HP, OP)      bf16 final Linear weights
    b_fc_ref  : (1, OP)       f32
    out_ref   : (BP, OP)      f32  lane-dense output slab
    gates_ref : (T, BP, G)    f32  VMEM scratch: hoisted layer-0 projection
    """
    T, BP, KP = x_ref.shape
    L, HP, G = w_hh_ref.shape
    f32 = jnp.float32
    bf16 = jnp.bfloat16

    # (1) Hoisted layer-0 input projection: one (T*BP, KP) @ (KP, G) bf16
    #     matmul (+ bias) for the whole sequence; only h @ W_hh remains on the
    #     serial recurrence path for layer 0.
    x_flat = x_ref[...].reshape(T * BP, KP).astype(bf16)
    gates_ref[...] = (
        jnp.dot(x_flat, w_ih_ref[0], preferred_element_type=f32) + b_ref[0]
    ).reshape(T, BP, G)

    def lstm_cell(gates, c):
        # Gate blocks packed [i, f, o, g]: one sigmoid pass over the aligned
        # [i|f|o] super-block, one tanh pass for g.  sigmoid(x) == 0.5*tanh(x/2)
        # + 0.5 -> single EUP op per element, no divide on the critical path.
        sig = 0.5 * jnp.tanh(0.5 * gates[:, :3 * HP]) + 0.5
        g_t = jnp.tanh(gates[:, 3 * HP:])
        i_g = sig[:, 0 * HP:1 * HP]
        f_g = sig[:, 1 * HP:2 * HP]
        o_g = sig[:, 2 * HP:3 * HP]
        c = f_g * c + i_g * g_t
        h = o_g * jnp.tanh(c)
        return h, c

    zeros_h = jnp.zeros((BP, HP), f32)
    h = [zeros_h] * L          # per-layer hidden state
    c = [zeros_h] * L          # per-layer cell state
    out = [zeros_h] * L        # layer l's most recent step output

    # (2) Wavefront schedule: wave w runs (layer l, step w - l).  Deeper layers
    #     go first within a wave so they read layer l-1's previous-wave output
    #     before it is overwritten.  Independent per-layer steps inside one
    #     wave overlap on MXU/EUP, cutting the dependent-step chain to ~T+L-1.
    for wave in range(T + L - 1):
        for l in range(L - 1, -1, -1):
            t = wave - l
            if t < 0 or t >= T:
                continue
            if l == 0:
                g = gates_ref[t]                              # hoisted proj.
            else:
                g = (jnp.dot(out[l - 1].astype(bf16), w_ih_ref[l][:HP],
                             preferred_element_type=f32) + b_ref[l])
            g = g + jnp.dot(h[l].astype(bf16), w_hh_ref[l],
                            preferred_element_type=f32)
            h[l], c[l] = lstm_cell(g, c[l])
            out[l] = h[l]

    # (3) Final Linear on the top layer's last-step hidden state (lane-dense).
    out_ref[...] = (jnp.dot(out[L - 1].astype(bf16), w_fc_ref[...],
                            preferred_element_type=f32) + b_fc_ref[...])


# ------------------------------ JAX wrapper --------------------------------

@functools.partial(jax.jit, static_argnames=("out_dim",))
def net_forward(x, packed, *, out_dim):
    """Equivalent of Net.forward: stacked LSTM (zero h0/c0, batch_first input)
    followed by Linear on the last timestep of the top layer's output.

    x: (B, T, input_dim) float32; packed: output of pack_params()."""
    B, T, D = x.shape
    L, KP, G = packed["w_ih"].shape
    HP = packed["w_hh"].shape[1]
    OP = packed["w_fc"].shape[1]
    BP = _round_up(max(B, _SUBLANE), _SUBLANE)

    # Time-major; batch padded to 8 sublanes, feature lanes padded to 128.
    x_tm = jnp.transpose(x, (1, 0, 2)).astype(jnp.float32)          # (T, B, D)
    x_pad = jnp.zeros((T, BP, KP), jnp.float32).at[:, :B, :D].set(x_tm)

    # Single kernel invocation, no grid: whole operands resident in VMEM
    # (memory_space-only specs -> no pointless double-buffering of weights).
    vmem_spec = pl.BlockSpec(memory_space=pltpu.MemorySpace.VMEM)
    out_pad = pl.pallas_call(
        _net_kernel,
        out_shape=jax.ShapeDtypeStruct((BP, OP), jnp.float32),
        in_specs=[vmem_spec] * 6,
        out_specs=vmem_spec,
        scratch_shapes=[pltpu.VMEM((T, BP, G), jnp.float32)],
    )(x_pad, packed["w_ih"], packed["w_hh"], packed["b"],
      packed["w_fc"], packed["b_fc"])
    return out_pad[:B, :out_dim]


# --------------------------- parameter handling ----------------------------

def init_params(key, input_dim, hidden_dim, output_dim, num_layers):
    """PyTorch-like uniform(-k, k) synthetic parameters, logical layout.

    Gate order [i, f, g, o] (torch order); weights stored transposed vs torch:
    w_ih: (d_in, 4H), w_hh: (H, 4H), b = b_ih + b_hh: (4H,)."""
    k = 1.0 / float(hidden_dim) ** 0.5
    params = {"lstm": []}
    d_in = input_dim
    for _ in range(num_layers):
        key, k1, k2, k3, k4 = jax.random.split(key, 5)
        w_ih = jax.random.uniform(k1, (d_in, 4 * hidden_dim), jnp.float32, -k, k)
        w_hh = jax.random.uniform(k2, (hidden_dim, 4 * hidden_dim), jnp.float32, -k, k)
        b_ih = jax.random.uniform(k3, (4 * hidden_dim,), jnp.float32, -k, k)
        b_hh = jax.random.uniform(k4, (4 * hidden_dim,), jnp.float32, -k, k)
        params["lstm"].append({"w_ih": w_ih, "w_hh": w_hh, "b": b_ih + b_hh})
        d_in = hidden_dim
    key, k5, k6 = jax.random.split(key, 3)
    w_fc = jax.random.uniform(k5, (hidden_dim, output_dim), jnp.float32, -k, k)
    b_fc = jax.random.uniform(k6, (output_dim,), jnp.float32, -k, k)
    params["fc"] = {"w": w_fc, "b": b_fc}
    return params


def pack_params(params):
    """One-time repack into the lane-dense kernel layout (bf16 weights).

    Kernel gate-block order is [i, f, o, g] (so i/f/o share one contiguous
    sigmoid pass); each gate sits at a 128-lane-aligned offset k*HP.  Padded
    rows/lanes are zero, which keeps padded hidden lanes exactly zero through
    the recurrence (relies on tanh(0)=0 and zero initial state — do NOT add
    nonzero h0/c0 or forget-gate bias offsets without masking)."""
    lstm = params["lstm"]
    L = len(lstm)
    H = lstm[0]["w_hh"].shape[0]
    D0 = lstm[0]["w_ih"].shape[0]
    O = params["fc"]["w"].shape[1]
    HP = _round_up(H, _LANE)
    KP = max(_round_up(D0, _LANE), HP)       # common padded input-row dim
    OP = _round_up(O, _LANE)
    G = 4 * HP
    torch_gate = (0, 1, 3, 2)                # kernel block k <- torch gate idx

    w_ih = jnp.zeros((L, KP, G), jnp.float32)
    w_hh = jnp.zeros((L, HP, G), jnp.float32)
    b = jnp.zeros((L, 1, G), jnp.float32)
    for l, lp in enumerate(lstm):
        d_in = lp["w_ih"].shape[0]
        for k, src in enumerate(torch_gate):
            w_ih = w_ih.at[l, :d_in, k * HP:k * HP + H].set(
                lp["w_ih"][:, src * H:(src + 1) * H])
            w_hh = w_hh.at[l, :H, k * HP:k * HP + H].set(
                lp["w_hh"][:, src * H:(src + 1) * H])
            b = b.at[l, 0, k * HP:k * HP + H].set(lp["b"][src * H:(src + 1) * H])
    w_fc = jnp.zeros((HP, OP), jnp.float32).at[:H, :O].set(params["fc"]["w"])
    b_fc = jnp.zeros((1, OP), jnp.float32).at[0, :O].set(params["fc"]["b"])
    # bf16 weights: MXU-native throughput, half the weight VMEM/DMA; f32
    # accumulation preserved via preferred_element_type inside the kernel.
    return {"w_ih": w_ih.astype(jnp.bfloat16),
            "w_hh": w_hh.astype(jnp.bfloat16),
            "b": b,
            "w_fc": w_fc.astype(jnp.bfloat16),
            "b_fc": b_fc}


# --------------------------- pure-JAX reference ----------------------------

def net_reference(x, params):
    """Unpadded f32 pure-JAX reference (matches PyTorch LSTM+Linear forward)."""
    h_seq = jnp.transpose(x, (1, 0, 2)).astype(jnp.float32)   # (T, B, D)
    B = h_seq.shape[1]
    for lp in params["lstm"]:
        H = lp["w_hh"].shape[0]

        def step(carry, x_t, lp=lp, H=H):
            h, c = carry
            gates = x_t @ lp["w_ih"] + h @ lp["w_hh"] + lp["b"]
            i = jax.nn.sigmoid(gates[:, 0 * H:1 * H])
            f = jax.nn.sigmoid(gates[:, 1 * H:2 * H])
            g = jnp.tanh(gates[:, 2 * H:3 * H])
            o = jax.nn.sigmoid(gates[:, 3 * H:4 * H])
            c = f * c + i * g
            h = o * jnp.tanh(c)
            return (h, c), h

        init = (jnp.zeros((B, H), jnp.float32), jnp.zeros((B, H), jnp.float32))
        _, h_seq = lax.scan(step, init, h_seq)
    return h_seq[-1] @ params["fc"]["w"] + params["fc"]["b"]


if __name__ == "__main__":
    # Shapes implied by the module: hidden_dim=10, output_dim=1; small batch /
    # seq / input_dim / layers.
    batch, seq_len, input_dim = 2, 8, 4
    hidden_dim, output_dim, num_layers = 10, 1, 2

    key = jax.random.PRNGKey(0)
    x_key, p_key = jax.random.split(key)
    x = jax.random.normal(x_key, (batch, seq_len, input_dim), jnp.float32)

    params = init_params(p_key, input_dim, hidden_dim, output_dim, num_layers)
    packed = pack_params(params)                 # one-time weight repack

    out = net_forward(x, packed, out_dim=output_dim)
    jax.block_until_ready(out)
    assert out.shape == (batch, output_dim)

    ref = net_reference(x, params)               # f32 reference
    # bf16 weights => loosen tolerance slightly vs the all-f32 check.
    assert jnp.allclose(out, ref, rtol=5e-2, atol=5e-2), (out, ref)
    print("KERNEL_OK")
</pallas_src>

<mosaic_0001>
module attributes {stable_mosaic.version = 11 : i64} {
  func.func @_net_kernel(%arg0: memref<8x8x128xf32, #tpu.memory_space<vmem>>, %arg1: memref<2x128x512xbf16, #tpu.memory_space<vmem>>, %arg2: memref<2x128x512xbf16, #tpu.memory_space<vmem>>, %arg3: memref<2x1x512xf32, #tpu.memory_space<vmem>>, %arg4: memref<128x128xbf16, #tpu.memory_space<vmem>>, %arg5: memref<1x128xf32, #tpu.memory_space<vmem>>, %arg6: memref<8x128xf32, #tpu.memory_space<vmem>>, %arg7: memref<8x8x512xf32, #tpu.memory_space<vmem>>) attributes {dimension_semantics = [], scalar_prefetch = 0 : i64, scratch_operands = 1 : i64, tpu.core_type = #tpu.core_type<tc>} {
    %c0 = arith.constant 0 : index
    %c0_0 = arith.constant 0 : index
    %c0_1 = arith.constant 0 : index
    %0 = vector.load %arg0[%c0, %c0_0, %c0_1] : memref<8x8x128xf32, #tpu.memory_space<vmem>>, vector<8x8x128xf32>
    %1 = vector.shape_cast %0 : vector<8x8x128xf32> to vector<64x128xf32>
    %2 = arith.truncf %1 : vector<64x128xf32> to vector<64x128xbf16>
    %c0_2 = arith.constant 0 : index
    %c0_3 = arith.constant 0 : index
    %c0_4 = arith.constant 0 : index
    %3 = vector.load %arg1[%c0_2, %c0_3, %c0_4] : memref<2x128x512xbf16, #tpu.memory_space<vmem>>, vector<1x128x512xbf16>
    %4 = vector.shape_cast %3 : vector<1x128x512xbf16> to vector<128x512xbf16>
    %cst = arith.constant dense<0.000000e+00> : vector<64x512xf32>
    %5 = tpu.matmul %2, %4, %cst {dimension_numbers = #tpu.dot_dimension_numbers<[1], [0], [0], [1], [0, 0, 1, 1], [], []>} : vector<64x128xbf16>, vector<128x512xbf16>, vector<64x512xf32> -> vector<64x512xf32>
    %c0_5 = arith.constant 0 : index
    %c0_6 = arith.constant 0 : index
    %c0_7 = arith.constant 0 : index
    %6 = vector.load %arg3[%c0_5, %c0_6, %c0_7] : memref<2x1x512xf32, #tpu.memory_space<vmem>>, vector<1x1x512xf32>
    %7 = vector.shape_cast %6 : vector<1x1x512xf32> to vector<1x512xf32>
    %8 = vector.broadcast %7 : vector<1x512xf32> to vector<64x512xf32>
    %9 = arith.addf %5, %8 : vector<64x512xf32>
    %10 = vector.shape_cast %9 : vector<64x512xf32> to vector<8x8x512xf32>
    %c0_8 = arith.constant 0 : index
    %c0_9 = arith.constant 0 : index
    %c0_10 = arith.constant 0 : index
    %11 = vector.load %arg7[%c0_8, %c0_9, %c0_10] : memref<8x8x512xf32, #tpu.memory_space<vmem>>, vector<8x8x512xf32>
    tpu.vector_store %arg7[%c0_8, %c0_9, %c0_10], %10 {strides = array<i32>} : memref<8x8x512xf32, #tpu.memory_space<vmem>>, vector<8x8x512xf32>,
    %cst_11 = arith.constant 0.000000e+00 : f32
    %12 = vector.broadcast %cst_11 : f32 to vector<8x128xf32>
    %c0_12 = arith.constant 0 : index
    %c0_13 = arith.constant 0 : index
    %c0_14 = arith.constant 0 : index
    %13 = vector.load %arg7[%c0_12, %c0_13, %c0_14] : memref<8x8x512xf32, #tpu.memory_space<vmem>>, vector<1x8x512xf32>
    %14 = vector.shape_cast %13 : vector<1x8x512xf32> to vector<8x512xf32>
    %15 = arith.truncf %12 : vector<8x128xf32> to vector<8x128xbf16>
    %c0_15 = arith.constant 0 : index
    %c0_16 = arith.constant 0 : index
    %c0_17 = arith.constant 0 : index
    %16 = vector.load %arg2[%c0_15, %c0_16, %c0_17] : memref<2x128x512xbf16, #tpu.memory_space<vmem>>, vector<1x128x512xbf16>
    %17 = vector.shape_cast %16 : vector<1x128x512xbf16> to vector<128x512xbf16>
    %cst_18 = arith.constant dense<0.000000e+00> : vector<8x512xf32>
    %18 = tpu.matmul %15, %17, %cst_18 {dimension_numbers = #tpu.dot_dimension_numbers<[1], [0], [0], [1], [0, 0, 1, 1], [], []>} : vector<8x128xbf16>, vector<128x512xbf16>, vector<8x512xf32> -> vector<8x512xf32>
    %19 = arith.addf %14, %18 : vector<8x512xf32>
    %20 = vector.extract_strided_slice %19 {offsets = [0, 0], sizes = [8, 384], strides = [1, 1]} : vector<8x512xf32> to vector<8x384xf32>
    %cst_19 = arith.constant 5.000000e-01 : f32
    %21 = vector.broadcast %cst_19 : f32 to vector<8x384xf32>
    %22 = arith.mulf %21, %20 : vector<8x384xf32>
    %23 = math.tanh %22 : vector<8x384xf32>
    %cst_20 = arith.constant 5.000000e-01 : f32
    %24 = vector.broadcast %cst_20 : f32 to vector<8x384xf32>
    %25 = arith.mulf %24, %23 : vector<8x384xf32>
    %cst_21 = arith.constant 5.000000e-01 : f32
    %26 = vector.broadcast %cst_21 : f32 to vector<8x384xf32>
    %27 = arith.addf %25, %26 : vector<8x384xf32>
    %28 = vector.extract_strided_slice %19 {offsets = [0, 384], sizes = [8, 128], strides = [1, 1]} : vector<8x512xf32> to vector<8x128xf32>
    %29 = math.tanh %28 : vector<8x128xf32>
    %30 = vector.extract_strided_slice %27 {offsets = [0, 0], sizes = [8, 128], strides = [1, 1]} : vector<8x384xf32> to vector<8x128xf32>
    %31 = vector.extract_strided_slice %27 {offsets = [0, 128], sizes = [8, 128], strides = [1, 1]} : vector<8x384xf32> to vector<8x128xf32>
    %32 = vector.extract_strided_slice %27 {offsets = [0, 256], sizes = [8, 128], strides = [1, 1]} : vector<8x384xf32> to vector<8x128xf32>
    %33 = arith.mulf %31, %12 : vector<8x128xf32>
    %34 = arith.mulf %30, %29 : vector<8x128xf32>
    %35 = arith.addf %33, %34 : vector<8x128xf32>
    %36 = math.tanh %35 : vector<8x128xf32>
    %37 = arith.mulf %32, %36 : vector<8x128xf32>
    %38 = arith.truncf %37 : vector<8x128xf32> to vector<8x128xbf16>
    %c1 = arith.constant 1 : index
    %c0_22 = arith.constant 0 : index
    %c0_23 = arith.constant 0 : index
    %39 = vector.load %arg1[%c1, %c0_22, %c0_23] : memref<2x128x512xbf16, #tpu.memory_space<vmem>>, vector<1x128x512xbf16>
    %40 = vector.shape_cast %39 : vector<1x128x512xbf16> to vector<128x512xbf16>
    %cst_24 = arith.constant dense<0.000000e+00> : vector<8x512xf32>
    %41 = tpu.matmul %38, %40, %cst_24 {dimension_numbers = #tpu.dot_dimension_numbers<[1], [0], [0], [1], [0, 0, 1, 1], [], []>} : vector<8x128xbf16>, vector<128x512xbf16>, vector<8x512xf32> -> vector<8x512xf32>
    %c1_25 = arith.constant 1 : index
    %c0_26 = arith.constant 0 : index
    %c0_27 = arith.constant 0 : index
    %42 = vector.load %arg3[%c1_25, %c0_26, %c0_27] : memref<2x1x512xf32, #tpu.memory_space<vmem>>, vector<1x1x512xf32>
    %43 = vector.shape_cast %42 : vector<1x1x512xf32> to vector<1x512xf32>
    %44 = vector.broadcast %43 : vector<1x512xf32> to vector<8x512xf32>
    %45 = arith.addf %41, %44 : vector<8x512xf32>
    %46 = arith.truncf %12 : vector<8x128xf32> to vector<8x128xbf16>
    %c1_28 = arith.constant 1 : index
    %c0_29 = arith.constant 0 : index
    %c0_30 = arith.constant 0 : index
    %47 = vector.load %arg2[%c1_28, %c0_29, %c0_30] : memref<2x128x512xbf16, #tpu.memory_space<vmem>>, vector<1x128x512xbf16>
    %48 = vector.shape_cast %47 : vector<1x128x512xbf16> to vector<128x512xbf16>
    %cst_31 = arith.constant dense<0.000000e+00> : vector<8x512xf32>
    %49 = tpu.matmul %46, %48, %cst_31 {dimension_numbers = #tpu.dot_dimension_numbers<[1], [0], [0], [1], [0, 0, 1, 1], [], []>} : vector<8x128xbf16>, vector<128x512xbf16>, vector<8x512xf32> -> vector<8x512xf32>
    %50 = arith.addf %45, %49 : vector<8x512xf32>
    %51 = vector.extract_strided_slice %50 {offsets = [0, 0], sizes = [8, 384], strides = [1, 1]} : vector<8x512xf32> to vector<8x384xf32>
    %cst_32 = arith.constant 5.000000e-01 : f32
    %52 = vector.broadcast %cst_32 : f32 to vector<8x384xf32>
    %53 = arith.mulf %52, %51 : vector<8x384xf32>
    %54 = math.tanh %53 : vector<8x384xf32>
    %cst_33 = arith.constant 5.000000e-01 : f32
    %55 = vector.broadcast %cst_33 : f32 to vector<8x384xf32>
    %56 = arith.mulf %55, %54 : vector<8x384xf32>
    %cst_34 = arith.constant 5.000000e-01 : f32
    %57 = vector.broadcast %cst_34 : f32 to vector<8x384xf32>
    %58 = arith.addf %56, %57 : vector<8x384xf32>
    %59 = vector.extract_strided_slice %50 {offsets = [0, 384], sizes = [8, 128], strides = [1, 1]} : vector<8x512xf32> to vector<8x128xf32>
    %60 = math.tanh %59 : vector<8x128xf32>
    %61 = vector.extract_strided_slice %58 {offsets = [0, 0], sizes = [8, 128], strides = [1, 1]} : vector<8x384xf32> to vector<8x128xf32>
    %62 = vector.extract_strided_slice %58 {offsets = [0, 128], sizes = [8, 128], strides = [1, 1]} : vector<8x384xf32> to vector<8x128xf32>
    %63 = vector.extract_strided_slice %58 {offsets = [0, 256], sizes = [8, 128], strides = [1, 1]} : vector<8x384xf32> to vector<8x128xf32>
    %64 = arith.mulf %62, %12 : vector<8x128xf32>
    %65 = arith.mulf %61, %60 : vector<8x128xf32>
    %66 = arith.addf %64, %65 : vector<8x128xf32>
    %67 = math.tanh %66 : vector<8x128xf32>
    %68 = arith.mulf %63, %67 : vector<8x128xf32>
    %c1_35 = arith.constant 1 : index
    %c0_36 = arith.constant 0 : index
    %c0_37 = arith.constant 0 : index
    %69 = vector.load %arg7[%c1_35, %c0_36, %c0_37] : memref<8x8x512xf32, #tpu.memory_space<vmem>>, vector<1x8x512xf32>
    %70 = vector.shape_cast %69 : vector<1x8x512xf32> to vector<8x512xf32>
    %71 = arith.truncf %37 : vector<8x128xf32> to vector<8x128xbf16>
    %c0_38 = arith.constant 0 : index
    %c0_39 = arith.constant 0 : index
    %c0_40 = arith.constant 0 : index
    %72 = vector.load %arg2[%c0_38, %c0_39, %c0_40] : memref<2x128x512xbf16, #tpu.memory_space<vmem>>, vector<1x128x512xbf16>
    %73 = vector.shape_cast %72 : vector<1x128x512xbf16> to vector<128x512xbf16>
    %cst_41 = arith.constant dense<0.000000e+00> : vector<8x512xf32>
    %74 = tpu.matmul %71, %73, %cst_41 {dimension_numbers = #tpu.dot_dimension_numbers<[1], [0], [0], [1], [0, 0, 1, 1], [], []>} : vector<8x128xbf16>, vector<128x512xbf16>, vector<8x512xf32> -> vector<8x512xf32>
    %75 = arith.addf %70, %74 : vector<8x512xf32>
    %76 = vector.extract_strided_slice %75 {offsets = [0, 0], sizes = [8, 384], strides = [1, 1]} : vector<8x512xf32> to vector<8x384xf32>
    %cst_42 = arith.constant 5.000000e-01 : f32
    %77 = vector.broadcast %cst_42 : f32 to vector<8x384xf32>
    %78 = arith.mulf %77, %76 : vector<8x384xf32>
    %79 = math.tanh %78 : vector<8x384xf32>
    %cst_43 = arith.constant 5.000000e-01 : f32
    %80 = vector.broadcast %cst_43 : f32 to vector<8x384xf32>
    %81 = arith.mulf %80, %79 : vector<8x384xf32>
    %cst_44 = arith.constant 5.000000e-01 : f32
    %82 = vector.broadcast %cst_44 : f32 to vector<8x384xf32>
    %83 = arith.addf %81, %82 : vector<8x384xf32>
    %84 = vector.extract_strided_slice %75 {offsets = [0, 384], sizes = [8, 128], strides = [1, 1]} : vector<8x512xf32> to vector<8x128xf32>
    %85 = math.tanh %84 : vector<8x128xf32>
    %86 = vector.extract_strided_slice %83 {offsets = [0, 0], sizes = [8, 128], strides = [1, 1]} : vector<8x384xf32> to vector<8x128xf32>
    %87 = vector.extract_strided_slice %83 {offsets = [0, 128], sizes = [8, 128], strides = [1, 1]} : vector<8x384xf32> to vector<8x128xf32>
    %88 = vector.extract_strided_slice %83 {offsets = [0, 256], sizes = [8, 128], strides = [1, 1]} : vector<8x384xf32> to vector<8x128xf32>
    %89 = arith.mulf %87, %35 : vector<8x128xf32>
    %90 = arith.mulf %86, %85 : vector<8x128xf32>
    %91 = arith.addf %89, %90 : vector<8x128xf32>
    %92 = math.tanh %91 : vector<8x128xf32>
    %93 = arith.mulf %88, %92 : vector<8x128xf32>
    %94 = arith.truncf %93 : vector<8x128xf32> to vector<8x128xbf16>
    %c1_45 = arith.constant 1 : index
    %c0_46 = arith.constant 0 : index
    %c0_47 = arith.constant 0 : index
    %95 = vector.load %arg1[%c1_45, %c0_46, %c0_47] : memref<2x128x512xbf16, #tpu.memory_space<vmem>>, vector<1x128x512xbf16>
    %96 = vector.shape_cast %95 : vector<1x128x512xbf16> to vector<128x512xbf16>
    %cst_48 = arith.constant dense<0.000000e+00> : vector<8x512xf32>
    %97 = tpu.matmul %94, %96, %cst_48 {dimension_numbers = #tpu.dot_dimension_numbers<[1], [0], [0], [1], [0, 0, 1, 1], [], []>} : vector<8x128xbf16>, vector<128x512xbf16>, vector<8x512xf32> -> vector<8x512xf32>
    %c1_49 = arith.constant 1 : index
    %c0_50 = arith.constant 0 : index
    %c0_51 = arith.constant 0 : index
    %98 = vector.load %arg3[%c1_49, %c0_50, %c0_51] : memref<2x1x512xf32, #tpu.memory_space<vmem>>, vector<1x1x512xf32>
    %99 = vector.shape_cast %98 : vector<1x1x512xf32> to vector<1x512xf32>
    %100 = vector.broadcast %99 : vector<1x512xf32> to vector<8x512xf32>
    %101 = arith.addf %97, %100 : vector<8x512xf32>
    %102 = arith.truncf %68 : vector<8x128xf32> to vector<8x128xbf16>
    %c1_52 = arith.constant 1 : index
    %c0_53 = arith.constant 0 : index
    %c0_54 = arith.constant 0 : index
    %103 = vector.load %arg2[%c1_52, %c0_53, %c0_54] : memref<2x128x512xbf16, #tpu.memory_space<vmem>>, vector<1x128x512xbf16>
    %104 = vector.shape_cast %103 : vector<1x128x512xbf16> to vector<128x512xbf16>
    %cst_55 = arith.constant dense<0.000000e+00> : vector<8x512xf32>
    %105 = tpu.matmul %102, %104, %cst_55 {dimension_numbers = #tpu.dot_dimension_numbers<[1], [0], [0], [1], [0, 0, 1, 1], [], []>} : vector<8x128xbf16>, vector<128x512xbf16>, vector<8x512xf32> -> vector<8x512xf32>
    %106 = arith.addf %101, %105 : vector<8x512xf32>
    %107 = vector.extract_strided_slice %106 {offsets = [0, 0], sizes = [8, 384], strides = [1, 1]} : vector<8x512xf32> to vector<8x384xf32>
    %cst_56 = arith.constant 5.000000e-01 : f32
    %108 = vector.broadcast %cst_56 : f32 to vector<8x384xf32>
    %109 = arith.mulf %108, %107 : vector<8x384xf32>
    %110 = math.tanh %109 : vector<8x384xf32>
    %cst_57 = arith.constant 5.000000e-01 : f32
    %111 = vector.broadcast %cst_57 : f32 to vector<8x384xf32>
    %112 = arith.mulf %111, %110 : vector<8x384xf32>
    %cst_58 = arith.constant 5.000000e-01 : f32
    %113 = vector.broadcast %cst_58 : f32 to vector<8x384xf32>
    %114 = arith.addf %112, %113 : vector<8x384xf32>
    %115 = vector.extract_strided_slice %106 {offsets = [0, 384], sizes = [8, 128], strides = [1, 1]} : vector<8x512xf32> to vector<8x128xf32>
    %116 = math.tanh %115 : vector<8x128xf32>
    %117 = vector.extract_strided_slice %114 {offsets = [0, 0], sizes = [8, 128], strides = [1, 1]} : vector<8x384xf32> to vector<8x128xf32>
    %118 = vector.extract_strided_slice %114 {offsets = [0, 128], sizes = [8, 128], strides = [1, 1]} : vector<8x384xf32> to vector<8x128xf32>
    %119 = vector.extract_strided_slice %114 {offsets = [0, 256], sizes = [8, 128], strides = [1, 1]} : vector<8x384xf32> to vector<8x128xf32>
    %120 = arith.mulf %118, %66 : vector<8x128xf32>
    %121 = arith.mulf %117, %116 : vector<8x128xf32>
    %122 = arith.addf %120, %121 : vector<8x128xf32>
    %123 = math.tanh %122 : vector<8x128xf32>
    %124 = arith.mulf %119, %123 : vector<8x128xf32>
    %c2 = arith.constant 2 : index
    %c0_59 = arith.constant 0 : index
    %c0_60 = arith.constant 0 : index
    %125 = vector.load %arg7[%c2, %c0_59, %c0_60] : memref<8x8x512xf32, #tpu.memory_space<vmem>>, vector<1x8x512xf32>
    %126 = vector.shape_cast %125 : vector<1x8x512xf32> to vector<8x512xf32>
    %127 = arith.truncf %93 : vector<8x128xf32> to vector<8x128xbf16>
    %c0_61 = arith.constant 0 : index
    %c0_62 = arith.constant 0 : index
    %c0_63 = arith.constant 0 : index
    %128 = vector.load %arg2[%c0_61, %c0_62, %c0_63] : memref<2x128x512xbf16, #tpu.memory_space<vmem>>, vector<1x128x512xbf16>
    %129 = vector.shape_cast %128 : vector<1x128x512xbf16> to vector<128x512xbf16>
    %cst_64 = arith.constant dense<0.000000e+00> : vector<8x512xf32>
    %130 = tpu.matmul %127, %129, %cst_64 {dimension_numbers = #tpu.dot_dimension_numbers<[1], [0], [0], [1], [0, 0, 1, 1], [], []>} : vector<8x128xbf16>, vector<128x512xbf16>, vector<8x512xf32> -> vector<8x512xf32>
    %131 = arith.addf %126, %130 : vector<8x512xf32>
    %132 = vector.extract_strided_slice %131 {offsets = [0, 0], sizes = [8, 384], strides = [1, 1]} : vector<8x512xf32> to vector<8x384xf32>
    %cst_65 = arith.constant 5.000000e-01 : f32
    %133 = vector.broadcast %cst_65 : f32 to vector<8x384xf32>
    %134 = arith.mulf %133, %132 : vector<8x384xf32>
    %135 = math.tanh %134 : vector<8x384xf32>
    %cst_66 = arith.constant 5.000000e-01 : f32
    %136 = vector.broadcast %cst_66 : f32 to vector<8x384xf32>
    %137 = arith.mulf %136, %135 : vector<8x384xf32>
    %cst_67 = arith.constant 5.000000e-01 : f32
    %138 = vector.broadcast %cst_67 : f32 to vector<8x384xf32>
    %139 = arith.addf %137, %138 : vector<8x384xf32>
    %140 = vector.extract_strided_slice %131 {offsets = [0, 384], sizes = [8, 128], strides = [1, 1]} : vector<8x512xf32> to vector<8x128xf32>
    %141 = math.tanh %140 : vector<8x128xf32>
    %142 = vector.extract_strided_slice %139 {offsets = [0, 0], sizes = [8, 128], strides = [1, 1]} : vector<8x384xf32> to vector<8x128xf32>
    %143 = vector.extract_strided_slice %139 {offsets = [0, 128], sizes = [8, 128], strides = [1, 1]} : vector<8x384xf32> to vector<8x128xf32>
    %144 = vector.extract_strided_slice %139 {offsets = [0, 256], sizes = [8, 128], strides = [1, 1]} : vector<8x384xf32> to vector<8x128xf32>
    %145 = arith.mulf %143, %91 : vector<8x128xf32>
    %146 = arith.mulf %142, %141 : vector<8x128xf32>
    %147 = arith.addf %145, %146 : vector<8x128xf32>
    %148 = math.tanh %147 : vector<8x128xf32>
    %149 = arith.mulf %144, %148 : vector<8x128xf32>
    %150 = arith.truncf %149 : vector<8x128xf32> to vector<8x128xbf16>
    %c1_68 = arith.constant 1 : index
    %c0_69 = arith.constant 0 : index
    %c0_70 = arith.constant 0 : index
    %151 = vector.load %arg1[%c1_68, %c0_69, %c0_70] : memref<2x128x512xbf16, #tpu.memory_space<vmem>>, vector<1x128x512xbf16>
    %152 = vector.shape_cast %151 : vector<1x128x512xbf16> to vector<128x512xbf16>
    %cst_71 = arith.constant dense<0.000000e+00> : vector<8x512xf32>
    %153 = tpu.matmul %150, %152, %cst_71 {dimension_numbers = #tpu.dot_dimension_numbers<[1], [0], [0], [1], [0, 0, 1, 1], [], []>} : vector<8x128xbf16>, vector<128x512xbf16>, vector<8x512xf32> -> vector<8x512xf32>
    %c1_72 = arith.constant 1 : index
    %c0_73 = arith.constant 0 : index
    %c0_74 = arith.constant 0 : index
    %154 = vector.load %arg3[%c1_72, %c0_73, %c0_74] : memref<2x1x512xf32, #tpu.memory_space<vmem>>, vector<1x1x512xf32>
    %155 = vector.shape_cast %154 : vector<1x1x512xf32> to vector<1x512xf32>
    %156 = vector.broadcast %155 : vector<1x512xf32> to vector<8x512xf32>
    %157 = arith.addf %153, %156 : vector<8x512xf32>
    %158 = arith.truncf %124 : vector<8x128xf32> to vector<8x128xbf16>
    %c1_75 = arith.constant 1 : index
    %c0_76 = arith.constant 0 : index
    %c0_77 = arith.constant 0 : index
    %159 = vector.load %arg2[%c1_75, %c0_76, %c0_77] : memref<2x128x512xbf16, #tpu.memory_space<vmem>>, vector<1x128x512xbf16>
    %160 = vector.shape_cast %159 : vector<1x128x512xbf16> to vector<128x512xbf16>
    %cst_78 = arith.constant dense<0.000000e+00> : vector<8x512xf32>
    %161 = tpu.matmul %158, %160, %cst_78 {dimension_numbers = #tpu.dot_dimension_numbers<[1], [0], [0], [1], [0, 0, 1, 1], [], []>} : vector<8x128xbf16>, vector<128x512xbf16>, vector<8x512xf32> -> vector<8x512xf32>
    %162 = arith.addf %157, %161 : vector<8x512xf32>
    %163 = vector.extract_strided_slice %162 {offsets = [0, 0], sizes = [8, 384], strides = [1, 1]} : vector<8x512xf32> to vector<8x384xf32>
    %cst_79 = arith.constant 5.000000e-01 : f32
    %164 = vector.broadcast %cst_79 : f32 to vector<8x384xf32>
    %165 = arith.mulf %164, %163 : vector<8x384xf32>
    %166 = math.tanh %165 : vector<8x384xf32>
    %cst_80 = arith.constant 5.000000e-01 : f32
    %167 = vector.broadcast %cst_80 : f32 to vector<8x384xf32>
    %168 = arith.mulf %167, %166 : vector<8x384xf32>
    %cst_81 = arith.constant 5.000000e-01 : f32
    %169 = vector.broadcast %cst_81 : f32 to vector<8x384xf32>
    %170 = arith.addf %168, %169 : vector<8x384xf32>
    %171 = vector.extract_strided_slice %162 {offsets = [0, 384], sizes = [8, 128], strides = [1, 1]} : vector<8x512xf32> to vector<8x128xf32>
    %172 = math.tanh %171 : vector<8x128xf32>
    %173 = vector.extract_strided_slice %170 {offsets = [0, 0], sizes = [8, 128], strides = [1, 1]} : vector<8x384xf32> to vector<8x128xf32>
    %174 = vector.extract_strided_slice %170 {offsets = [0, 128], sizes = [8, 128], strides = [1, 1]} : vector<8x384xf32> to vector<8x128xf32>
    %175 = vector.extract_strided_slice %170 {offsets = [0, 256], sizes = [8, 128], strides = [1, 1]} : vector<8x384xf32> to vector<8x128xf32>
    %176 = arith.mulf %174, %122 : vector<8x128xf32>
    %177 = arith.mulf %173, %172 : vector<8x128xf32>
    %178 = arith.addf %176, %177 : vector<8x128xf32>
    %179 = math.tanh %178 : vector<8x128xf32>
    %180 = arith.mulf %175, %179 : vector<8x128xf32>
    %c3 = arith.constant 3 : index
    %c0_82 = arith.constant 0 : index
    %c0_83 = arith.constant 0 : index
    %181 = vector.load %arg7[%c3, %c0_82, %c0_83] : memref<8x8x512xf32, #tpu.memory_space<vmem>>, vector<1x8x512xf32>
    %182 = vector.shape_cast %181 : vector<1x8x512xf32> to vector<8x512xf32>
    %183 = arith.truncf %149 : vector<8x128xf32> to vector<8x128xbf16>
    %c0_84 = arith.constant 0 : index
    %c0_85 = arith.constant 0 : index
    %c0_86 = arith.constant 0 : index
    %184 = vector.load %arg2[%c0_84, %c0_85, %c0_86] : memref<2x128x512xbf16, #tpu.memory_space<vmem>>, vector<1x128x512xbf16>
    %185 = vector.shape_cast %184 : vector<1x128x512xbf16> to vector<128x512xbf16>
    %cst_87 = arith.constant dense<0.000000e+00> : vector<8x512xf32>
    %186 = tpu.matmul %183, %185, %cst_87 {dimension_numbers = #tpu.dot_dimension_numbers<[1], [0], [0], [1], [0, 0, 1, 1], [], []>} : vector<8x128xbf16>, vector<128x512xbf16>, vector<8x512xf32> -> vector<8x512xf32>
    %187 = arith.addf %182, %186 : vector<8x512xf32>
    %188 = vector.extract_strided_slice %187 {offsets = [0, 0], sizes = [8, 384], strides = [1, 1]} : vector<8x512xf32> to vector<8x384xf32>
    %cst_88 = arith.constant 5.000000e-01 : f32
    %189 = vector.broadcast %cst_88 : f32 to vector<8x384xf32>
    %190 = arith.mulf %189, %188 : vector<8x384xf32>
    %191 = math.tanh %190 : vector<8x384xf32>
    %cst_89 = arith.constant 5.000000e-01 : f32
    %192 = vector.broadcast %cst_89 : f32 to vector<8x384xf32>
    %193 = arith.mulf %192, %191 : vector<8x384xf32>
    %cst_90 = arith.constant 5.000000e-01 : f32
    %194 = vector.broadcast %cst_90 : f32 to vector<8x384xf32>
    %195 = arith.addf %193, %194 : vector<8x384xf32>
    %196 = vector.extract_strided_slice %187 {offsets = [0, 384], sizes = [8, 128], strides = [1, 1]} : vector<8x512xf32> to vector<8x128xf32>
    %197 = math.tanh %196 : vector<8x128xf32>
    %198 = vector.extract_strided_slice %195 {offsets = [0, 0], sizes = [8, 128], strides = [1, 1]} : vector<8x384xf32> to vector<8x128xf32>
    %199 = vector.extract_strided_slice %195 {offsets = [0, 128], sizes = [8, 128], strides = [1, 1]} : vector<8x384xf32> to vector<8x128xf32>
    %200 = vector.extract_strided_slice %195 {offsets = [0, 256], sizes = [8, 128], strides = [1, 1]} : vector<8x384xf32> to vector<8x128xf32>
    %201 = arith.mulf %199, %147 : vector<8x128xf32>
    %202 = arith.mulf %198, %197 : vector<8x128xf32>
    %203 = arith.addf %201, %202 : vector<8x128xf32>
    %204 = math.tanh %203 : vector<8x128xf32>
    %205 = arith.mulf %200, %204 : vector<8x128xf32>
    %206 = arith.truncf %205 : vector<8x128xf32> to vector<8x128xbf16>
    %c1_91 = arith.constant 1 : index
    %c0_92 = arith.constant 0 : index
    %c0_93 = arith.constant 0 : index
    %207 = vector.load %arg1[%c1_91, %c0_92, %c0_93] : memref<2x128x512xbf16, #tpu.memory_space<vmem>>, vector<1x128x512xbf16>
    %208 = vector.shape_cast %207 : vector<1x128x512xbf16> to vector<128x512xbf16>
    %cst_94 = arith.constant dense<0.000000e+00> : vector<8x512xf32>
    %209 = tpu.matmul %206, %208, %cst_94 {dimension_numbers = #tpu.dot_dimension_numbers<[1], [0], [0], [1], [0, 0, 1, 1], [], []>} : vector<8x128xbf16>, vector<128x512xbf16>, vector<8x512xf32> -> vector<8x512xf32>
    %c1_95 = arith.constant 1 : index
    %c0_96 = arith.constant 0 : index
    %c0_97 = arith.constant 0 : index
    %210 = vector.load %arg3[%c1_95, %c0_96, %c0_97] : memref<2x1x512xf32, #tpu.memory_space<vmem>>, vector<1x1x512xf32>
    %211 = vector.shape_cast %210 : vector<1x1x512xf32> to vector<1x512xf32>
    %212 = vector.broadcast %211 : vector<1x512xf32> to vector<8x512xf32>
    %213 = arith.addf %209, %212 : vector<8x512xf32>
    %214 = arith.truncf %180 : vector<8x128xf32> to vector<8x128xbf16>
    %c1_98 = arith.constant 1 : index
    %c0_99 = arith.constant 0 : index
    %c0_100 = arith.constant 0 : index
    %215 = vector.load %arg2[%c1_98, %c0_99, %c0_100] : memref<2x128x512xbf16, #tpu.memory_space<vmem>>, vector<1x128x512xbf16>
    %216 = vector.shape_cast %215 : vector<1x128x512xbf16> to vector<128x512xbf16>
    %cst_101 = arith.constant dense<0.000000e+00> : vector<8x512xf32>
    %217 = tpu.matmul %214, %216, %cst_101 {dimension_numbers = #tpu.dot_dimension_numbers<[1], [0], [0], [1], [0, 0, 1, 1], [], []>} : vector<8x128xbf16>, vector<128x512xbf16>, vector<8x512xf32> -> vector<8x512xf32>
    %218 = arith.addf %213, %217 : vector<8x512xf32>
    %219 = vector.extract_strided_slice %218 {offsets = [0, 0], sizes = [8, 384], strides = [1, 1]} : vector<8x512xf32> to vector<8x384xf32>
    %cst_102 = arith.constant 5.000000e-01 : f32
    %220 = vector.broadcast %cst_102 : f32 to vector<8x384xf32>
    %221 = arith.mulf %220, %219 : vector<8x384xf32>
    %222 = math.tanh %221 : vector<8x384xf32>
    %cst_103 = arith.constant 5.000000e-01 : f32
    %223 = vector.broadcast %cst_103 : f32 to vector<8x384xf32>
    %224 = arith.mulf %223, %222 : vector<8x384xf32>
    %cst_104 = arith.constant 5.000000e-01 : f32
    %225 = vector.broadcast %cst_104 : f32 to vector<8x384xf32>
    %226 = arith.addf %224, %225 : vector<8x384xf32>
    %227 = vector.extract_strided_slice %218 {offsets = [0, 384], sizes = [8, 128], strides = [1, 1]} : vector<8x512xf32> to vector<8x128xf32>
    %228 = math.tanh %227 : vector<8x128xf32>
    %229 = vector.extract_strided_slice %226 {offsets = [0, 0], sizes = [8, 128], strides = [1, 1]} : vector<8x384xf32> to vector<8x128xf32>
    %230 = vector.extract_strided_slice %226 {offsets = [0, 128], sizes = [8, 128], strides = [1, 1]} : vector<8x384xf32> to vector<8x128xf32>
    %231 = vector.extract_strided_slice %226 {offsets = [0, 256], sizes = [8, 128], strides = [1, 1]} : vector<8x384xf32> to vector<8x128xf32>
    %232 = arith.mulf %230, %178 : vector<8x128xf32>
    %233 = arith.mulf %229, %228 : vector<8x128xf32>
    %234 = arith.addf %232, %233 : vector<8x128xf32>
    %235 = math.tanh %234 : vector<8x128xf32>
    %236 = arith.mulf %231, %235 : vector<8x128xf32>
    %c4 = arith.constant 4 : index
    %c0_105 = arith.constant 0 : index
    %c0_106 = arith.constant 0 : index
    %237 = vector.load %arg7[%c4, %c0_105, %c0_106] : memref<8x8x512xf32, #tpu.memory_space<vmem>>, vector<1x8x512xf32>
    %238 = vector.shape_cast %237 : vector<1x8x512xf32> to vector<8x512xf32>
    %239 = arith.truncf %205 : vector<8x128xf32> to vector<8x128xbf16>
    %c0_107 = arith.constant 0 : index
    %c0_108 = arith.constant 0 : index
    %c0_109 = arith.constant 0 : index
    %240 = vector.load %arg2[%c0_107, %c0_108, %c0_109] : memref<2x128x512xbf16, #tpu.memory_space<vmem>>, vector<1x128x512xbf16>
    %241 = vector.shape_cast %240 : vector<1x128x512xbf16> to vector<128x512xbf16>
    %cst_110 = arith.constant dense<0.000000e+00> : vector<8x512xf32>
    %242 = tpu.matmul %239, %241, %cst_110 {dimension_numbers = #tpu.dot_dimension_numbers<[1], [0], [0], [1], [0, 0, 1, 1], [], []>} : vector<8x128xbf16>, vector<128x512xbf16>, vector<8x512xf32> -> vector<8x512xf32>
    %243 = arith.addf %238, %242 : vector<8x512xf32>
    %244 = vector.extract_strided_slice %243 {offsets = [0, 0], sizes = [8, 384], strides = [1, 1]} : vector<8x512xf32> to vector<8x384xf32>
    %cst_111 = arith.constant 5.000000e-01 : f32
    %245 = vector.broadcast %cst_111 : f32 to vector<8x384xf32>
    %246 = arith.mulf %245, %244 : vector<8x384xf32>
    %247 = math.tanh %246 : vector<8x384xf32>
    %cst_112 = arith.constant 5.000000e-01 : f32
    %248 = vector.broadcast %cst_112 : f32 to vector<8x384xf32>
    %249 = arith.mulf %248, %247 : vector<8x384xf32>
    %cst_113 = arith.constant 5.000000e-01 : f32
    %250 = vector.broadcast %cst_113 : f32 to vector<8x384xf32>
    %251 = arith.addf %249, %250 : vector<8x384xf32>
    %252 = vector.extract_strided_slice %243 {offsets = [0, 384], sizes = [8, 128], strides = [1, 1]} : vector<8x512xf32> to vector<8x128xf32>
    %253 = math.tanh %252 : vector<8x128xf32>
    %254 = vector.extract_strided_slice %251 {offsets = [0, 0], sizes = [8, 128], strides = [1, 1]} : vector<8x384xf32> to vector<8x128xf32>
    %255 = vector.extract_strided_slice %251 {offsets = [0, 128], sizes = [8, 128], strides = [1, 1]} : vector<8x384xf32> to vector<8x128xf32>
    %256 = vector.extract_strided_slice %251 {offsets = [0, 256], sizes = [8, 128], strides = [1, 1]} : vector<8x384xf32> to vector<8x128xf32>
    %257 = arith.mulf %255, %203 : vector<8x128xf32>
    %258 = arith.mulf %254, %253 : vector<8x128xf32>
    %259 = arith.addf %257, %258 : vector<8x128xf32>
    %260 = math.tanh %259 : vector<8x128xf32>
    %261 = arith.mulf %256, %260 : vector<8x128xf32>
    %262 = arith.truncf %261 : vector<8x128xf32> to vector<8x128xbf16>
    %c1_114 = arith.constant 1 : index
    %c0_115 = arith.constant 0 : index
    %c0_116 = arith.constant 0 : index
    %263 = vector.load %arg1[%c1_114, %c0_115, %c0_116] : memref<2x128x512xbf16, #tpu.memory_space<vmem>>, vector<1x128x512xbf16>
    %264 = vector.shape_cast %263 : vector<1x128x512xbf16> to vector<128x512xbf16>
    %cst_117 = arith.constant dense<0.000000e+00> : vector<8x512xf32>
    %265 = tpu.matmul %262, %264, %cst_117 {dimension_numbers = #tpu.dot_dimension_numbers<[1], [0], [0], [1], [0, 0, 1, 1], [], []>} : vector<8x128xbf16>, vector<128x512xbf16>, vector<8x512xf32> -> vector<8x512xf32>
    %c1_118 = arith.constant 1 : index
    %c0_119 = arith.constant 0 : index
    %c0_120 = arith.constant 0 : index
    %266 = vector.load %arg3[%c1_118, %c0_119, %c0_120] : memref<2x1x512xf32, #tpu.memory_space<vmem>>, vector<1x1x512xf32>
    %267 = vector.shape_cast %266 : vector<1x1x512xf32> to vector<1x512xf32>
    %268 = vector.broadcast %267 : vector<1x512xf32> to vector<8x512xf32>
    %269 = arith.addf %265, %268 : vector<8x512xf32>
    %270 = arith.truncf %236 : vector<8x128xf32> to vector<8x128xbf16>
    %c1_121 = arith.constant 1 : index
    %c0_122 = arith.constant 0 : index
    %c0_123 = arith.constant 0 : index
    %271 = vector.load %arg2[%c1_121, %c0_122, %c0_123] : memref<2x128x512xbf16, #tpu.memory_space<vmem>>, vector<1x128x512xbf16>
    %272 = vector.shape_cast %271 : vector<1x128x512xbf16> to vector<128x512xbf16>
    %cst_124 = arith.constant dense<0.000000e+00> : vector<8x512xf32>
    %273 = tpu.matmul %270, %272, %cst_124 {dimension_numbers = #tpu.dot_dimension_numbers<[1], [0], [0], [1], [0, 0, 1, 1], [], []>} : vector<8x128xbf16>, vector<128x512xbf16>, vector<8x512xf32> -> vector<8x512xf32>
    %274 = arith.addf %269, %273 : vector<8x512xf32>
    %275 = vector.extract_strided_slice %274 {offsets = [0, 0], sizes = [8, 384], strides = [1, 1]} : vector<8x512xf32> to vector<8x384xf32>
    %cst_125 = arith.constant 5.000000e-01 : f32
    %276 = vector.broadcast %cst_125 : f32 to vector<8x384xf32>
    %277 = arith.mulf %276, %275 : vector<8x384xf32>
    %278 = math.tanh %277 : vector<8x384xf32>
    %cst_126 = arith.constant 5.000000e-01 : f32
    %279 = vector.broadcast %cst_126 : f32 to vector<8x384xf32>
    %280 = arith.mulf %279, %278 : vector<8x384xf32>
    %cst_127 = arith.constant 5.000000e-01 : f32
    %281 = vector.broadcast %cst_127 : f32 to vector<8x384xf32>
    %282 = arith.addf %280, %281 : vector<8x384xf32>
    %283 = vector.extract_strided_slice %274 {offsets = [0, 384], sizes = [8, 128], strides = [1, 1]} : vector<8x512xf32> to vector<8x128xf32>
    %284 = math.tanh %283 : vector<8x128xf32>
    %285 = vector.extract_strided_slice %282 {offsets = [0, 0], sizes = [8, 128], strides = [1, 1]} : vector<8x384xf32> to vector<8x128xf32>
    %286 = vector.extract_strided_slice %282 {offsets = [0, 128], sizes = [8, 128], strides = [1, 1]} : vector<8x384xf32> to vector<8x128xf32>
    %287 = vector.extract_strided_slice %282 {offsets = [0, 256], sizes = [8, 128], strides = [1, 1]} : vector<8x384xf32> to vector<8x128xf32>
    %288 = arith.mulf %286, %234 : vector<8x128xf32>
    %289 = arith.mulf %285, %284 : vector<8x128xf32>
    %290 = arith.addf %288, %289 : vector<8x128xf32>
    %291 = math.tanh %290 : vector<8x128xf32>
    %292 = arith.mulf %287, %291 : vector<8x128xf32>
    %c5 = arith.constant 5 : index
    %c0_128 = arith.constant 0 : index
    %c0_129 = arith.constant 0 : index
    %293 = vector.load %arg7[%c5, %c0_128, %c0_129] : memref<8x8x512xf32, #tpu.memory_space<vmem>>, vector<1x8x512xf32>
    %294 = vector.shape_cast %293 : vector<1x8x512xf32> to vector<8x512xf32>
    %295 = arith.truncf %261 : vector<8x128xf32> to vector<8x128xbf16>
    %c0_130 = arith.constant 0 : index
    %c0_131 = arith.constant 0 : index
    %c0_132 = arith.constant 0 : index
    %296 = vector.load %arg2[%c0_130, %c0_131, %c0_132] : memref<2x128x512xbf16, #tpu.memory_space<vmem>>, vector<1x128x512xbf16>
    %297 = vector.shape_cast %296 : vector<1x128x512xbf16> to vector<128x512xbf16>
    %cst_133 = arith.constant dense<0.000000e+00> : vector<8x512xf32>
    %298 = tpu.matmul %295, %297, %cst_133 {dimension_numbers = #tpu.dot_dimension_numbers<[1], [0], [0], [1], [0, 0, 1, 1], [], []>} : vector<8x128xbf16>, vector<128x512xbf16>, vector<8x512xf32> -> vector<8x512xf32>
    %299 = arith.addf %294, %298 : vector<8x512xf32>
    %300 = vector.extract_strided_slice %299 {offsets = [0, 0], sizes = [8, 384], strides = [1, 1]} : vector<8x512xf32> to vector<8x384xf32>
    %cst_134 = arith.constant 5.000000e-01 : f32
    %301 = vector.broadcast %cst_134 : f32 to vector<8x384xf32>
    %302 = arith.mulf %301, %300 : vector<8x384xf32>
    %303 = math.tanh %302 : vector<8x384xf32>
    %cst_135 = arith.constant 5.000000e-01 : f32
    %304 = vector.broadcast %cst_135 : f32 to vector<8x384xf32>
    %305 = arith.mulf %304, %303 : vector<8x384xf32>
    %cst_136 = arith.constant 5.000000e-01 : f32
    %306 = vector.broadcast %cst_136 : f32 to vector<8x384xf32>
    %307 = arith.addf %305, %306 : vector<8x384xf32>
    %308 = vector.extract_strided_slice %299 {offsets = [0, 384], sizes = [8, 128], strides = [1, 1]} : vector<8x512xf32> to vector<8x128xf32>
    %309 = math.tanh %308 : vector<8x128xf32>
    %310 = vector.extract_strided_slice %307 {offsets = [0, 0], sizes = [8, 128], strides = [1, 1]} : vector<8x384xf32> to vector<8x128xf32>
    %311 = vector.extract_strided_slice %307 {offsets = [0, 128], sizes = [8, 128], strides = [1, 1]} : vector<8x384xf32> to vector<8x128xf32>
    %312 = vector.extract_strided_slice %307 {offsets = [0, 256], sizes = [8, 128], strides = [1, 1]} : vector<8x384xf32> to vector<8x128xf32>
    %313 = arith.mulf %311, %259 : vector<8x128xf32>
    %314 = arith.mulf %310, %309 : vector<8x128xf32>
    %315 = arith.addf %313, %314 : vector<8x128xf32>
    %316 = math.tanh %315 : vector<8x128xf32>
    %317 = arith.mulf %312, %316 : vector<8x128xf32>
    %318 = arith.truncf %317 : vector<8x128xf32> to vector<8x128xbf16>
    %c1_137 = arith.constant 1 : index
    %c0_138 = arith.constant 0 : index
    %c0_139 = arith.constant 0 : index
    %319 = vector.load %arg1[%c1_137, %c0_138, %c0_139] : memref<2x128x512xbf16, #tpu.memory_space<vmem>>, vector<1x128x512xbf16>
    %320 = vector.shape_cast %319 : vector<1x128x512xbf16> to vector<128x512xbf16>
    %cst_140 = arith.constant dense<0.000000e+00> : vector<8x512xf32>
    %321 = tpu.matmul %318, %320, %cst_140 {dimension_numbers = #tpu.dot_dimension_numbers<[1], [0], [0], [1], [0, 0, 1, 1], [], []>} : vector<8x128xbf16>, vector<128x512xbf16>, vector<8x512xf32> -> vector<8x512xf32>
    %c1_141 = arith.constant 1 : index
    %c0_142 = arith.constant 0 : index
    %c0_143 = arith.constant 0 : index
    %322 = vector.load %arg3[%c1_141, %c0_142, %c0_143] : memref<2x1x512xf32, #tpu.memory_space<vmem>>, vector<1x1x512xf32>
    %323 = vector.shape_cast %322 : vector<1x1x512xf32> to vector<1x512xf32>
    %324 = vector.broadcast %323 : vector<1x512xf32> to vector<8x512xf32>
    %325 = arith.addf %321, %324 : vector<8x512xf32>
    %326 = arith.truncf %292 : vector<8x128xf32> to vector<8x128xbf16>
    %c1_144 = arith.constant 1 : index
    %c0_145 = arith.constant 0 : index
    %c0_146 = arith.constant 0 : index
    %327 = vector.load %arg2[%c1_144, %c0_145, %c0_146] : memref<2x128x512xbf16, #tpu.memory_space<vmem>>, vector<1x128x512xbf16>
    %328 = vector.shape_cast %327 : vector<1x128x512xbf16> to vector<128x512xbf16>
    %cst_147 = arith.constant dense<0.000000e+00> : vector<8x512xf32>
    %329 = tpu.matmul %326, %328, %cst_147 {dimension_numbers = #tpu.dot_dimension_numbers<[1], [0], [0], [1], [0, 0, 1, 1], [], []>} : vector<8x128xbf16>, vector<128x512xbf16>, vector<8x512xf32> -> vector<8x512xf32>
    %330 = arith.addf %325, %329 : vector<8x512xf32>
    %331 = vector.extract_strided_slice %330 {offsets = [0, 0], sizes = [8, 384], strides = [1, 1]} : vector<8x512xf32> to vector<8x384xf32>
    %cst_148 = arith.constant 5.000000e-01 : f32
    %332 = vector.broadcast %cst_148 : f32 to vector<8x384xf32>
    %333 = arith.mulf %332, %331 : vector<8x384xf32>
    %334 = math.tanh %333 : vector<8x384xf32>
    %cst_149 = arith.constant 5.000000e-01 : f32
    %335 = vector.broadcast %cst_149 : f32 to vector<8x384xf32>
    %336 = arith.mulf %335, %334 : vector<8x384xf32>
    %cst_150 = arith.constant 5.000000e-01 : f32
    %337 = vector.broadcast %cst_150 : f32 to vector<8x384xf32>
    %338 = arith.addf %336, %337 : vector<8x384xf32>
    %339 = vector.extract_strided_slice %330 {offsets = [0, 384], sizes = [8, 128], strides = [1, 1]} : vector<8x512xf32> to vector<8x128xf32>
    %340 = math.tanh %339 : vector<8x128xf32>
    %341 = vector.extract_strided_slice %338 {offsets = [0, 0], sizes = [8, 128], strides = [1, 1]} : vector<8x384xf32> to vector<8x128xf32>
    %342 = vector.extract_strided_slice %338 {offsets = [0, 128], sizes = [8, 128], strides = [1, 1]} : vector<8x384xf32> to vector<8x128xf32>
    %343 = vector.extract_strided_slice %338 {offsets = [0, 256], sizes = [8, 128], strides = [1, 1]} : vector<8x384xf32> to vector<8x128xf32>
    %344 = arith.mulf %342, %290 : vector<8x128xf32>
    %345 = arith.mulf %341, %340 : vector<8x128xf32>
    %346 = arith.addf %344, %345 : vector<8x128xf32>
    %347 = math.tanh %346 : vector<8x128xf32>
    %348 = arith.mulf %343, %347 : vector<8x128xf32>
    %c6 = arith.constant 6 : index
    %c0_151 = arith.constant 0 : index
    %c0_152 = arith.constant 0 : index
    %349 = vector.load %arg7[%c6, %c0_151, %c0_152] : memref<8x8x512xf32, #tpu.memory_space<vmem>>, vector<1x8x512xf32>
    %350 = vector.shape_cast %349 : vector<1x8x512xf32> to vector<8x512xf32>
    %351 = arith.truncf %317 : vector<8x128xf32> to vector<8x128xbf16>
    %c0_153 = arith.constant 0 : index
    %c0_154 = arith.constant 0 : index
    %c0_155 = arith.constant 0 : index
    %352 = vector.load %arg2[%c0_153, %c0_154, %c0_155] : memref<2x128x512xbf16, #tpu.memory_space<vmem>>, vector<1x128x512xbf16>
    %353 = vector.shape_cast %352 : vector<1x128x512xbf16> to vector<128x512xbf16>
    %cst_156 = arith.constant dense<0.000000e+00> : vector<8x512xf32>
    %354 = tpu.matmul %351, %353, %cst_156 {dimension_numbers = #tpu.dot_dimension_numbers<[1], [0], [0], [1], [0, 0, 1, 1], [], []>} : vector<8x128xbf16>, vector<128x512xbf16>, vector<8x512xf32> -> vector<8x512xf32>
    %355 = arith.addf %350, %354 : vector<8x512xf32>
    %356 = vector.extract_strided_slice %355 {offsets = [0, 0], sizes = [8, 384], strides = [1, 1]} : vector<8x512xf32> to vector<8x384xf32>
    %cst_157 = arith.constant 5.000000e-01 : f32
    %357 = vector.broadcast %cst_157 : f32 to vector<8x384xf32>
    %358 = arith.mulf %357, %356 : vector<8x384xf32>
    %359 = math.tanh %358 : vector<8x384xf32>
    %cst_158 = arith.constant 5.000000e-01 : f32
    %360 = vector.broadcast %cst_158 : f32 to vector<8x384xf32>
    %361 = arith.mulf %360, %359 : vector<8x384xf32>
    %cst_159 = arith.constant 5.000000e-01 : f32
    %362 = vector.broadcast %cst_159 : f32 to vector<8x384xf32>
    %363 = arith.addf %361, %362 : vector<8x384xf32>
    %364 = vector.extract_strided_slice %355 {offsets = [0, 384], sizes = [8, 128], strides = [1, 1]} : vector<8x512xf32> to vector<8x128xf32>
    %365 = math.tanh %364 : vector<8x128xf32>
    %366 = vector.extract_strided_slice %363 {offsets = [0, 0], sizes = [8, 128], strides = [1, 1]} : vector<8x384xf32> to vector<8x128xf32>
    %367 = vector.extract_strided_slice %363 {offsets = [0, 128], sizes = [8, 128], strides = [1, 1]} : vector<8x384xf32> to vector<8x128xf32>
    %368 = vector.extract_strided_slice %363 {offsets = [0, 256], sizes = [8, 128], strides = [1, 1]} : vector<8x384xf32> to vector<8x128xf32>
    %369 = arith.mulf %367, %315 : vector<8x128xf32>
    %370 = arith.mulf %366, %365 : vector<8x128xf32>
    %371 = arith.addf %369, %370 : vector<8x128xf32>
    %372 = math.tanh %371 : vector<8x128xf32>
    %373 = arith.mulf %368, %372 : vector<8x128xf32>
    %374 = arith.truncf %373 : vector<8x128xf32> to vector<8x128xbf16>
    %c1_160 = arith.constant 1 : index
    %c0_161 = arith.constant 0 : index
    %c0_162 = arith.constant 0 : index
    %375 = vector.load %arg1[%c1_160, %c0_161, %c0_162] : memref<2x128x512xbf16, #tpu.memory_space<vmem>>, vector<1x128x512xbf16>
    %376 = vector.shape_cast %375 : vector<1x128x512xbf16> to vector<128x512xbf16>
    %cst_163 = arith.constant dense<0.000000e+00> : vector<8x512xf32>
    %377 = tpu.matmul %374, %376, %cst_163 {dimension_numbers = #tpu.dot_dimension_numbers<[1], [0], [0], [1], [0, 0, 1, 1], [], []>} : vector<8x128xbf16>, vector<128x512xbf16>, vector<8x512xf32> -> vector<8x512xf32>
    %c1_164 = arith.constant 1 : index
    %c0_165 = arith.constant 0 : index
    %c0_166 = arith.constant 0 : index
    %378 = vector.load %arg3[%c1_164, %c0_165, %c0_166] : memref<2x1x512xf32, #tpu.memory_space<vmem>>, vector<1x1x512xf32>
    %379 = vector.shape_cast %378 : vector<1x1x512xf32> to vector<1x512xf32>
    %380 = vector.broadcast %379 : vector<1x512xf32> to vector<8x512xf32>
    %381 = arith.addf %377, %380 : vector<8x512xf32>
    %382 = arith.truncf %348 : vector<8x128xf32> to vector<8x128xbf16>
    %c1_167 = arith.constant 1 : index
    %c0_168 = arith.constant 0 : index
    %c0_169 = arith.constant 0 : index
    %383 = vector.load %arg2[%c1_167, %c0_168, %c0_169] : memref<2x128x512xbf16, #tpu.memory_space<vmem>>, vector<1x128x512xbf16>
    %384 = vector.shape_cast %383 : vector<1x128x512xbf16> to vector<128x512xbf16>
    %cst_170 = arith.constant dense<0.000000e+00> : vector<8x512xf32>
    %385 = tpu.matmul %382, %384, %cst_170 {dimension_numbers = #tpu.dot_dimension_numbers<[1], [0], [0], [1], [0, 0, 1, 1], [], []>} : vector<8x128xbf16>, vector<128x512xbf16>, vector<8x512xf32> -> vector<8x512xf32>
    %386 = arith.addf %381, %385 : vector<8x512xf32>
    %387 = vector.extract_strided_slice %386 {offsets = [0, 0], sizes = [8, 384], strides = [1, 1]} : vector<8x512xf32> to vector<8x384xf32>
    %cst_171 = arith.constant 5.000000e-01 : f32
    %388 = vector.broadcast %cst_171 : f32 to vector<8x384xf32>
    %389 = arith.mulf %388, %387 : vector<8x384xf32>
    %390 = math.tanh %389 : vector<8x384xf32>
    %cst_172 = arith.constant 5.000000e-01 : f32
    %391 = vector.broadcast %cst_172 : f32 to vector<8x384xf32>
    %392 = arith.mulf %391, %390 : vector<8x384xf32>
    %cst_173 = arith.constant 5.000000e-01 : f32
    %393 = vector.broadcast %cst_173 : f32 to vector<8x384xf32>
    %394 = arith.addf %392, %393 : vector<8x384xf32>
    %395 = vector.extract_strided_slice %386 {offsets = [0, 384], sizes = [8, 128], strides = [1, 1]} : vector<8x512xf32> to vector<8x128xf32>
    %396 = math.tanh %395 : vector<8x128xf32>
    %397 = vector.extract_strided_slice %394 {offsets = [0, 0], sizes = [8, 128], strides = [1, 1]} : vector<8x384xf32> to vector<8x128xf32>
    %398 = vector.extract_strided_slice %394 {offsets = [0, 128], sizes = [8, 128], strides = [1, 1]} : vector<8x384xf32> to vector<8x128xf32>
    %399 = vector.extract_strided_slice %394 {offsets = [0, 256], sizes = [8, 128], strides = [1, 1]} : vector<8x384xf32> to vector<8x128xf32>
    %400 = arith.mulf %398, %346 : vector<8x128xf32>
    %401 = arith.mulf %397, %396 : vector<8x128xf32>
    %402 = arith.addf %400, %401 : vector<8x128xf32>
    %403 = math.tanh %402 : vector<8x128xf32>
    %404 = arith.mulf %399, %403 : vector<8x128xf32>
    %c7 = arith.constant 7 : index
    %c0_174 = arith.constant 0 : index
    %c0_175 = arith.constant 0 : index
    %405 = vector.load %arg7[%c7, %c0_174, %c0_175] : memref<8x8x512xf32, #tpu.memory_space<vmem>>, vector<1x8x512xf32>
    %406 = vector.shape_cast %405 : vector<1x8x512xf32> to vector<8x512xf32>
    %407 = arith.truncf %373 : vector<8x128xf32> to vector<8x128xbf16>
    %c0_176 = arith.constant 0 : index
    %c0_177 = arith.constant 0 : index
    %c0_178 = arith.constant 0 : index
    %408 = vector.load %arg2[%c0_176, %c0_177, %c0_178] : memref<2x128x512xbf16, #tpu.memory_space<vmem>>, vector<1x128x512xbf16>
    %409 = vector.shape_cast %408 : vector<1x128x512xbf16> to vector<128x512xbf16>
    %cst_179 = arith.constant dense<0.000000e+00> : vector<8x512xf32>
    %410 = tpu.matmul %407, %409, %cst_179 {dimension_numbers = #tpu.dot_dimension_numbers<[1], [0], [0], [1], [0, 0, 1, 1], [], []>} : vector<8x128xbf16>, vector<128x512xbf16>, vector<8x512xf32> -> vector<8x512xf32>
    %411 = arith.addf %406, %410 : vector<8x512xf32>
    %412 = vector.extract_strided_slice %411 {offsets = [0, 0], sizes = [8, 384], strides = [1, 1]} : vector<8x512xf32> to vector<8x384xf32>
    %cst_180 = arith.constant 5.000000e-01 : f32
    %413 = vector.broadcast %cst_180 : f32 to vector<8x384xf32>
    %414 = arith.mulf %413, %412 : vector<8x384xf32>
    %415 = math.tanh %414 : vector<8x384xf32>
    %cst_181 = arith.constant 5.000000e-01 : f32
    %416 = vector.broadcast %cst_181 : f32 to vector<8x384xf32>
    %417 = arith.mulf %416, %415 : vector<8x384xf32>
    %cst_182 = arith.constant 5.000000e-01 : f32
    %418 = vector.broadcast %cst_182 : f32 to vector<8x384xf32>
    %419 = arith.addf %417, %418 : vector<8x384xf32>
    %420 = vector.extract_strided_slice %411 {offsets = [0, 384], sizes = [8, 128], strides = [1, 1]} : vector<8x512xf32> to vector<8x128xf32>
    %421 = math.tanh %420 : vector<8x128xf32>
    %422 = vector.extract_strided_slice %419 {offsets = [0, 0], sizes = [8, 128], strides = [1, 1]} : vector<8x384xf32> to vector<8x128xf32>
    %423 = vector.extract_strided_slice %419 {offsets = [0, 128], sizes = [8, 128], strides = [1, 1]} : vector<8x384xf32> to vector<8x128xf32>
    %424 = vector.extract_strided_slice %419 {offsets = [0, 256], sizes = [8, 128], strides = [1, 1]} : vector<8x384xf32> to vector<8x128xf32>
    %425 = arith.mulf %423, %371 : vector<8x128xf32>
    %426 = arith.mulf %422, %421 : vector<8x128xf32>
    %427 = arith.addf %425, %426 : vector<8x128xf32>
    %428 = math.tanh %427 : vector<8x128xf32>
    %429 = arith.mulf %424, %428 : vector<8x128xf32>
    %430 = arith.truncf %429 : vector<8x128xf32> to vector<8x128xbf16>
    %c1_183 = arith.constant 1 : index
    %c0_184 = arith.constant 0 : index
    %c0_185 = arith.constant 0 : index
    %431 = vector.load %arg1[%c1_183, %c0_184, %c0_185] : memref<2x128x512xbf16, #tpu.memory_space<vmem>>, vector<1x128x512xbf16>
    %432 = vector.shape_cast %431 : vector<1x128x512xbf16> to vector<128x512xbf16>
    %cst_186 = arith.constant dense<0.000000e+00> : vector<8x512xf32>
    %433 = tpu.matmul %430, %432, %cst_186 {dimension_numbers = #tpu.dot_dimension_numbers<[1], [0], [0], [1], [0, 0, 1, 1], [], []>} : vector<8x128xbf16>, vector<128x512xbf16>, vector<8x512xf32> -> vector<8x512xf32>
    %c1_187 = arith.constant 1 : index
    %c0_188 = arith.constant 0 : index
    %c0_189 = arith.constant 0 : index
    %434 = vector.load %arg3[%c1_187, %c0_188, %c0_189] : memref<2x1x512xf32, #tpu.memory_space<vmem>>, vector<1x1x512xf32>
    %435 = vector.shape_cast %434 : vector<1x1x512xf32> to vector<1x512xf32>
    %436 = vector.broadcast %435 : vector<1x512xf32> to vector<8x512xf32>
    %437 = arith.addf %433, %436 : vector<8x512xf32>
    %438 = arith.truncf %404 : vector<8x128xf32> to vector<8x128xbf16>
    %c1_190 = arith.constant 1 : index
    %c0_191 = arith.constant 0 : index
    %c0_192 = arith.constant 0 : index
    %439 = vector.load %arg2[%c1_190, %c0_191, %c0_192] : memref<2x128x512xbf16, #tpu.memory_space<vmem>>, vector<1x128x512xbf16>
    %440 = vector.shape_cast %439 : vector<1x128x512xbf16> to vector<128x512xbf16>
    %cst_193 = arith.constant dense<0.000000e+00> : vector<8x512xf32>
    %441 = tpu.matmul %438, %440, %cst_193 {dimension_numbers = #tpu.dot_dimension_numbers<[1], [0], [0], [1], [0, 0, 1, 1], [], []>} : vector<8x128xbf16>, vector<128x512xbf16>, vector<8x512xf32> -> vector<8x512xf32>
    %442 = arith.addf %437, %441 : vector<8x512xf32>
    %443 = vector.extract_strided_slice %442 {offsets = [0, 0], sizes = [8, 384], strides = [1, 1]} : vector<8x512xf32> to vector<8x384xf32>
    %cst_194 = arith.constant 5.000000e-01 : f32
    %444 = vector.broadcast %cst_194 : f32 to vector<8x384xf32>
    %445 = arith.mulf %444, %443 : vector<8x384xf32>
    %446 = math.tanh %445 : vector<8x384xf32>
    %cst_195 = arith.constant 5.000000e-01 : f32
    %447 = vector.broadcast %cst_195 : f32 to vector<8x384xf32>
    %448 = arith.mulf %447, %446 : vector<8x384xf32>
    %cst_196 = arith.constant 5.000000e-01 : f32
    %449 = vector.broadcast %cst_196 : f32 to vector<8x384xf32>
    %450 = arith.addf %448, %449 : vector<8x384xf32>
    %451 = vector.extract_strided_slice %442 {offsets = [0, 384], sizes = [8, 128], strides = [1, 1]} : vector<8x512xf32> to vector<8x128xf32>
    %452 = math.tanh %451 : vector<8x128xf32>
    %453 = vector.extract_strided_slice %450 {offsets = [0, 0], sizes = [8, 128], strides = [1, 1]} : vector<8x384xf32> to vector<8x128xf32>
    %454 = vector.extract_strided_slice %450 {offsets = [0, 128], sizes = [8, 128], strides = [1, 1]} : vector<8x384xf32> to vector<8x128xf32>
    %455 = vector.extract_strided_slice %450 {offsets = [0, 256], sizes = [8, 128], strides = [1, 1]} : vector<8x384xf32> to vector<8x128xf32>
    %456 = arith.mulf %454, %402 : vector<8x128xf32>
    %457 = arith.mulf %453, %452 : vector<8x128xf32>
    %458 = arith.addf %456, %457 : vector<8x128xf32>
    %459 = math.tanh %458 : vector<8x128xf32>
    %460 = arith.mulf %455, %459 : vector<8x128xf32>
    %461 = arith.truncf %460 : vector<8x128xf32> to vector<8x128xbf16>
    %c0_197 = arith.constant 0 : index
    %c0_198 = arith.constant 0 : index
    %462 = vector.load %arg4[%c0_197, %c0_198] : memref<128x128xbf16, #tpu.memory_space<vmem>>, vector<128x128xbf16>
    %cst_199 = arith.constant dense<0.000000e+00> : vector<8x128xf32>
    %463 = tpu.matmul %461, %462, %cst_199 {dimension_numbers = #tpu.dot_dimension_numbers<[1], [0], [0], [1], [0, 0, 1, 1], [], []>} : vector<8x128xbf16>, vector<128x128xbf16>, vector<8x128xf32> -> vector<8x128xf32>
    %c0_200 = arith.constant 0 : index
    %c0_201 = arith.constant 0 : index
    %464 = vector.load %arg5[%c0_200, %c0_201] : memref<1x128xf32, #tpu.memory_space<vmem>>, vector<1x128xf32>
    %465 = vector.broadcast %464 : vector<1x128xf32> to vector<8x128xf32>
    %466 = arith.addf %463, %465 : vector<8x128xf32>
    %c0_202 = arith.constant 0 : index
    %c0_203 = arith.constant 0 : index
    %467 = vector.load %arg6[%c0_202, %c0_203] : memref<8x128xf32, #tpu.memory_space<vmem>>, vector<8x128xf32>
    tpu.vector_store %arg6[%c0_202, %c0_203], %466 {strides = array<i32>} : memref<8x128xf32, #tpu.memory_space<vmem>>, vector<8x128xf32>,
    return
  }
}

</mosaic_0001>

<llo_original>
// kernel: net_forward.1
$region0: #{net_forward.1}
  #allocation0 [shape = 'u32[]', space=smem, size = 0x4, offset = 0x4, fixed_abs, tag = 'smem constant byte address 0x4 - core index']
  #allocation1 [shape = 'u32[144,128]{1,0:T(1,128)}', space=vmem, size = 0x12000, scoped, tag = 'internal scratch']
  #allocation2 [shape = 'f32[8,8,512]{2,1,0:T(8,128)}', space=vmem, size = 0x20000, scoped, tag = 'scratch operand']
  %s0 = inlined_call_operand.vmem [shape: f32[8,8,128], index: 0, kind: input, shape index: {}]
  %s1 = inlined_call_operand.hbm [shape: bf16[2,128,512], index: 1, kind: input, shape index: {}]
  %s2 = inlined_call_operand.hbm [shape: bf16[2,128,512], index: 2, kind: input, shape index: {}]
  %s3 = inlined_call_operand.vmem [shape: f32[2,1,512], index: 3, kind: input, shape index: {}]
  %s4 = inlined_call_operand.vmem [shape: bf16[128,128], index: 4, kind: input, shape index: {}]
  %s5 = inlined_call_operand.vmem [shape: f32[1,128], index: 5, kind: input, shape index: {}]
  %s6 = inlined_call_operand.vmem [shape: f32[8,128], index: 6, kind: output, shape index: {}]
  %s7 = sld [smem:[#allocation0]]
  $region42: #{net_forward.1} parent=0
    _
  %s9 = ssub.s32 1, %s7
  %s10 = scalar_select 0, %s9, %s7
  $region1: #{net_forward.1} parent=0
    #allocation3 [shape = 'u8[262144]{0}', space=vmem, size = 0x40000, scoped, tag = 'input window, operand 1, single buffered']
    #allocation4 [shape = 's32[1]{0}', space=sflag, size = 0x4, scoped, tag = 'scoped memory for net_forward.1']
    #allocation5 [shape = 'u8[262144]{0}', space=vmem, size = 0x40000, scoped, tag = 'input window, operand 2, single buffered']
    #allocation6 [shape = 's32[1]{0}', space=sflag, size = 0x4, scoped, tag = 'scoped memory for net_forward.1']
    %11 = vsyncpa [#allocation4], 0
    %12 = vsyncpa [#allocation6], 0
    // Predicated region
    $region2: #{net_forward.1} parent=1 // pred_check
      _
    $region3: #{net_forward.1} parent=1 // pred_check_branch
      %14 = sbr.rel (0) target = $region5
    $region4: #{net_forward.1} parent=1 // pred_region
      _
    $region5: #{net_forward.1} parent=1 // pred_fallthru
      _
    // Predicated region
    $region6: #{net_forward.1} parent=1 // pred_check
      _
    $region7: #{net_forward.1} parent=1 // pred_check_branch
      %16 = sbr.rel (0) target = $region9
    $region8: #{net_forward.1} parent=1 // pred_region
      %s18 = ssub.s32 8192, 8192
      %19 = vsyncadd [#allocation4], %s18
      %s20 = sshll.u32 [#allocation3], 4
      %s21 = int_to_ptr.vmem [resolvable:$true] %s20
      %26 = dma.hbm_to_vmem [thread:$0]  %s1, 8192, %s21, [#allocation4], 256, 256, 16
    $region9: #{net_forward.1} parent=1 // pred_fallthru
      _
    // Predicated region
    $region10: #{net_forward.1} parent=1 // pred_check
      _
    $region11: #{net_forward.1} parent=1 // pred_check_branch
      %28 = sbr.rel (0) target = $region13
    $region12: #{net_forward.1} parent=1 // pred_region
      %s30 = ssub.s32 8192, 8192
      %31 = vsyncadd [#allocation6], %s30
      %s32 = sshll.u32 [#allocation5], 4
      %s33 = int_to_ptr.vmem [resolvable:$true] %s32
      %38 = dma.hbm_to_vmem [thread:$0]  %s2, 8192, %s33, [#allocation6], 256, 256, 16
    $region13: #{net_forward.1} parent=1 // pred_fallthru
      _
    // Predicated region
    $region14: #{net_forward.1} parent=1 // pred_check
      _
    $region15: #{net_forward.1} parent=1 // pred_check_branch
      %40 = sbr.rel (0) target = $region17
    $region16: #{net_forward.1} parent=1 // pred_region
      _
    $region17: #{net_forward.1} parent=1 // pred_fallthru
      _
    // Predicated region
    $region18: #{net_forward.1} parent=1 // pred_check
      _
    $region19: #{net_forward.1} parent=1 // pred_check_branch
      %42 = sbr.rel (0) target = $region21
    $region20: #{net_forward.1} parent=1 // pred_region
      _
    $region21: #{net_forward.1} parent=1 // pred_fallthru
      _
    // Predicated region
    $region22: #{net_forward.1} parent=1 // pred_check
      _
    $region23: #{net_forward.1} parent=1 // pred_check_branch
      %44 = sbr.rel (0) target = $region25
    $region24: #{net_forward.1} parent=1 // pred_region
      _
    $region25: #{net_forward.1} parent=1 // pred_fallthru
      _
    // Predicated region
    $region26: #{net_forward.1} parent=1 // pred_check
      _
    $region27: #{net_forward.1} parent=1 // pred_check_branch
      %46 = sbr.rel (0) target = $region29
    $region28: #{net_forward.1} parent=1 // pred_region
      %47 = dma.done [#allocation4], 8192
    $region29: #{net_forward.1} parent=1 // pred_fallthru
      _
    // Predicated region
    $region30: #{net_forward.1} parent=1 // pred_check
      _
    $region31: #{net_forward.1} parent=1 // pred_check_branch
      %49 = sbr.rel (0) target = $region33
    $region32: #{net_forward.1} parent=1 // pred_region
      %50 = dma.done [#allocation6], 8192
    $region33: #{net_forward.1} parent=1 // pred_fallthru
      _
    %v52 = vld [vmem:[%s0] sm:$0xff]
    %v53 = vld [vmem:[%s0 + $0x8] sm:$0xff]
    %v54 = vld [vmem:[%s0 + $0x10] sm:$0xff]
    %v55 = vld [vmem:[%s0 + $0x18] sm:$0xff]
    %v56 = vld [vmem:[%s0 + $0x20] sm:$0xff]
    %v57 = vld [vmem:[%s0 + $0x28] sm:$0xff]
    %v58 = vld [vmem:[%s0 + $0x30] sm:$0xff]
    %v59 = vld [vmem:[%s0 + $0x38] sm:$0xff]
    %v60 = vpack.c.bf16 %v53, %v52
    %v61 = vpack.c.bf16 %v55, %v54
    %v62 = vpack.c.bf16 %v57, %v56
    %v63 = vpack.c.bf16 %v59, %v58
    %v64 = vld [vmem:[#allocation3] sm:$0xff]
    %v65 = vld [vmem:[#allocation3 + $0x8] sm:$0xff]
    %v66 = vld [vmem:[#allocation3 + $0x10] sm:$0xff]
    %v67 = vld [vmem:[#allocation3 + $0x18] sm:$0xff]
    %v68 = vld [vmem:[#allocation3 + $0x20] sm:$0xff]
    %v69 = vld [vmem:[#allocation3 + $0x28] sm:$0xff]
    %v70 = vld [vmem:[#allocation3 + $0x30] sm:$0xff]
    %v71 = vld [vmem:[#allocation3 + $0x38] sm:$0xff]
    %v72 = vld [vmem:[#allocation3 + $0x40] sm:$0xff]
    %v73 = vld [vmem:[#allocation3 + $0x48] sm:$0xff]
    %v74 = vld [vmem:[#allocation3 + $0x50] sm:$0xff]
    %v75 = vld [vmem:[#allocation3 + $0x58] sm:$0xff]
    %v76 = vld [vmem:[#allocation3 + $0x60] sm:$0xff]
    %v77 = vld [vmem:[#allocation3 + $0x68] sm:$0xff]
    %v78 = vld [vmem:[#allocation3 + $0x70] sm:$0xff]
    %v79 = vld [vmem:[#allocation3 + $0x78] sm:$0xff]
    %v80 = vld [vmem:[#allocation3 + $0x80] sm:$0xff]
    %v81 = vld [vmem:[#allocation3 + $0x88] sm:$0xff]
    %v82 = vld [vmem:[#allocation3 + $0x90] sm:$0xff]
    %v83 = vld [vmem:[#allocation3 + $0x98] sm:$0xff]
    %v84 = vld [vmem:[#allocation3 + $0xa0] sm:$0xff]
    %v85 = vld [vmem:[#allocation3 + $0xa8] sm:$0xff]
    %v86 = vld [vmem:[#allocation3 + $0xb0] sm:$0xff]
    %v87 = vld [vmem:[#allocation3 + $0xb8] sm:$0xff]
    %v88 = vld [vmem:[#allocation3 + $0xc0] sm:$0xff]
    %v89 = vld [vmem:[#allocation3 + $0xc8] sm:$0xff]
    %v90 = vld [vmem:[#allocation3 + $0xd0] sm:$0xff]
    %v91 = vld [vmem:[#allocation3 + $0xd8] sm:$0xff]
    %v92 = vld [vmem:[#allocation3 + $0xe0] sm:$0xff]
    %v93 = vld [vmem:[#allocation3 + $0xe8] sm:$0xff]
    %v94 = vld [vmem:[#allocation3 + $0xf0] sm:$0xff]
    %v95 = vld [vmem:[#allocation3 + $0xf8] sm:$0xff]
    %v96 = vld [vmem:[%s3] sm:$0xf]
    %v98 = vlaneseq
    %v99 = vshrl.u32 %v98, 7
    %v100 = vsub.s32 0, %v99
    %v101 = vrot.slane %v96, %v100
    %v102 = vlaneseq
    %v103 = vshrl.u32 %v102, 7
    %v104 = vsub.s32 1, %v103
    %v105 = vrot.slane %v96, %v104
    %v106 = vlaneseq
    %v107 = vshrl.u32 %v106, 7
    %v108 = vsub.s32 2, %v107
    %v109 = vrot.slane %v96, %v108
    %v110 = vlaneseq
    %v111 = vshrl.u32 %v110, 7
    %v112 = vsub.s32 3, %v111
    %v113 = vrot.slane %v96, %v112
    %v150 = vunpack.c.l.b16 %v64
    %v151 = vunpack.c.h.b16 %v64
    %v152 = vunpack.c.l.b16 %v65
    %v153 = vunpack.c.h.b16 %v65
    %v154 = vunpack.c.l.b16 %v66
    %v155 = vunpack.c.h.b16 %v66
    %v156 = vunpack.c.l.b16 %v67
    %v157 = vunpack.c.h.b16 %v67
    %v158 = vunpack.c.l.b16 %v68
    %v159 = vunpack.c.h.b16 %v68
    %v160 = vunpack.c.l.b16 %v69
    %v161 = vunpack.c.h.b16 %v69
    %v162 = vunpack.c.l.b16 %v70
    %v163 = vunpack.c.h.b16 %v70
    %v164 = vunpack.c.l.b16 %v71
    %v165 = vunpack.c.h.b16 %v71
    %v166 = vunpack.c.l.b16 %v72
    %v167 = vunpack.c.h.b16 %v72
    %v168 = vunpack.c.l.b16 %v73
    %v169 = vunpack.c.h.b16 %v73
    %v170 = vunpack.c.l.b16 %v74
    %v171 = vunpack.c.h.b16 %v74
    %v172 = vunpack.c.l.b16 %v75
    %v173 = vunpack.c.h.b16 %v75
    %v174 = vunpack.c.l.b16 %v76
    %v175 = vunpack.c.h.b16 %v76
    %v176 = vunpack.c.l.b16 %v77
    %v177 = vunpack.c.h.b16 %v77
    %v178 = vunpack.c.l.b16 %v78
    %v179 = vunpack.c.h.b16 %v78
    %v180 = vunpack.c.l.b16 %v79
    %v181 = vunpack.c.h.b16 %v79
    %v182 = vunpack.c.l.b16 %v80
    %v183 = vunpack.c.h.b16 %v80
    %v184 = vunpack.c.l.b16 %v81
    %v185 = vunpack.c.h.b16 %v81
    %v186 = vunpack.c.l.b16 %v82
    %v187 = vunpack.c.h.b16 %v82
    %v188 = vunpack.c.l.b16 %v83
    %v189 = vunpack.c.h.b16 %v83
    %v190 = vunpack.c.l.b16 %v84
    %v191 = vunpack.c.h.b16 %v84
    %v192 = vunpack.c.l.b16 %v85
    %v193 = vunpack.c.h.b16 %v85
    %v194 = vunpack.c.l.b16 %v86
    %v195 = vunpack.c.h.b16 %v86
    %v196 = vunpack.c.l.b16 %v87
    %v197 = vunpack.c.h.b16 %v87
    %v198 = vunpack.c.l.b16 %v88
    %v199 = vunpack.c.h.b16 %v88
    %v200 = vunpack.c.l.b16 %v89
    %v201 = vunpack.c.h.b16 %v89
    %v202 = vunpack.c.l.b16 %v90
    %v203 = vunpack.c.h.b16 %v90
    %v204 = vunpack.c.l.b16 %v91
    %v205 = vunpack.c.h.b16 %v91
    %v206 = vunpack.c.l.b16 %v92
    %v207 = vunpack.c.h.b16 %v92
    %v208 = vunpack.c.l.b16 %v93
    %v209 = vunpack.c.h.b16 %v93
    %v210 = vunpack.c.l.b16 %v94
    %v211 = vunpack.c.h.b16 %v94
    %v212 = vunpack.c.l.b16 %v95
    %v213 = vunpack.c.h.b16 %v95
    %v214 = vpack.c.b16 %v154, %v150
    %v215 = vpack.c.b16 %v155, %v151
    %v216 = vpack.c.b16 %v156, %v152
    %v217 = vpack.c.b16 %v157, %v153
    %v218 = vpack.c.b16 %v162, %v158
    %v219 = vpack.c.b16 %v163, %v159
    %v220 = vpack.c.b16 %v164, %v160
    %v221 = vpack.c.b16 %v165, %v161
    %v222 = vpack.c.b16 %v170, %v166
    %v223 = vpack.c.b16 %v171, %v167
    %v224 = vpack.c.b16 %v172, %v168
    %v225 = vpack.c.b16 %v173, %v169
    %v226 = vpack.c.b16 %v178, %v174
    %v227 = vpack.c.b16 %v179, %v175
    %v228 = vpack.c.b16 %v180, %v176
    %v229 = vpack.c.b16 %v181, %v177
    %v230 = vpack.c.b16 %v186, %v182
    %v231 = vpack.c.b16 %v187, %v183
    %v232 = vpack.c.b16 %v188, %v184
    %v233 = vpack.c.b16 %v189, %v185
    %v234 = vpack.c.b16 %v194, %v190
    %v235 = vpack.c.b16 %v195, %v191
    %v236 = vpack.c.b16 %v196, %v192
    %v237 = vpack.c.b16 %v197, %v193
    %v238 = vpack.c.b16 %v202, %v198
    %v239 = vpack.c.b16 %v203, %v199
    %v240 = vpack.c.b16 %v204, %v200
    %v241 = vpack.c.b16 %v205, %v201
    %v242 = vpack.c.b16 %v210, %v206
    %v243 = vpack.c.b16 %v211, %v207
    %v244 = vpack.c.b16 %v212, %v208
    %v245 = vpack.c.b16 %v213, %v209
    %278 = vmatprep.subr.bf16.mxu0 %v215
    %279 = vmatpush1.bf16.msra.mxu0 %v214
    %280 = vmatprep.subr.bf16.mxu0 %v219
    %281 = vmatpush1.bf16.msra.mxu0 %v218
    %282 = vmatprep.subr.bf16.mxu0 %v223
    %283 = vmatpush1.bf16.msra.mxu0 %v222
    %284 = vmatprep.subr.bf16.mxu0 %v227
    %285 = vmatpush1.bf16.msra.mxu0 %v226
    %286 = vmatprep.subr.bf16.mxu0 %v231
    %287 = vmatpush1.bf16.msra.mxu0 %v230
    %288 = vmatprep.subr.bf16.mxu0 %v235
    %289 = vmatpush1.bf16.msra.mxu0 %v234
    %290 = vmatprep.subr.bf16.mxu0 %v239
    %291 = vmatpush1.bf16.msra.mxu0 %v238
    %292 = vmatprep.subr.bf16.mxu0 %v243
    %293 = vmatpush1.bf16.msra.mxu0 %v242
    %294 = vmatprep.subr.bf16.mxu0 0
    %295 = vmatpush1.bf16.msra.mxu0 0
    %296 = vmatprep.subr.bf16.mxu0 0
    %297 = vmatpush1.bf16.msra.mxu0 0
    %298 = vmatprep.subr.bf16.mxu0 0
    %299 = vmatpush1.bf16.msra.mxu0 0
    %300 = vmatprep.subr.bf16.mxu0 0
    %301 = vmatpush1.bf16.msra.mxu0 0
    %302 = vmatprep.subr.bf16.mxu0 0
    %303 = vmatpush1.bf16.msra.mxu0 0
    %304 = vmatprep.subr.bf16.mxu0 0
    %305 = vmatpush1.bf16.msra.mxu0 0
    %306 = vmatprep.subr.bf16.mxu0 0
    %307 = vmatpush1.bf16.msra.mxu0 0
    %308 = vmatprep.subr.bf16.mxu0 0
    %309 = vmatpush1.bf16.msra.mxu0 0
    %310 = vmatprep.mubr.bf16.mxu0 0
    %311 = vmatmul.mubr.bf16.gmra.mrb[0].mxu0 %v60
    %v312 = vpop.f32.mrb[0].mxu0
    %v313 = vadd.f32 %v101, %v312
    %v314 = vpop.f32.mrb[0].mxu0
    %v315 = vadd.f32 %v105, %v314
    %v316 = vpop.f32.mrb[0].mxu0
    %v317 = vadd.f32 %v101, %v316
    %v318 = vpop.f32.mrb[0].mxu0
    %v319 = vadd.f32 %v105, %v318
    %320 = vmatprep.mubr.bf16.mxu0 0
    %321 = vmatmul.mubr.bf16.gmra.mrb[0].mxu0 %v61
    %v322 = vpop.f32.mrb[0].mxu0
    %v323 = vadd.f32 %v101, %v322
    %v324 = vpop.f32.mrb[0].mxu0
    %v325 = vadd.f32 %v105, %v324
    %v326 = vpop.f32.mrb[0].mxu0
    %v327 = vadd.f32 %v101, %v326
    %v328 = vpop.f32.mrb[0].mxu0
    %v329 = vadd.f32 %v105, %v328
    %330 = vmatprep.mubr.bf16.mxu0 0
    %331 = vmatmul.mubr.bf16.gmra.mrb[0].mxu0 %v62
    %v332 = vpop.f32.mrb[0].mxu0
    %v333 = vadd.f32 %v101, %v332
    %v334 = vpop.f32.mrb[0].mxu0
    %v335 = vadd.f32 %v105, %v334
    %v336 = vpop.f32.mrb[0].mxu0
    %v337 = vadd.f32 %v101, %v336
    %v338 = vpop.f32.mrb[0].mxu0
    %v339 = vadd.f32 %v105, %v338
    %340 = vmatprep.mubr.bf16.mxu0 0
    %341 = vmatmul.mubr.bf16.gmra.mrb[0].mxu0 %v63
    %v342 = vpop.f32.mrb[0].mxu0
    %v343 = vadd.f32 %v101, %v342
    %v344 = vpop.f32.mrb[0].mxu0
    %v345 = vadd.f32 %v105, %v344
    %v346 = vpop.f32.mrb[0].mxu0
    %v347 = vadd.f32 %v101, %v346
    %v348 = vpop.f32.mrb[0].mxu0
    %v349 = vadd.f32 %v105, %v348
    %350 = vdwg.mxu0
    %351 = vmatprep.subr.bf16.mxu0 %v217
    %352 = vmatpush1.bf16.msra.mxu0 %v216
    %353 = vmatprep.subr.bf16.mxu0 %v221
    %354 = vmatpush1.bf16.msra.mxu0 %v220
    %355 = vmatprep.subr.bf16.mxu0 %v225
    %356 = vmatpush1.bf16.msra.mxu0 %v224
    %357 = vmatprep.subr.bf16.mxu0 %v229
    %358 = vmatpush1.bf16.msra.mxu0 %v228
    %359 = vmatprep.subr.bf16.mxu0 %v233
    %360 = vmatpush1.bf16.msra.mxu0 %v232
    %361 = vmatprep.subr.bf16.mxu0 %v237
    %362 = vmatpush1.bf16.msra.mxu0 %v236
    %363 = vmatprep.subr.bf16.mxu0 %v241
    %364 = vmatpush1.bf16.msra.mxu0 %v240
    %365 = vmatprep.subr.bf16.mxu0 %v245
    %366 = vmatpush1.bf16.msra.mxu0 %v244
    %367 = vmatprep.subr.bf16.mxu0 0
    %368 = vmatpush1.bf16.msra.mxu0 0
    %369 = vmatprep.subr.bf16.mxu0 0
    %370 = vmatpush1.bf16.msra.mxu0 0
    %371 = vmatprep.subr.bf16.mxu0 0
    %372 = vmatpush1.bf16.msra.mxu0 0
    %373 = vmatprep.subr.bf16.mxu0 0
    %374 = vmatpush1.bf16.msra.mxu0 0
    %375 = vmatprep.subr.bf16.mxu0 0
    %376 = vmatpush1.bf16.msra.mxu0 0
    %377 = vmatprep.subr.bf16.mxu0 0
    %378 = vmatpush1.bf16.msra.mxu0 0
    %379 = vmatprep.subr.bf16.mxu0 0
    %380 = vmatpush1.bf16.msra.mxu0 0
    %381 = vmatprep.subr.bf16.mxu0 0
    %382 = vmatpush1.bf16.msra.mxu0 0
    %383 = vmatprep.mubr.bf16.mxu0 0
    %384 = vmatmul.mubr.bf16.gmra.mrb[0].mxu0 %v60
    %v385 = vpop.f32.mrb[0].mxu0
    %v386 = vadd.f32 %v109, %v385
    %v387 = vpop.f32.mrb[0].mxu0
    %v388 = vadd.f32 %v113, %v387
    %v389 = vpop.f32.mrb[0].mxu0
    %v390 = vadd.f32 %v109, %v389
    %v391 = vpop.f32.mrb[0].mxu0
    %v392 = vadd.f32 %v113, %v391
    %393 = vmatprep.mubr.bf16.mxu0 0
    %394 = vmatmul.mubr.bf16.gmra.mrb[0].mxu0 %v61
    %v395 = vpop.f32.mrb[0].mxu0
    %v396 = vadd.f32 %v109, %v395
    %v397 = vpop.f32.mrb[0].mxu0
    %v398 = vadd.f32 %v113, %v397
    %v399 = vpop.f32.mrb[0].mxu0
    %v400 = vadd.f32 %v109, %v399
    %v401 = vpop.f32.mrb[0].mxu0
    %v402 = vadd.f32 %v113, %v401
    %403 = vmatprep.mubr.bf16.mxu0 0
    %404 = vmatmul.mubr.bf16.gmra.mrb[0].mxu0 %v62
    %v405 = vpop.f32.mrb[0].mxu0
    %v406 = vadd.f32 %v109, %v405
    %v407 = vpop.f32.mrb[0].mxu0
    %v408 = vadd.f32 %v113, %v407
    %v409 = vpop.f32.mrb[0].mxu0
    %v410 = vadd.f32 %v109, %v409
    %v411 = vpop.f32.mrb[0].mxu0
    %v412 = vadd.f32 %v113, %v411
    %413 = vmatprep.mubr.bf16.mxu0 0
    %414 = vmatmul.mubr.bf16.gmra.mrb[0].mxu0 %v63
    %v415 = vpop.f32.mrb[0].mxu0
    %v416 = vadd.f32 %v109, %v415
    %v417 = vpop.f32.mrb[0].mxu0
    %v418 = vadd.f32 %v113, %v417
    %v419 = vpop.f32.mrb[0].mxu0
    %v420 = vadd.f32 %v109, %v419
    %v421 = vpop.f32.mrb[0].mxu0
    %v422 = vadd.f32 %v113, %v421
    %423 = vdwg.mxu0
    %424 = vst [vmem:[#allocation2] sm:$0xff] %v313
    %425 = vst [vmem:[#allocation2 + $0x8] sm:$0xff] %v315
    %426 = vst [vmem:[#allocation2 + $0x10] sm:$0xff] %v386
    %427 = vst [vmem:[#allocation2 + $0x18] sm:$0xff] %v388
    %428 = vst [vmem:[#allocation2 + $0x20] sm:$0xff] %v317
    %429 = vst [vmem:[#allocation2 + $0x28] sm:$0xff] %v319
    %430 = vst [vmem:[#allocation2 + $0x30] sm:$0xff] %v390
    %431 = vst [vmem:[#allocation2 + $0x38] sm:$0xff] %v392
    %432 = vst [vmem:[#allocation2 + $0x40] sm:$0xff] %v323
    %433 = vst [vmem:[#allocation2 + $0x48] sm:$0xff] %v325
    %434 = vst [vmem:[#allocation2 + $0x50] sm:$0xff] %v396
    %435 = vst [vmem:[#allocation2 + $0x58] sm:$0xff] %v398
    %436 = vst [vmem:[#allocation2 + $0x60] sm:$0xff] %v327
    %437 = vst [vmem:[#allocation2 + $0x68] sm:$0xff] %v329
    %438 = vst [vmem:[#allocation2 + $0x70] sm:$0xff] %v400
    %439 = vst [vmem:[#allocation2 + $0x78] sm:$0xff] %v402
    %440 = vst [vmem:[#allocation2 + $0x80] sm:$0xff] %v333
    %441 = vst [vmem:[#allocation2 + $0x88] sm:$0xff] %v335
    %442 = vst [vmem:[#allocation2 + $0x90] sm:$0xff] %v406
    %443 = vst [vmem:[#allocation2 + $0x98] sm:$0xff] %v408
    %444 = vst [vmem:[#allocation2 + $0xa0] sm:$0xff] %v337
    %445 = vst [vmem:[#allocation2 + $0xa8] sm:$0xff] %v339
    %446 = vst [vmem:[#allocation2 + $0xb0] sm:$0xff] %v410
    %447 = vst [vmem:[#allocation2 + $0xb8] sm:$0xff] %v412
    %448 = vst [vmem:[#allocation2 + $0xc0] sm:$0xff] %v343
    %449 = vst [vmem:[#allocation2 + $0xc8] sm:$0xff] %v345
    %450 = vst [vmem:[#allocation2 + $0xd0] sm:$0xff] %v416
    %451 = vst [vmem:[#allocation2 + $0xd8] sm:$0xff] %v418
    %452 = vst [vmem:[#allocation2 + $0xe0] sm:$0xff] %v347
    %453 = vst [vmem:[#allocation2 + $0xe8] sm:$0xff] %v349
    %454 = vst [vmem:[#allocation2 + $0xf0] sm:$0xff] %v420
    %455 = vst [vmem:[#allocation2 + $0xf8] sm:$0xff] %v422
    %v456 = vld [vmem:[#allocation2] sm:$0xff]
    %v457 = vld [vmem:[#allocation2 + $0x8] sm:$0xff]
    %v458 = vld [vmem:[#allocation2 + $0x10] sm:$0xff]
    %v459 = vld [vmem:[#allocation2 + $0x18] sm:$0xff]
    %v460 = vld [vmem:[#allocation5] sm:$0xff]
    %v461 = vld [vmem:[#allocation5 + $0x8] sm:$0xff]
    %v462 = vld [vmem:[#allocation5 + $0x10] sm:$0xff]
    %v463 = vld [vmem:[#allocation5 + $0x18] sm:$0xff]
    %v464 = vld [vmem:[#allocation5 + $0x20] sm:$0xff]
    %v465 = vld [vmem:[#allocation5 + $0x28] sm:$0xff]
    %v466 = vld [vmem:[#allocation5 + $0x30] sm:$0xff]
    %v467 = vld [vmem:[#allocation5 + $0x38] sm:$0xff]
    %v468 = vld [vmem:[#allocation5 + $0x40] sm:$0xff]
    %v469 = vld [vmem:[#allocation5 + $0x48] sm:$0xff]
    %v470 = vld [vmem:[#allocation5 + $0x50] sm:$0xff]
    %v471 = vld [vmem:[#allocation5 + $0x58] sm:$0xff]
    %v472 = vld [vmem:[#allocation5 + $0x60] sm:$0xff]
    %v473 = vld [vmem:[#allocation5 + $0x68] sm:$0xff]
    %v474 = vld [vmem:[#allocation5 + $0x70] sm:$0xff]
    %v475 = vld [vmem:[#allocation5 + $0x78] sm:$0xff]
    %v476 = vld [vmem:[#allocation5 + $0x80] sm:$0xff]
    %v477 = vld [vmem:[#allocation5 + $0x88] sm:$0xff]
    %v478 = vld [vmem:[#allocation5 + $0x90] sm:$0xff]
    %v479 = vld [vmem:[#allocation5 + $0x98] sm:$0xff]
    %v480 = vld [vmem:[#allocation5 + $0xa0] sm:$0xff]
    %v481 = vld [vmem:[#allocation5 + $0xa8] sm:$0xff]
    %v482 = vld [vmem:[#allocation5 + $0xb0] sm:$0xff]
    %v483 = vld [vmem:[#allocation5 + $0xb8] sm:$0xff]
    %v484 = vld [vmem:[#allocation5 + $0xc0] sm:$0xff]
    %v485 = vld [vmem:[#allocation5 + $0xc8] sm:$0xff]
    %v486 = vld [vmem:[#allocation5 + $0xd0] sm:$0xff]
    %v487 = vld [vmem:[#allocation5 + $0xd8] sm:$0xff]
    %v488 = vld [vmem:[#allocation5 + $0xe0] sm:$0xff]
    %v489 = vld [vmem:[#allocation5 + $0xe8] sm:$0xff]
    %v490 = vld [vmem:[#allocation5 + $0xf0] sm:$0xff]
    %v491 = vld [vmem:[#allocation5 + $0xf8] sm:$0xff]
    %v524 = vunpack.c.l.b16 %v460
    %v525 = vunpack.c.h.b16 %v460
    %v526 = vunpack.c.l.b16 %v461
    %v527 = vunpack.c.h.b16 %v461
    %v528 = vunpack.c.l.b16 %v462
    %v529 = vunpack.c.h.b16 %v462
    %v530 = vunpack.c.l.b16 %v463
    %v531 = vunpack.c.h.b16 %v463
    %v532 = vunpack.c.l.b16 %v464
    %v533 = vunpack.c.h.b16 %v464
    %v534 = vunpack.c.l.b16 %v465
    %v535 = vunpack.c.h.b16 %v465
    %v536 = vunpack.c.l.b16 %v466
    %v537 = vunpack.c.h.b16 %v466
    %v538 = vunpack.c.l.b16 %v467
    %v539 = vunpack.c.h.b16 %v467
    %v540 = vunpack.c.l.b16 %v468
    %v541 = vunpack.c.h.b16 %v468
    %v542 = vunpack.c.l.b16 %v469
    %v543 = vunpack.c.h.b16 %v469
    %v544 = vunpack.c.l.b16 %v470
    %v545 = vunpack.c.h.b16 %v470
    %v546 = vunpack.c.l.b16 %v471
    %v547 = vunpack.c.h.b16 %v471
    %v548 = vunpack.c.l.b16 %v472
    %v549 = vunpack.c.h.b16 %v472
    %v550 = vunpack.c.l.b16 %v473
    %v551 = vunpack.c.h.b16 %v473
    %v552 = vunpack.c.l.b16 %v474
    %v553 = vunpack.c.h.b16 %v474
    %v554 = vunpack.c.l.b16 %v475
    %v555 = vunpack.c.h.b16 %v475
    %v556 = vunpack.c.l.b16 %v476
    %v557 = vunpack.c.h.b16 %v476
    %v558 = vunpack.c.l.b16 %v477
    %v559 = vunpack.c.h.b16 %v477
    %v560 = vunpack.c.l.b16 %v478
    %v561 = vunpack.c.h.b16 %v478
    %v562 = vunpack.c.l.b16 %v479
    %v563 = vunpack.c.h.b16 %v479
    %v564 = vunpack.c.l.b16 %v480
    %v565 = vunpack.c.h.b16 %v480
    %v566 = vunpack.c.l.b16 %v481
    %v567 = vunpack.c.h.b16 %v481
    %v568 = vunpack.c.l.b16 %v482
    %v569 = vunpack.c.h.b16 %v482
    %v570 = vunpack.c.l.b16 %v483
    %v571 = vunpack.c.h.b16 %v483
    %v572 = vunpack.c.l.b16 %v484
    %v573 = vunpack.c.h.b16 %v484
    %v574 = vunpack.c.l.b16 %v485
    %v575 = vunpack.c.h.b16 %v485
    %v576 = vunpack.c.l.b16 %v486
    %v577 = vunpack.c.h.b16 %v486
    %v578 = vunpack.c.l.b16 %v487
    %v579 = vunpack.c.h.b16 %v487
    %v580 = vunpack.c.l.b16 %v488
    %v581 = vunpack.c.h.b16 %v488
    %v582 = vunpack.c.l.b16 %v489
    %v583 = vunpack.c.h.b16 %v489
    %v584 = vunpack.c.l.b16 %v490
    %v585 = vunpack.c.h.b16 %v490
    %v586 = vunpack.c.l.b16 %v491
    %v587 = vunpack.c.h.b16 %v491
    %v588 = vpack.c.b16 %v528, %v524
    %v589 = vpack.c.b16 %v529, %v525
    %v590 = vpack.c.b16 %v530, %v526
    %v591 = vpack.c.b16 %v531, %v527
    %v592 = vpack.c.b16 %v536, %v532
    %v593 = vpack.c.b16 %v537, %v533
    %v594 = vpack.c.b16 %v538, %v534
    %v595 = vpack.c.b16 %v539, %v535
    %v596 = vpack.c.b16 %v544, %v540
    %v597 = vpack.c.b16 %v545, %v541
    %v598 = vpack.c.b16 %v546, %v542
    %v599 = vpack.c.b16 %v547, %v543
    %v600 = vpack.c.b16 %v552, %v548
    %v601 = vpack.c.b16 %v553, %v549
    %v602 = vpack.c.b16 %v554, %v550
    %v603 = vpack.c.b16 %v555, %v551
    %v604 = vpack.c.b16 %v560, %v556
    %v605 = vpack.c.b16 %v561, %v557
    %v606 = vpack.c.b16 %v562, %v558
    %v607 = vpack.c.b16 %v563, %v559
    %v608 = vpack.c.b16 %v568, %v564
    %v609 = vpack.c.b16 %v569, %v565
    %v610 = vpack.c.b16 %v570, %v566
    %v611 = vpack.c.b16 %v571, %v567
    %v612 = vpack.c.b16 %v576, %v572
    %v613 = vpack.c.b16 %v577, %v573
    %v614 = vpack.c.b16 %v578, %v574
    %v615 = vpack.c.b16 %v579, %v575
    %v616 = vpack.c.b16 %v584, %v580
    %v617 = vpack.c.b16 %v585, %v581
    %v618 = vpack.c.b16 %v586, %v582
    %v619 = vpack.c.b16 %v587, %v583
    %652 = vmatprep.subr.bf16.mxu0 %v589
    %653 = vmatpush1.bf16.msra.mxu0 %v588
    %654 = vmatprep.subr.bf16.mxu0 %v593
    %655 = vmatpush1.bf16.msra.mxu0 %v592
    %656 = vmatprep.subr.bf16.mxu0 %v597
    %657 = vmatpush1.bf16.msra.mxu0 %v596
    %658 = vmatprep.subr.bf16.mxu0 %v601
    %659 = vmatpush1.bf16.msra.mxu0 %v600
    %660 = vmatprep.subr.bf16.mxu0 %v605
    %661 = vmatpush1.bf16.msra.mxu0 %v604
    %662 = vmatprep.subr.bf16.mxu0 %v609
    %663 = vmatpush1.bf16.msra.mxu0 %v608
    %664 = vmatprep.subr.bf16.mxu0 %v613
    %665 = vmatpush1.bf16.msra.mxu0 %v612
    %666 = vmatprep.subr.bf16.mxu0 %v617
    %667 = vmatpush1.bf16.msra.mxu0 %v616
    %668 = vmatprep.subr.bf16.mxu0 0
    %669 = vmatpush1.bf16.msra.mxu0 0
    %670 = vmatprep.subr.bf16.mxu0 0
    %671 = vmatpush1.bf16.msra.mxu0 0
    %672 = vmatprep.subr.bf16.mxu0 0
    %673 = vmatpush1.bf16.msra.mxu0 0
    %674 = vmatprep.subr.bf16.mxu0 0
    %675 = vmatpush1.bf16.msra.mxu0 0
    %676 = vmatprep.subr.bf16.mxu0 0
    %677 = vmatpush1.bf16.msra.mxu0 0
    %678 = vmatprep.subr.bf16.mxu0 0
    %679 = vmatpush1.bf16.msra.mxu0 0
    %680 = vmatprep.subr.bf16.mxu0 0
    %681 = vmatpush1.bf16.msra.mxu0 0
    %682 = vmatprep.subr.bf16.mxu0 0
    %683 = vmatpush1.bf16.msra.mxu0 0
    %684 = vmatprep.mubr.bf16.mxu0 0
    %685 = vmatmul.mubr.bf16.gmra.mrb[0].mxu0 0
    %v686 = vpop.f32.mrb[0].mxu0
    %v687 = vadd.f32 0.0, %v686
    %v688 = vpop.f32.mrb[0].mxu0
    %v689 = vadd.f32 0.0, %v688
    %v690 = vpop.f32.mrb[0].mxu0
    %v691 = vpop.f32.mrb[0].mxu0
    %692 = vdwg.mxu0
    %693 = vmatprep.subr.bf16.mxu0 %v591
    %694 = vmatpush1.bf16.msra.mxu0 %v590
    %695 = vmatprep.subr.bf16.mxu0 %v595
    %696 = vmatpush1.bf16.msra.mxu0 %v594
    %697 = vmatprep.subr.bf16.mxu0 %v599
    %698 = vmatpush1.bf16.msra.mxu0 %v598
    %699 = vmatprep.subr.bf16.mxu0 %v603
    %700 = vmatpush1.bf16.msra.mxu0 %v602
    %701 = vmatprep.subr.bf16.mxu0 %v607
    %702 = vmatpush1.bf16.msra.mxu0 %v606
    %703 = vmatprep.subr.bf16.mxu0 %v611
    %704 = vmatpush1.bf16.msra.mxu0 %v610
    %705 = vmatprep.subr.bf16.mxu0 %v615
    %706 = vmatpush1.bf16.msra.mxu0 %v614
    %707 = vmatprep.subr.bf16.mxu0 %v619
    %708 = vmatpush1.bf16.msra.mxu0 %v618
    %709 = vmatprep.subr.bf16.mxu0 0
    %710 = vmatpush1.bf16.msra.mxu0 0
    %711 = vmatprep.subr.bf16.mxu0 0
    %712 = vmatpush1.bf16.msra.mxu0 0
    %713 = vmatprep.subr.bf16.mxu0 0
    %714 = vmatpush1.bf16.msra.mxu0 0
    %715 = vmatprep.subr.bf16.mxu0 0
    %716 = vmatpush1.bf16.msra.mxu0 0
    %717 = vmatprep.subr.bf16.mxu0 0
    %718 = vmatpush1.bf16.msra.mxu0 0
    %719 = vmatprep.subr.bf16.mxu0 0
    %720 = vmatpush1.bf16.msra.mxu0 0
    %721 = vmatprep.subr.bf16.mxu0 0
    %722 = vmatpush1.bf16.msra.mxu0 0
    %723 = vmatprep.subr.bf16.mxu0 0
    %724 = vmatpush1.bf16.msra.mxu0 0
    %725 = vmatprep.mubr.bf16.mxu0 0
    %726 = vmatmul.mubr.bf16.gmra.mrb[0].mxu0 0
    %v727 = vpop.f32.mrb[0].mxu0
    %v728 = vadd.f32 0.0, %v727
    %v729 = vpop.f32.mrb[0].mxu0
    %v730 = vadd.f32 0.0, %v729
    %v731 = vpop.f32.mrb[0].mxu0
    %v732 = vpop.f32.mrb[0].mxu0
    %733 = vdwg.mxu0
    %v734 = vadd.f32 %v456, %v687
    %v735 = vadd.f32 %v457, %v689
    %v736 = vadd.f32 %v458, %v728
    %v737 = vadd.f32 %v459, %v730
    %v738 = vmul.f32 %v734, 0.5
    %v739 = vmul.f32 %v735, 0.5
    %v740 = vmul.f32 %v736, 0.5
    %v741 = vtanh.pop %v738
    %v742 = vtanh.pop %v739
    %v743 = vtanh.pop %v740
    %v744 = vmul.f32 %v741, 0.5
    %v745 = vmul.f32 %v742, 0.5
    %v746 = vmul.f32 %v743, 0.5
    %v747 = vadd.f32 %v744, 0.5
    %v748 = vadd.f32 %v745, 0.5
    %v749 = vadd.f32 %v746, 0.5
    %v750 = vtanh.pop %v737
    %v751 = vmul.f32 %v748, 0.0
    %v752 = vmul.f32 %v747, %v750
    %v753 = vadd.f32 %v751, %v752
    %v754 = vtanh.pop %v753
    %v755 = vmul.f32 %v749, %v754
    %v756 = vpack.c.bf16 %v755, %v755
    %s757 = scalar_lea.vmem [#allocation3], 256
    %v758 = vld [vmem:[%s757] sm:$0xff]
    %v759 = vld [vmem:[%s757 + $0x8] sm:$0xff]
    %v760 = vld [vmem:[%s757 + $0x10] sm:$0xff]
    %v761 = vld [vmem:[%s757 + $0x18] sm:$0xff]
    %v762 = vld [vmem:[%s757 + $0x20] sm:$0xff]
    %v763 = vld [vmem:[%s757 + $0x28] sm:$0xff]
    %v764 = vld [vmem:[%s757 + $0x30] sm:$0xff]
    %v765 = vld [vmem:[%s757 + $0x38] sm:$0xff]
    %v766 = vld [vmem:[%s757 + $0x40] sm:$0xff]
    %v767 = vld [vmem:[%s757 + $0x48] sm:$0xff]
    %v768 = vld [vmem:[%s757 + $0x50] sm:$0xff]
    %v769 = vld [vmem:[%s757 + $0x58] sm:$0xff]
    %v770 = vld [vmem:[%s757 + $0x60] sm:$0xff]
    %v771 = vld [vmem:[%s757 + $0x68] sm:$0xff]
    %v772 = vld [vmem:[%s757 + $0x70] sm:$0xff]
    %v773 = vld [vmem:[%s757 + $0x78] sm:$0xff]
    %v774 = vld [vmem:[%s757 + $0x80] sm:$0xff]
    %v775 = vld [vmem:[%s757 + $0x88] sm:$0xff]
    %v776 = vld [vmem:[%s757 + $0x90] sm:$0xff]
    %v777 = vld [vmem:[%s757 + $0x98] sm:$0xff]
    %v778 = vld [vmem:[%s757 + $0xa0] sm:$0xff]
    %v779 = vld [vmem:[%s757 + $0xa8] sm:$0xff]
    %v780 = vld [vmem:[%s757 + $0xb0] sm:$0xff]
    %v781 = vld [vmem:[%s757 + $0xb8] sm:$0xff]
    %v782 = vld [vmem:[%s757 + $0xc0] sm:$0xff]
    %v783 = vld [vmem:[%s757 + $0xc8] sm:$0xff]
    %v784 = vld [vmem:[%s757 + $0xd0] sm:$0xff]
    %v785 = vld [vmem:[%s757 + $0xd8] sm:$0xff]
    %v786 = vld [vmem:[%s757 + $0xe0] sm:$0xff]
    %v787 = vld [vmem:[%s757 + $0xe8] sm:$0xff]
    %v788 = vld [vmem:[%s757 + $0xf0] sm:$0xff]
    %v789 = vld [vmem:[%s757 + $0xf8] sm:$0xff]
    %s790 = scalar_lea.vmem %s3, 4
    %v791 = vld [vmem:[%s790] sm:$0xf]
    %v793 = vlaneseq
    %v794 = vshrl.u32 %v793, 7
    %v795 = vsub.s32 0, %v794
    %v796 = vrot.slane %v791, %v795
    %v797 = vlaneseq
    %v798 = vshrl.u32 %v797, 7
    %v799 = vsub.s32 1, %v798
    %v800 = vrot.slane %v791, %v799
    %v801 = vlaneseq
    %v802 = vshrl.u32 %v801, 7
    %v803 = vsub.s32 2, %v802
    %v804 = vrot.slane %v791, %v803
    %v805 = vlaneseq
    %v806 = vshrl.u32 %v805, 7
    %v807 = vsub.s32 3, %v806
    %v808 = vrot.slane %v791, %v807
    %v845 = vunpack.c.l.b16 %v758
    %v846 = vunpack.c.h.b16 %v758
    %v847 = vunpack.c.l.b16 %v759
    %v848 = vunpack.c.h.b16 %v759
    %v849 = vunpack.c.l.b16 %v760
    %v850 = vunpack.c.h.b16 %v760
    %v851 = vunpack.c.l.b16 %v761
    %v852 = vunpack.c.h.b16 %v761
    %v853 = vunpack.c.l.b16 %v762
    %v854 = vunpack.c.h.b16 %v762
    %v855 = vunpack.c.l.b16 %v763
    %v856 = vunpack.c.h.b16 %v763
    %v857 = vunpack.c.l.b16 %v764
    %v858 = vunpack.c.h.b16 %v764
    %v859 = vunpack.c.l.b16 %v765
    %v860 = vunpack.c.h.b16 %v765
    %v861 = vunpack.c.l.b16 %v766
    %v862 = vunpack.c.h.b16 %v766
    %v863 = vunpack.c.l.b16 %v767
    %v864 = vunpack.c.h.b16 %v767
    %v865 = vunpack.c.l.b16 %v768
    %v866 = vunpack.c.h.b16 %v768
    %v867 = vunpack.c.l.b16 %v769
    %v868 = vunpack.c.h.b16 %v769
    %v869 = vunpack.c.l.b16 %v770
    %v870 = vunpack.c.h.b16 %v770
    %v871 = vunpack.c.l.b16 %v771
    %v872 = vunpack.c.h.b16 %v771
    %v873 = vunpack.c.l.b16 %v772
    %v874 = vunpack.c.h.b16 %v772
    %v875 = vunpack.c.l.b16 %v773
    %v876 = vunpack.c.h.b16 %v773
    %v877 = vunpack.c.l.b16 %v774
    %v878 = vunpack.c.h.b16 %v774
    %v879 = vunpack.c.l.b16 %v775
    %v880 = vunpack.c.h.b16 %v775
    %v881 = vunpack.c.l.b16 %v776
    %v882 = vunpack.c.h.b16 %v776
    %v883 = vunpack.c.l.b16 %v777
    %v884 = vunpack.c.h.b16 %v777
    %v885 = vunpack.c.l.b16 %v778
    %v886 = vunpack.c.h.b16 %v778
    %v887 = vunpack.c.l.b16 %v779
    %v888 = vunpack.c.h.b16 %v779
    %v889 = vunpack.c.l.b16 %v780
    %v890 = vunpack.c.h.b16 %v780
    %v891 = vunpack.c.l.b16 %v781
    %v892 = vunpack.c.h.b16 %v781
    %v893 = vunpack.c.l.b16 %v782
    %v894 = vunpack.c.h.b16 %v782
    %v895 = vunpack.c.l.b16 %v783
    %v896 = vunpack.c.h.b16 %v783
    %v897 = vunpack.c.l.b16 %v784
    %v898 = vunpack.c.h.b16 %v784
    %v899 = vunpack.c.l.b16 %v785
    %v900 = vunpack.c.h.b16 %v785
    %v901 = vunpack.c.l.b16 %v786
    %v902 = vunpack.c.h.b16 %v786
    %v903 = vunpack.c.l.b16 %v787
    %v904 = vunpack.c.h.b16 %v787
    %v905 = vunpack.c.l.b16 %v788
    %v906 = vunpack.c.h.b16 %v788
    %v907 = vunpack.c.l.b16 %v789
    %v908 = vunpack.c.h.b16 %v789
    %v909 = vpack.c.b16 %v849, %v845
    %v910 = vpack.c.b16 %v850, %v846
    %v911 = vpack.c.b16 %v851, %v847
    %v912 = vpack.c.b16 %v852, %v848
    %v913 = vpack.c.b16 %v857, %v853
    %v914 = vpack.c.b16 %v858, %v854
    %v915 = vpack.c.b16 %v859, %v855
    %v916 = vpack.c.b16 %v860, %v856
    %v917 = vpack.c.b16 %v865, %v861
    %v918 = vpack.c.b16 %v866, %v862
    %v919 = vpack.c.b16 %v867, %v863
    %v920 = vpack.c.b16 %v868, %v864
    %v921 = vpack.c.b16 %v873, %v869
    %v922 = vpack.c.b16 %v874, %v870
    %v923 = vpack.c.b16 %v875, %v871
    %v924 = vpack.c.b16 %v876, %v872
    %v925 = vpack.c.b16 %v881, %v877
    %v926 = vpack.c.b16 %v882, %v878
    %v927 = vpack.c.b16 %v883, %v879
    %v928 = vpack.c.b16 %v884, %v880
    %v929 = vpack.c.b16 %v889, %v885
    %v930 = vpack.c.b16 %v890, %v886
    %v931 = vpack.c.b16 %v891, %v887
    %v932 = vpack.c.b16 %v892, %v888
    %v933 = vpack.c.b16 %v897, %v893
    %v934 = vpack.c.b16 %v898, %v894
    %v935 = vpack.c.b16 %v899, %v895
    %v936 = vpack.c.b16 %v900, %v896
    %v937 = vpack.c.b16 %v905, %v901
    %v938 = vpack.c.b16 %v906, %v902
    %v939 = vpack.c.b16 %v907, %v903
    %v940 = vpack.c.b16 %v908, %v904
    %973 = vmatprep.subr.bf16.mxu0 %v910
    %974 = vmatpush1.bf16.msra.mxu0 %v909
    %975 = vmatprep.subr.bf16.mxu0 %v914
    %976 = vmatpush1.bf16.msra.mxu0 %v913
    %977 = vmatprep.subr.bf16.mxu0 %v918
    %978 = vmatpush1.bf16.msra.mxu0 %v917
    %979 = vmatprep.subr.bf16.mxu0 %v922
    %980 = vmatpush1.bf16.msra.mxu0 %v921
    %981 = vmatprep.subr.bf16.mxu0 %v926
    %982 = vmatpush1.bf16.msra.mxu0 %v925
    %983 = vmatprep.subr.bf16.mxu0 %v930
    %984 = vmatpush1.bf16.msra.mxu0 %v929
    %985 = vmatprep.subr.bf16.mxu0 %v934
    %986 = vmatpush1.bf16.msra.mxu0 %v933
    %987 = vmatprep.subr.bf16.mxu0 %v938
    %988 = vmatpush1.bf16.msra.mxu0 %v937
    %989 = vmatprep.subr.bf16.mxu0 0
    %990 = vmatpush1.bf16.msra.mxu0 0
    %991 = vmatprep.subr.bf16.mxu0 0
    %992 = vmatpush1.bf16.msra.mxu0 0
    %993 = vmatprep.subr.bf16.mxu0 0
    %994 = vmatpush1.bf16.msra.mxu0 0
    %995 = vmatprep.subr.bf16.mxu0 0
    %996 = vmatpush1.bf16.msra.mxu0 0
    %997 = vmatprep.subr.bf16.mxu0 0
    %998 = vmatpush1.bf16.msra.mxu0 0
    %999 = vmatprep.subr.bf16.mxu0 0
    %1000 = vmatpush1.bf16.msra.mxu0 0
    %1001 = vmatprep.subr.bf16.mxu0 0
    %1002 = vmatpush1.bf16.msra.mxu0 0
    %1003 = vmatprep.subr.bf16.mxu0 0
    %1004 = vmatpush1.bf16.msra.mxu0 0
    %1005 = vmatprep.mubr.bf16.mxu0 0
    %1006 = vmatmul.mubr.bf16.gmra.mrb[0].mxu0 %v756
    %v1007 = vpop.f32.mrb[0].mxu0
    %v1008 = vadd.f32 %v796, %v1007
    %v1009 = vpop.f32.mrb[0].mxu0
    %v1010 = vadd.f32 %v800, %v1009
    %v1011 = vpop.f32.mrb[0].mxu0
    %v1012 = vpop.f32.mrb[0].mxu0
    %1013 = vdwg.mxu0
    %1014 = vmatprep.subr.bf16.mxu0 %v912
    %1015 = vmatpush1.bf16.msra.mxu0 %v911
    %1016 = vmatprep.subr.bf16.mxu0 %v916
    %1017 = vmatpush1.bf16.msra.mxu0 %v915
    %1018 = vmatprep.subr.bf16.mxu0 %v920
    %1019 = vmatpush1.bf16.msra.mxu0 %v919
    %1020 = vmatprep.subr.bf16.mxu0 %v924
    %1021 = vmatpush1.bf16.msra.mxu0 %v923
    %1022 = vmatprep.subr.bf16.mxu0 %v928
    %1023 = vmatpush1.bf16.msra.mxu0 %v927
    %1024 = vmatprep.subr.bf16.mxu0 %v932
    %1025 = vmatpush1.bf16.msra.mxu0 %v931
    %1026 = vmatprep.subr.bf16.mxu0 %v936
    %1027 = vmatpush1.bf16.msra.mxu0 %v935
    %1028 = vmatprep.subr.bf16.mxu0 %v940
    %1029 = vmatpush1.bf16.msra.mxu0 %v939
    %1030 = vmatprep.subr.bf16.mxu0 0
    %1031 = vmatpush1.bf16.msra.mxu0 0
    %1032 = vmatprep.subr.bf16.mxu0 0
    %1033 = vmatpush1.bf16.msra.mxu0 0
    %1034 = vmatprep.subr.bf16.mxu0 0
    %1035 = vmatpush1.bf16.msra.mxu0 0
    %1036 = vmatprep.subr.bf16.mxu0 0
    %1037 = vmatpush1.bf16.msra.mxu0 0
    %1038 = vmatprep.subr.bf16.mxu0 0
    %1039 = vmatpush1.bf16.msra.mxu0 0
    %1040 = vmatprep.subr.bf16.mxu0 0
    %1041 = vmatpush1.bf16.msra.mxu0 0
    %1042 = vmatprep.subr.bf16.mxu0 0
    %1043 = vmatpush1.bf16.msra.mxu0 0
    %1044 = vmatprep.subr.bf16.mxu0 0
    %1045 = vmatpush1.bf16.msra.mxu0 0
    %1046 = vmatprep.mubr.bf16.mxu0 0
    %1047 = vmatmul.mubr.bf16.gmra.mrb[0].mxu0 %v756
    %v1048 = vpop.f32.mrb[0].mxu0
    %v1049 = vadd.f32 %v804, %v1048
    %v1050 = vpop.f32.mrb[0].mxu0
    %v1051 = vadd.f32 %v808, %v1050
    %v1052 = vpop.f32.mrb[0].mxu0
    %v1053 = vpop.f32.mrb[0].mxu0
    %1054 = vdwg.mxu0
    %s1055 = scalar_lea.vmem [#allocation5], 256
    %v1056 = vld [vmem:[%s1055] sm:$0xff]
    %v1057 = vld [vmem:[%s1055 + $0x8] sm:$0xff]
    %v1058 = vld [vmem:[%s1055 + $0x10] sm:$0xff]
    %v1059 = vld [vmem:[%s1055 + $0x18] sm:$0xff]
    %v1060 = vld [vmem:[%s1055 + $0x20] sm:$0xff]
    %v1061 = vld [vmem:[%s1055 + $0x28] sm:$0xff]
    %v1062 = vld [vmem:[%s1055 + $0x30] sm:$0xff]
    %v1063 = vld [vmem:[%s1055 + $0x38] sm:$0xff]
    %v1064 = vld [vmem:[%s1055 + $0x40] sm:$0xff]
    %v1065 = vld [vmem:[%s1055 + $0x48] sm:$0xff]
    %v1066 = vld [vmem:[%s1055 + $0x50] sm:$0xff]
    %v1067 = vld [vmem:[%s1055 + $0x58] sm:$0xff]
    %v1068 = vld [vmem:[%s1055 + $0x60] sm:$0xff]
    %v1069 = vld [vmem:[%s1055 + $0x68] sm:$0xff]
    %v1070 = vld [vmem:[%s1055 + $0x70] sm:$0xff]
    %v1071 = vld [vmem:[%s1055 + $0x78] sm:$0xff]
    %v1072 = vld [vmem:[%s1055 + $0x80] sm:$0xff]
    %v1073 = vld [vmem:[%s1055 + $0x88] sm:$0xff]
    %v1074 = vld [vmem:[%s1055 + $0x90] sm:$0xff]
    %v1075 = vld [vmem:[%s1055 + $0x98] sm:$0xff]
    %v1076 = vld [vmem:[%s1055 + $0xa0] sm:$0xff]
    %v1077 = vld [vmem:[%s1055 + $0xa8] sm:$0xff]
    %v1078 = vld [vmem:[%s1055 + $0xb0] sm:$0xff]
    %v1079 = vld [vmem:[%s1055 + $0xb8] sm:$0xff]
    %v1080 = vld [vmem:[%s1055 + $0xc0] sm:$0xff]
    %v1081 = vld [vmem:[%s1055 + $0xc8] sm:$0xff]
    %v1082 = vld [vmem:[%s1055 + $0xd0] sm:$0xff]
    %v1083 = vld [vmem:[%s1055 + $0xd8] sm:$0xff]
    %v1084 = vld [vmem:[%s1055 + $0xe0] sm:$0xff]
    %v1085 = vld [vmem:[%s1055 + $0xe8] sm:$0xff]
    %v1086 = vld [vmem:[%s1055 + $0xf0] sm:$0xff]
    %v1087 = vld [vmem:[%s1055 + $0xf8] sm:$0xff]
    %v1120 = vunpack.c.l.b16 %v1056
    %v1121 = vunpack.c.h.b16 %v1056
    %v1122 = vunpack.c.l.b16 %v1057
    %v1123 = vunpack.c.h.b16 %v1057
    %v1124 = vunpack.c.l.b16 %v1058
    %v1125 = vunpack.c.h.b16 %v1058
    %v1126 = vunpack.c.l.b16 %v1059
    %v1127 = vunpack.c.h.b16 %v1059
    %v1128 = vunpack.c.l.b16 %v1060
    %v1129 = vunpack.c.h.b16 %v1060
    %v1130 = vunpack.c.l.b16 %v1061
    %v1131 = vunpack.c.h.b16 %v1061
    %v1132 = vunpack.c.l.b16 %v1062
    %v1133 = vunpack.c.h.b16 %v1062
    %v1134 = vunpack.c.l.b16 %v1063
    %v1135 = vunpack.c.h.b16 %v1063
    %v1136 = vunpack.c.l.b16 %v1064
    %v1137 = vunpack.c.h.b16 %v1064
    %v1138 = vunpack.c.l.b16 %v1065
    %v1139 = vunpack.c.h.b16 %v1065
    %v1140 = vunpack.c.l.b16 %v1066
    %v1141 = vunpack.c.h.b16 %v1066
    %v1142 = vunpack.c.l.b16 %v1067
    %v1143 = vunpack.c.h.b16 %v1067
    %v1144 = vunpack.c.l.b16 %v1068
    %v1145 = vunpack.c.h.b16 %v1068
    %v1146 = vunpack.c.l.b16 %v1069
    %v1147 = vunpack.c.h.b16 %v1069
    %v1148 = vunpack.c.l.b16 %v1070
    %v1149 = vunpack.c.h.b16 %v1070
    %v1150 = vunpack.c.l.b16 %v1071
    %v1151 = vunpack.c.h.b16 %v1071
    %v1152 = vunpack.c.l.b16 %v1072
    %v1153 = vunpack.c.h.b16 %v1072
    %v1154 = vunpack.c.l.b16 %v1073
    %v1155 = vunpack.c.h.b16 %v1073
    %v1156 = vunpack.c.l.b16 %v1074
    %v1157 = vunpack.c.h.b16 %v1074
    %v1158 = vunpack.c.l.b16 %v1075
    %v1159 = vunpack.c.h.b16 %v1075
    %v1160 = vunpack.c.l.b16 %v1076
    %v1161 = vunpack.c.h.b16 %v1076
    %v1162 = vunpack.c.l.b16 %v1077
    %v1163 = vunpack.c.h.b16 %v1077
    %v1164 = vunpack.c.l.b16 %v1078
    %v1165 = vunpack.c.h.b16 %v1078
    %v1166 = vunpack.c.l.b16 %v1079
    %v1167 = vunpack.c.h.b16 %v1079
    %v1168 = vunpack.c.l.b16 %v1080
    %v1169 = vunpack.c.h.b16 %v1080
    %v1170 = vunpack.c.l.b16 %v1081
    %v1171 = vunpack.c.h.b16 %v1081
    %v1172 = vunpack.c.l.b16 %v1082
    %v1173 = vunpack.c.h.b16 %v1082
    %v1174 = vunpack.c.l.b16 %v1083
    %v1175 = vunpack.c.h.b16 %v1083
    %v1176 = vunpack.c.l.b16 %v1084
    %v1177 = vunpack.c.h.b16 %v1084
    %v1178 = vunpack.c.l.b16 %v1085
    %v1179 = vunpack.c.h.b16 %v1085
    %v1180 = vunpack.c.l.b16 %v1086
    %v1181 = vunpack.c.h.b16 %v1086
    %v1182 = vunpack.c.l.b16 %v1087
    %v1183 = vunpack.c.h.b16 %v1087
    %v1184 = vpack.c.b16 %v1124, %v1120
    %v1185 = vpack.c.b16 %v1125, %v1121
    %v1186 = vpack.c.b16 %v1126, %v1122
    %v1187 = vpack.c.b16 %v1127, %v1123
    %v1188 = vpack.c.b16 %v1132, %v1128
    %v1189 = vpack.c.b16 %v1133, %v1129
    %v1190 = vpack.c.b16 %v1134, %v1130
    %v1191 = vpack.c.b16 %v1135, %v1131
    %v1192 = vpack.c.b16 %v1140, %v1136
    %v1193 = vpack.c.b16 %v1141, %v1137
    %v1194 = vpack.c.b16 %v1142, %v1138
    %v1195 = vpack.c.b16 %v1143, %v1139
    %v1196 = vpack.c.b16 %v1148, %v1144
    %v1197 = vpack.c.b16 %v1149, %v1145
    %v1198 = vpack.c.b16 %v1150, %v1146
    %v1199 = vpack.c.b16 %v1151, %v1147
    %v1200 = vpack.c.b16 %v1156, %v1152
    %v1201 = vpack.c.b16 %v1157, %v1153
    %v1202 = vpack.c.b16 %v1158, %v1154
    %v1203 = vpack.c.b16 %v1159, %v1155
    %v1204 = vpack.c.b16 %v1164, %v1160
    %v1205 = vpack.c.b16 %v1165, %v1161
    %v1206 = vpack.c.b16 %v1166, %v1162
    %v1207 = vpack.c.b16 %v1167, %v1163
    %v1208 = vpack.c.b16 %v1172, %v1168
    %v1209 = vpack.c.b16 %v1173, %v1169
    %v1210 = vpack.c.b16 %v1174, %v1170
    %v1211 = vpack.c.b16 %v1175, %v1171
    %v1212 = vpack.c.b16 %v1180, %v1176
    %v1213 = vpack.c.b16 %v1181, %v1177
    %v1214 = vpack.c.b16 %v1182, %v1178
    %v1215 = vpack.c.b16 %v1183, %v1179
    %1248 = vmatprep.subr.bf16.mxu0 %v1185
    %1249 = vmatpush1.bf16.msra.mxu0 %v1184
    %1250 = vmatprep.subr.bf16.mxu0 %v1189
    %1251 = vmatpush1.bf16.msra.mxu0 %v1188
    %1252 = vmatprep.subr.bf16.mxu0 %v1193
    %1253 = vmatpush1.bf16.msra.mxu0 %v1192
    %1254 = vmatprep.subr.bf16.mxu0 %v1197
    %1255 = vmatpush1.bf16.msra.mxu0 %v1196
    %1256 = vmatprep.subr.bf16.mxu0 %v1201
    %1257 = vmatpush1.bf16.msra.mxu0 %v1200
    %1258 = vmatprep.subr.bf16.mxu0 %v1205
    %1259 = vmatpush1.bf16.msra.mxu0 %v1204
    %1260 = vmatprep.subr.bf16.mxu0 %v1209
    %1261 = vmatpush1.bf16.msra.mxu0 %v1208
    %1262 = vmatprep.subr.bf16.mxu0 %v1213
    %1263 = vmatpush1.bf16.msra.mxu0 %v1212
    %1264 = vmatprep.subr.bf16.mxu0 0
    %1265 = vmatpush1.bf16.msra.mxu0 0
    %1266 = vmatprep.subr.bf16.mxu0 0
    %1267 = vmatpush1.bf16.msra.mxu0 0
    %1268 = vmatprep.subr.bf16.mxu0 0
    %1269 = vmatpush1.bf16.msra.mxu0 0
    %1270 = vmatprep.subr.bf16.mxu0 0
    %1271 = vmatpush1.bf16.msra.mxu0 0
    %1272 = vmatprep.subr.bf16.mxu0 0
    %1273 = vmatpush1.bf16.msra.mxu0 0
    %1274 = vmatprep.subr.bf16.mxu0 0
    %1275 = vmatpush1.bf16.msra.mxu0 0
    %1276 = vmatprep.subr.bf16.mxu0 0
    %1277 = vmatpush1.bf16.msra.mxu0 0
    %1278 = vmatprep.subr.bf16.mxu0 0
    %1279 = vmatpush1.bf16.msra.mxu0 0
    %1280 = vmatprep.mubr.bf16.mxu0 0
    %1281 = vmatmul.mubr.bf16.gmra.mrb[0].mxu0 0
    %v1282 = vpop.f32.mrb[0].mxu0
    %v1283 = vadd.f32 0.0, %v1282
    %v1284 = vpop.f32.mrb[0].mxu0
    %v1285 = vadd.f32 0.0, %v1284
    %v1286 = vpop.f32.mrb[0].mxu0
    %v1287 = vpop.f32.mrb[0].mxu0
    %1288 = vdwg.mxu0
    %1289 = vmatprep.subr.bf16.mxu0 %v1187
    %1290 = vmatpush1.bf16.msra.mxu0 %v1186
    %1291 = vmatprep.subr.bf16.mxu0 %v1191
    %1292 = vmatpush1.bf16.msra.mxu0 %v1190
    %1293 = vmatprep.subr.bf16.mxu0 %v1195
    %1294 = vmatpush1.bf16.msra.mxu0 %v1194
    %1295 = vmatprep.subr.bf16.mxu0 %v1199
    %1296 = vmatpush1.bf16.msra.mxu0 %v1198
    %1297 = vmatprep.subr.bf16.mxu0 %v1203
    %1298 = vmatpush1.bf16.msra.mxu0 %v1202
    %1299 = vmatprep.subr.bf16.mxu0 %v1207
    %1300 = vmatpush1.bf16.msra.mxu0 %v1206
    %1301 = vmatprep.subr.bf16.mxu0 %v1211
    %1302 = vmatpush1.bf16.msra.mxu0 %v1210
    %1303 = vmatprep.subr.bf16.mxu0 %v1215
    %1304 = vmatpush1.bf16.msra.mxu0 %v1214
    %1305 = vmatprep.subr.bf16.mxu0 0
    %1306 = vmatpush1.bf16.msra.mxu0 0
    %1307 = vmatprep.subr.bf16.mxu0 0
    %1308 = vmatpush1.bf16.msra.mxu0 0
    %1309 = vmatprep.subr.bf16.mxu0 0
    %1310 = vmatpush1.bf16.msra.mxu0 0
    %1311 = vmatprep.subr.bf16.mxu0 0
    %1312 = vmatpush1.bf16.msra.mxu0 0
    %1313 = vmatprep.subr.bf16.mxu0 0
    %1314 = vmatpush1.bf16.msra.mxu0 0
    %1315 = vmatprep.subr.bf16.mxu0 0
    %1316 = vmatpush1.bf16.msra.mxu0 0
    %1317 = vmatprep.subr.bf16.mxu0 0
    %1318 = vmatpush1.bf16.msra.mxu0 0
    %1319 = vmatprep.subr.bf16.mxu0 0
    %1320 = vmatpush1.bf16.msra.mxu0 0
    %1321 = vmatprep.mubr.bf16.mxu0 0
    %1322 = vmatmul.mubr.bf16.gmra.mrb[0].mxu0 0
    %v1323 = vpop.f32.mrb[0].mxu0
    %v1324 = vadd.f32 0.0, %v1323
    %v1325 = vpop.f32.mrb[0].mxu0
    %v1326 = vadd.f32 0.0, %v1325
    %v1327 = vpop.f32.mrb[0].mxu0
    %v1328 = vpop.f32.mrb[0].mxu0
    %1329 = vdwg.mxu0
    %v1330 = vadd.f32 %v1008, %v1283
    %v1331 = vadd.f32 %v1010, %v1285
    %v1332 = vadd.f32 %v1049, %v1324
    %v1333 = vadd.f32 %v1051, %v1326
    %v1334 = vmul.f32 %v1330, 0.5
    %v1335 = vmul.f32 %v1331, 0.5
    %v1336 = vmul.f32 %v1332, 0.5
    %v1337 = vtanh.pop %v1334
    %v1338 = vtanh.pop %v1335
    %v1339 = vtanh.pop %v1336
    %v1340 = vmul.f32 %v1337, 0.5
    %v1341 = vmul.f32 %v1338, 0.5
    %v1342 = vmul.f32 %v1339, 0.5
    %v1343 = vadd.f32 %v1340, 0.5
    %v1344 = vadd.f32 %v1341, 0.5
    %v1345 = vadd.f32 %v1342, 0.5
    %v1346 = vtanh.pop %v1333
    %v1347 = vmul.f32 %v1344, 0.0
    %v1348 = vmul.f32 %v1343, %v1346
    %v1349 = vadd.f32 %v1347, %v1348
    %v1350 = vtanh.pop %v1349
    %v1351 = vmul.f32 %v1345, %v1350
    %s1352 = scalar_lea.vmem [#allocation2], 32
    %v1353 = vld [vmem:[%s1352] sm:$0xff]
    %v1354 = vld [vmem:[%s1352 + $0x8] sm:$0xff]
    %v1355 = vld [vmem:[%s1352 + $0x10] sm:$0xff]
    %v1356 = vld [vmem:[%s1352 + $0x18] sm:$0xff]
    %1357 = vmatprep.subr.bf16.mxu0 %v589
    %1358 = vmatpush1.bf16.msra.mxu0 %v588
    %1359 = vmatprep.subr.bf16.mxu0 %v593
    %1360 = vmatpush1.bf16.msra.mxu0 %v592
    %1361 = vmatprep.subr.bf16.mxu0 %v597
    %1362 = vmatpush1.bf16.msra.mxu0 %v596
    %1363 = vmatprep.subr.bf16.mxu0 %v601
    %1364 = vmatpush1.bf16.msra.mxu0 %v600
    %1365 = vmatprep.subr.bf16.mxu0 %v605
    %1366 = vmatpush1.bf16.msra.mxu0 %v604
    %1367 = vmatprep.subr.bf16.mxu0 %v609
    %1368 = vmatpush1.bf16.msra.mxu0 %v608
    %1369 = vmatprep.subr.bf16.mxu0 %v613
    %1370 = vmatpush1.bf16.msra.mxu0 %v612
    %1371 = vmatprep.subr.bf16.mxu0 %v617
    %1372 = vmatpush1.bf16.msra.mxu0 %v616
    %1373 = vmatprep.subr.bf16.mxu0 0
    %1374 = vmatpush1.bf16.msra.mxu0 0
    %1375 = vmatprep.subr.bf16.mxu0 0
    %1376 = vmatpush1.bf16.msra.mxu0 0
    %1377 = vmatprep.subr.bf16.mxu0 0
    %1378 = vmatpush1.bf16.msra.mxu0 0
    %1379 = vmatprep.subr.bf16.mxu0 0
    %1380 = vmatpush1.bf16.msra.mxu0 0
    %1381 = vmatprep.subr.bf16.mxu0 0
    %1382 = vmatpush1.bf16.msra.mxu0 0
    %1383 = vmatprep.subr.bf16.mxu0 0
    %1384 = vmatpush1.bf16.msra.mxu0 0
    %1385 = vmatprep.subr.bf16.mxu0 0
    %1386 = vmatpush1.bf16.msra.mxu0 0
    %1387 = vmatprep.subr.bf16.mxu0 0
    %1388 = vmatpush1.bf16.msra.mxu0 0
    %1389 = vmatprep.mubr.bf16.mxu0 0
    %1390 = vmatmul.mubr.bf16.gmra.mrb[0].mxu0 %v756
    %v1391 = vpop.f32.mrb[0].mxu0
    %v1392 = vadd.f32 0.0, %v1391
    %v1393 = vpop.f32.mrb[0].mxu0
    %v1394 = vadd.f32 0.0, %v1393
    %v1395 = vpop.f32.mrb[0].mxu0
    %v1396 = vpop.f32.mrb[0].mxu0
    %1397 = vdwg.mxu0
    %1398 = vmatprep.subr.bf16.mxu0 %v591
    %1399 = vmatpush1.bf16.msra.mxu0 %v590
    %1400 = vmatprep.subr.bf16.mxu0 %v595
    %1401 = vmatpush1.bf16.msra.mxu0 %v594
    %1402 = vmatprep.subr.bf16.mxu0 %v599
    %1403 = vmatpush1.bf16.msra.mxu0 %v598
    %1404 = vmatprep.subr.bf16.mxu0 %v603
    %1405 = vmatpush1.bf16.msra.mxu0 %v602
    %1406 = vmatprep.subr.bf16.mxu0 %v607
    %1407 = vmatpush1.bf16.msra.mxu0 %v606
    %1408 = vmatprep.subr.bf16.mxu0 %v611
    %1409 = vmatpush1.bf16.msra.mxu0 %v610
    %1410 = vmatprep.subr.bf16.mxu0 %v615
    %1411 = vmatpush1.bf16.msra.mxu0 %v614
    %1412 = vmatprep.subr.bf16.mxu0 %v619
    %1413 = vmatpush1.bf16.msra.mxu0 %v618
    %1414 = vmatprep.subr.bf16.mxu0 0
    %1415 = vmatpush1.bf16.msra.mxu0 0
    %1416 = vmatprep.subr.bf16.mxu0 0
    %1417 = vmatpush1.bf16.msra.mxu0 0
    %1418 = vmatprep.subr.bf16.mxu0 0
    %1419 = vmatpush1.bf16.msra.mxu0 0
    %1420 = vmatprep.subr.bf16.mxu0 0
    %1421 = vmatpush1.bf16.msra.mxu0 0
    %1422 = vmatprep.subr.bf16.mxu0 0
    %1423 = vmatpush1.bf16.msra.mxu0 0
    %1424 = vmatprep.subr.bf16.mxu0 0
    %1425 = vmatpush1.bf16.msra.mxu0 0
    %1426 = vmatprep.subr.bf16.mxu0 0
    %1427 = vmatpush1.bf16.msra.mxu0 0
    %1428 = vmatprep.subr.bf16.mxu0 0
    %1429 = vmatpush1.bf16.msra.mxu0 0
    %1430 = vmatprep.mubr.bf16.mxu0 0
    %1431 = vmatmul.mubr.bf16.gmra.mrb[0].mxu0 %v756
    %v1432 = vpop.f32.mrb[0].mxu0
    %v1433 = vadd.f32 0.0, %v1432
    %v1434 = vpop.f32.mrb[0].mxu0
    %v1435 = vadd.f32 0.0, %v1434
    %v1436 = vpop.f32.mrb[0].mxu0
    %v1437 = vpop.f32.mrb[0].mxu0
    %1438 = vdwg.mxu0
    %v1439 = vadd.f32 %v1353, %v1392
    %v1440 = vadd.f32 %v1354, %v1394
    %v1441 = vadd.f32 %v1355, %v1433
    %v1442 = vadd.f32 %v1356, %v1435
    %v1443 = vmul.f32 %v1439, 0.5
    %v1444 = vmul.f32 %v1440, 0.5
    %v1445 = vmul.f32 %v1441, 0.5
    %v1446 = vtanh.pop %v1443
    %v1447 = vtanh.pop %v1444
    %v1448 = vtanh.pop %v1445
    %v1449 = vmul.f32 %v1446, 0.5
    %v1450 = vmul.f32 %v1447, 0.5
    %v1451 = vmul.f32 %v1448, 0.5
    %v1452 = vadd.f32 %v1449, 0.5
    %v1453 = vadd.f32 %v1450, 0.5
    %v1454 = vadd.f32 %v1451, 0.5
    %v1455 = vtanh.pop %v1442
    %v1456 = vmul.f32 %v1453, %v753
    %v1457 = vmul.f32 %v1452, %v1455
    %v1458 = vadd.f32 %v1456, %v1457
    %v1459 = vtanh.pop %v1458
    %v1460 = vmul.f32 %v1454, %v1459
    %v1461 = vpack.c.bf16 %v1460, %v1460
    %1462 = vmatprep.subr.bf16.mxu0 %v910
    %1463 = vmatpush1.bf16.msra.mxu0 %v909
    %1464 = vmatprep.subr.bf16.mxu0 %v914
    %1465 = vmatpush1.bf16.msra.mxu0 %v913
    %1466 = vmatprep.subr.bf16.mxu0 %v918
    %1467 = vmatpush1.bf16.msra.mxu0 %v917
    %1468 = vmatprep.subr.bf16.mxu0 %v922
    %1469 = vmatpush1.bf16.msra.mxu0 %v921
    %1470 = vmatprep.subr.bf16.mxu0 %v926
    %1471 = vmatpush1.bf16.msra.mxu0 %v925
    %1472 = vmatprep.subr.bf16.mxu0 %v930
    %1473 = vmatpush1.bf16.msra.mxu0 %v929
    %1474 = vmatprep.subr.bf16.mxu0 %v934
    %1475 = vmatpush1.bf16.msra.mxu0 %v933
    %1476 = vmatprep.subr.bf16.mxu0 %v938
    %1477 = vmatpush1.bf16.msra.mxu0 %v937
    %1478 = vmatprep.subr.bf16.mxu0 0
    %1479 = vmatpush1.bf16.msra.mxu0 0
    %1480 = vmatprep.subr.bf16.mxu0 0
    %1481 = vmatpush1.bf16.msra.mxu0 0
    %1482 = vmatprep.subr.bf16.mxu0 0
    %1483 = vmatpush1.bf16.msra.mxu0 0
    %1484 = vmatprep.subr.bf16.mxu0 0
    %1485 = vmatpush1.bf16.msra.mxu0 0
    %1486 = vmatprep.subr.bf16.mxu0 0
    %1487 = vmatpush1.bf16.msra.mxu0 0
    %1488 = vmatprep.subr.bf16.mxu0 0
    %1489 = vmatpush1.bf16.msra.mxu0 0
    %1490 = vmatprep.subr.bf16.mxu0 0
    %1491 = vmatpush1.bf16.msra.mxu0 0
    %1492 = vmatprep.subr.bf16.mxu0 0
    %1493 = vmatpush1.bf16.msra.mxu0 0
    %1494 = vmatprep.mubr.bf16.mxu0 0
    %1495 = vmatmul.mubr.bf16.gmra.mrb[0].mxu0 %v1461
    %v1496 = vpop.f32.mrb[0].mxu0
    %v1497 = vadd.f32 %v796, %v1496
    %v1498 = vpop.f32.mrb[0].mxu0
    %v1499 = vadd.f32 %v800, %v1498
    %v1500 = vpop.f32.mrb[0].mxu0
    %v1501 = vpop.f32.mrb[0].mxu0
    %1502 = vdwg.mxu0
    %1503 = vmatprep.subr.bf16.mxu0 %v912
    %1504 = vmatpush1.bf16.msra.mxu0 %v911
    %1505 = vmatprep.subr.bf16.mxu0 %v916
    %1506 = vmatpush1.bf16.msra.mxu0 %v915
    %1507 = vmatprep.subr.bf16.mxu0 %v920
    %1508 = vmatpush1.bf16.msra.mxu0 %v919
    %1509 = vmatprep.subr.bf16.mxu0 %v924
    %1510 = vmatpush1.bf16.msra.mxu0 %v923
    %1511 = vmatprep.subr.bf16.mxu0 %v928
    %1512 = vmatpush1.bf16.msra.mxu0 %v927
    %1513 = vmatprep.subr.bf16.mxu0 %v932
    %1514 = vmatpush1.bf16.msra.mxu0 %v931
    %1515 = vmatprep.subr.bf16.mxu0 %v936
    %1516 = vmatpush1.bf16.msra.mxu0 %v935
    %1517 = vmatprep.subr.bf16.mxu0 %v940
    %1518 = vmatpush1.bf16.msra.mxu0 %v939
    %1519 = vmatprep.subr.bf16.mxu0 0
    %1520 = vmatpush1.bf16.msra.mxu0 0
    %1521 = vmatprep.subr.bf16.mxu0 0
    %1522 = vmatpush1.bf16.msra.mxu0 0
    %1523 = vmatprep.subr.bf16.mxu0 0
    %1524 = vmatpush1.bf16.msra.mxu0 0
    %1525 = vmatprep.subr.bf16.mxu0 0
    %1526 = vmatpush1.bf16.msra.mxu0 0
    %1527 = vmatprep.subr.bf16.mxu0 0
    %1528 = vmatpush1.bf16.msra.mxu0 0
    %1529 = vmatprep.subr.bf16.mxu0 0
    %1530 = vmatpush1.bf16.msra.mxu0 0
    %1531 = vmatprep.subr.bf16.mxu0 0
    %1532 = vmatpush1.bf16.msra.mxu0 0
    %1533 = vmatprep.subr.bf16.mxu0 0
    %1534 = vmatpush1.bf16.msra.mxu0 0
    %1535 = vmatprep.mubr.bf16.mxu0 0
    %1536 = vmatmul.mubr.bf16.gmra.mrb[0].mxu0 %v1461
    %v1537 = vpop.f32.mrb[0].mxu0
    %v1538 = vadd.f32 %v804, %v1537
    %v1539 = vpop.f32.mrb[0].mxu0
    %v1540 = vadd.f32 %v808, %v1539
    %v1541 = vpop.f32.mrb[0].mxu0
    %v1542 = vpop.f32.mrb[0].mxu0
    %1543 = vdwg.mxu0
    %v1544 = vpack.c.bf16 %v1351, %v1351
    %1545 = vmatprep.subr.bf16.mxu0 %v1185
    %1546 = vmatpush1.bf16.msra.mxu0 %v1184
    %1547 = vmatprep.subr.bf16.mxu0 %v1189
    %1548 = vmatpush1.bf16.msra.mxu0 %v1188
    %1549 = vmatprep.subr.bf16.mxu0 %v1193
    %1550 = vmatpush1.bf16.msra.mxu0 %v1192
    %1551 = vmatprep.subr.bf16.mxu0 %v1197
    %1552 = vmatpush1.bf16.msra.mxu0 %v1196
    %1553 = vmatprep.subr.bf16.mxu0 %v1201
    %1554 = vmatpush1.bf16.msra.mxu0 %v1200
    %1555 = vmatprep.subr.bf16.mxu0 %v1205
    %1556 = vmatpush1.bf16.msra.mxu0 %v1204
    %1557 = vmatprep.subr.bf16.mxu0 %v1209
    %1558 = vmatpush1.bf16.msra.mxu0 %v1208
    %1559 = vmatprep.subr.bf16.mxu0 %v1213
    %1560 = vmatpush1.bf16.msra.mxu0 %v1212
    %1561 = vmatprep.subr.bf16.mxu0 0
    %1562 = vmatpush1.bf16.msra.mxu0 0
    %1563 = vmatprep.subr.bf16.mxu0 0
    %1564 = vmatpush1.bf16.msra.mxu0 0
    %1565 = vmatprep.subr.bf16.mxu0 0
    %1566 = vmatpush1.bf16.msra.mxu0 0
    %1567 = vmatprep.subr.bf16.mxu0 0
    %1568 = vmatpush1.bf16.msra.mxu0 0
    %1569 = vmatprep.subr.bf16.mxu0 0
    %1570 = vmatpush1.bf16.msra.mxu0 0
    %1571 = vmatprep.subr.bf16.mxu0 0
    %1572 = vmatpush1.bf16.msra.mxu0 0
    %1573 = vmatprep.subr.bf16.mxu0 0
    %1574 = vmatpush1.bf16.msra.mxu0 0
    %1575 = vmatprep.subr.bf16.mxu0 0
    %1576 = vmatpush1.bf16.msra.mxu0 0
    %1577 = vmatprep.mubr.bf16.mxu0 0
    %1578 = vmatmul.mubr.bf16.gmra.mrb[0].mxu0 %v1544
    %v1579 = vpop.f32.mrb[0].mxu0
    %v1580 = vadd.f32 0.0, %v1579
    %v1581 = vpop.f32.mrb[0].mxu0
    %v1582 = vadd.f32 0.0, %v1581
    %v1583 = vpop.f32.mrb[0].mxu0
    %v1584 = vpop.f32.mrb[0].mxu0
    %1585 = vdwg.mxu0
    %1586 = vmatprep.subr.bf16.mxu0 %v1187
    %1587 = vmatpush1.bf16.msra.mxu0 %v1186
    %1588 = vmatprep.subr.bf16.mxu0 %v1191
    %1589 = vmatpush1.bf16.msra.mxu0 %v1190
    %1590 = vmatprep.subr.bf16.mxu0 %v1195
    %1591 = vmatpush1.bf16.msra.mxu0 %v1194
    %1592 = vmatprep.subr.bf16.mxu0 %v1199
    %1593 = vmatpush1.bf16.msra.mxu0 %v1198
    %1594 = vmatprep.subr.bf16.mxu0 %v1203
    %1595 = vmatpush1.bf16.msra.mxu0 %v1202
    %1596 = vmatprep.subr.bf16.mxu0 %v1207
    %1597 = vmatpush1.bf16.msra.mxu0 %v1206
    %1598 = vmatprep.subr.bf16.mxu0 %v1211
    %1599 = vmatpush1.bf16.msra.mxu0 %v1210
    %1600 = vmatprep.subr.bf16.mxu0 %v1215
    %1601 = vmatpush1.bf16.msra.mxu0 %v1214
    %1602 = vmatprep.subr.bf16.mxu0 0
    %1603 = vmatpush1.bf16.msra.mxu0 0
    %1604 = vmatprep.subr.bf16.mxu0 0
    %1605 = vmatpush1.bf16.msra.mxu0 0
    %1606 = vmatprep.subr.bf16.mxu0 0
    %1607 = vmatpush1.bf16.msra.mxu0 0
    %1608 = vmatprep.subr.bf16.mxu0 0
    %1609 = vmatpush1.bf16.msra.mxu0 0
    %1610 = vmatprep.subr.bf16.mxu0 0
    %1611 = vmatpush1.bf16.msra.mxu0 0
    %1612 = vmatprep.subr.bf16.mxu0 0
    %1613 = vmatpush1.bf16.msra.mxu0 0
    %1614 = vmatprep.subr.bf16.mxu0 0
    %1615 = vmatpush1.bf16.msra.mxu0 0
    %1616 = vmatprep.subr.bf16.mxu0 0
    %1617 = vmatpush1.bf16.msra.mxu0 0
    %1618 = vmatprep.mubr.bf16.mxu0 0
    %1619 = vmatmul.mubr.bf16.gmra.mrb[0].mxu0 %v1544
    %v1620 = vpop.f32.mrb[0].mxu0
    %v1621 = vadd.f32 0.0, %v1620
    %v1622 = vpop.f32.mrb[0].mxu0
    %v1623 = vadd.f32 0.0, %v1622
    %v1624 = vpop.f32.mrb[0].mxu0
    %v1625 = vpop.f32.mrb[0].mxu0
    %1626 = vdwg.mxu0
    %v1627 = vadd.f32 %v1497, %v1580
    %v1628 = vadd.f32 %v1499, %v1582
    %v1629 = vadd.f32 %v1538, %v1621
    %v1630 = vadd.f32 %v1540, %v1623
    %v1631 = vmul.f32 %v1627, 0.5
    %v1632 = vmul.f32 %v1628, 0.5
    %v1633 = vmul.f32 %v1629, 0.5
    %v1634 = vtanh.pop %v1631
    %v1635 = vtanh.pop %v1632
    %v1636 = vtanh.pop %v1633
    %v1637 = vmul.f32 %v1634, 0.5
    %v1638 = vmul.f32 %v1635, 0.5
    %v1639 = vmul.f32 %v1636, 0.5
    %v1640 = vadd.f32 %v1637, 0.5
    %v1641 = vadd.f32 %v1638, 0.5
    %v1642 = vadd.f32 %v1639, 0.5
    %v1643 = vtanh.pop %v1630
    %v1644 = vmul.f32 %v1641, %v1349
    %v1645 = vmul.f32 %v1640, %v1643
    %v1646 = vadd.f32 %v1644, %v1645
    %v1647 = vtanh.pop %v1646
    %v1648 = vmul.f32 %v1642, %v1647
    %s1649 = scalar_lea.vmem [#allocation2], 64
    %v1650 = vld [vmem:[%s1649] sm:$0xff]
    %v1651 = vld [vmem:[%s1649 + $0x8] sm:$0xff]
    %v1652 = vld [vmem:[%s1649 + $0x10] sm:$0xff]
    %v1653 = vld [vmem:[%s1649 + $0x18] sm:$0xff]
    %1654 = vmatprep.subr.bf16.mxu0 %v589
    %1655 = vmatpush1.bf16.msra.mxu0 %v588
    %1656 = vmatprep.subr.bf16.mxu0 %v593
    %1657 = vmatpush1.bf16.msra.mxu0 %v592
    %1658 = vmatprep.subr.bf16.mxu0 %v597
    %1659 = vmatpush1.bf16.msra.mxu0 %v596
    %1660 = vmatprep.subr.bf16.mxu0 %v601
    %1661 = vmatpush1.bf16.msra.mxu0 %v600
    %1662 = vmatprep.subr.bf16.mxu0 %v605
    %1663 = vmatpush1.bf16.msra.mxu0 %v604
    %1664 = vmatprep.subr.bf16.mxu0 %v609
    %1665 = vmatpush1.bf16.msra.mxu0 %v608
    %1666 = vmatprep.subr.bf16.mxu0 %v613
    %1667 = vmatpush1.bf16.msra.mxu0 %v612
    %1668 = vmatprep.subr.bf16.mxu0 %v617
    %1669 = vmatpush1.bf16.msra.mxu0 %v616
    %1670 = vmatprep.subr.bf16.mxu0 0
    %1671 = vmatpush1.bf16.msra.mxu0 0
    %1672 = vmatprep.subr.bf16.mxu0 0
    %1673 = vmatpush1.bf16.msra.mxu0 0
    %1674 = vmatprep.subr.bf16.mxu0 0
    %1675 = vmatpush1.bf16.msra.mxu0 0
    %1676 = vmatprep.subr.bf16.mxu0 0
    %1677 = vmatpush1.bf16.msra.mxu0 0
    %1678 = vmatprep.subr.bf16.mxu0 0
    %1679 = vmatpush1.bf16.msra.mxu0 0
    %1680 = vmatprep.subr.bf16.mxu0 0
    %1681 = vmatpush1.bf16.msra.mxu0 0
    %1682 = vmatprep.subr.bf16.mxu0 0
    %1683 = vmatpush1.bf16.msra.mxu0 0
    %1684 = vmatprep.subr.bf16.mxu0 0
    %1685 = vmatpush1.bf16.msra.mxu0 0
    %1686 = vmatprep.mubr.bf16.mxu0 0
    %1687 = vmatmul.mubr.bf16.gmra.mrb[0].mxu0 %v1461
    %v1688 = vpop.f32.mrb[0].mxu0
    %v1689 = vadd.f32 0.0, %v1688
    %v1690 = vpop.f32.mrb[0].mxu0
    %v1691 = vadd.f32 0.0, %v1690
    %v1692 = vpop.f32.mrb[0].mxu0
    %v1693 = vpop.f32.mrb[0].mxu0
    %1694 = vdwg.mxu0
    %1695 = vmatprep.subr.bf16.mxu0 %v591
    %1696 = vmatpush1.bf16.msra.mxu0 %v590
    %1697 = vmatprep.subr.bf16.mxu0 %v595
    %1698 = vmatpush1.bf16.msra.mxu0 %v594
    %1699 = vmatprep.subr.bf16.mxu0 %v599
    %1700 = vmatpush1.bf16.msra.mxu0 %v598
    %1701 = vmatprep.subr.bf16.mxu0 %v603
    %1702 = vmatpush1.bf16.msra.mxu0 %v602
    %1703 = vmatprep.subr.bf16.mxu0 %v607
    %1704 = vmatpush1.bf16.msra.mxu0 %v606
    %1705 = vmatprep.subr.bf16.mxu0 %v611
    %1706 = vmatpush1.bf16.msra.mxu0 %v610
    %1707 = vmatprep.subr.bf16.mxu0 %v615
    %1708 = vmatpush1.bf16.msra.mxu0 %v614
    %1709 = vmatprep.subr.bf16.mxu0 %v619
    %1710 = vmatpush1.bf16.msra.mxu0 %v618
    %1711 = vmatprep.subr.bf16.mxu0 0
    %1712 = vmatpush1.bf16.msra.mxu0 0
    %1713 = vmatprep.subr.bf16.mxu0 0
    %1714 = vmatpush1.bf16.msra.mxu0 0
    %1715 = vmatprep.subr.bf16.mxu0 0
    %1716 = vmatpush1.bf16.msra.mxu0 0
    %1717 = vmatprep.subr.bf16.mxu0 0
    %1718 = vmatpush1.bf16.msra.mxu0 0
    %1719 = vmatprep.subr.bf16.mxu0 0
    %1720 = vmatpush1.bf16.msra.mxu0 0
    %1721 = vmatprep.subr.bf16.mxu0 0
    %1722 = vmatpush1.bf16.msra.mxu0 0
    %1723 = vmatprep.subr.bf16.mxu0 0
    %1724 = vmatpush1.bf16.msra.mxu0 0
    %1725 = vmatprep.subr.bf16.mxu0 0
    %1726 = vmatpush1.bf16.msra.mxu0 0
    %1727 = vmatprep.mubr.bf16.mxu0 0
    %1728 = vmatmul.mubr.bf16.gmra.mrb[0].mxu0 %v1461
    %v1729 = vpop.f32.mrb[0].mxu0
    %v1730 = vadd.f32 0.0, %v1729
    %v1731 = vpop.f32.mrb[0].mxu0
    %v1732 = vadd.f32 0.0, %v1731
    %v1733 = vpop.f32.mrb[0].mxu0
    %v1734 = vpop.f32.mrb[0].mxu0
    %1735 = vdwg.mxu0
    %v1736 = vadd.f32 %v1650, %v1689
    %v1737 = vadd.f32 %v1651, %v1691
    %v1738 = vadd.f32 %v1652, %v1730
    %v1739 = vadd.f32 %v1653, %v1732
    %v1740 = vmul.f32 %v1736, 0.5
    %v1741 = vmul.f32 %v1737, 0.5
    %v1742 = vmul.f32 %v1738, 0.5
    %v1743 = vtanh.pop %v1740
    %v1744 = vtanh.pop %v1741
    %v1745 = vtanh.pop %v1742
    %v1746 = vmul.f32 %v1743, 0.5
    %v1747 = vmul.f32 %v1744, 0.5
    %v1748 = vmul.f32 %v1745, 0.5
    %v1749 = vadd.f32 %v1746, 0.5
    %v1750 = vadd.f32 %v1747, 0.5
    %v1751 = vadd.f32 %v1748, 0.5
    %v1752 = vtanh.pop %v1739
    %v1753 = vmul.f32 %v1750, %v1458
    %v1754 = vmul.f32 %v1749, %v1752
    %v1755 = vadd.f32 %v1753, %v1754
    %v1756 = vtanh.pop %v1755
    %v1757 = vmul.f32 %v1751, %v1756
    %v1758 = vpack.c.bf16 %v1757, %v1757
    %1759 = vmatprep.subr.bf16.mxu0 %v910
    %1760 = vmatpush1.bf16.msra.mxu0 %v909
    %1761 = vmatprep.subr.bf16.mxu0 %v914
    %1762 = vmatpush1.bf16.msra.mxu0 %v913
    %1763 = vmatprep.subr.bf16.mxu0 %v918
    %1764 = vmatpush1.bf16.msra.mxu0 %v917
    %1765 = vmatprep.subr.bf16.mxu0 %v922
    %1766 = vmatpush1.bf16.msra.mxu0 %v921
    %1767 = vmatprep.subr.bf16.mxu0 %v926
    %1768 = vmatpush1.bf16.msra.mxu0 %v925
    %1769 = vmatprep.subr.bf16.mxu0 %v930
    %1770 = vmatpush1.bf16.msra.mxu0 %v929
    %1771 = vmatprep.subr.bf16.mxu0 %v934
    %1772 = vmatpush1.bf16.msra.mxu0 %v933
    %1773 = vmatprep.subr.bf16.mxu0 %v938
    %1774 = vmatpush1.bf16.msra.mxu0 %v937
    %1775 = vmatprep.subr.bf16.mxu0 0
    %1776 = vmatpush1.bf16.msra.mxu0 0
    %1777 = vmatprep.subr.bf16.mxu0 0
    %1778 = vmatpush1.bf16.msra.mxu0 0
    %1779 = vmatprep.subr.bf16.mxu0 0
    %1780 = vmatpush1.bf16.msra.mxu0 0
    %1781 = vmatprep.subr.bf16.mxu0 0
    %1782 = vmatpush1.bf16.msra.mxu0 0
    %1783 = vmatprep.subr.bf16.mxu0 0
    %1784 = vmatpush1.bf16.msra.mxu0 0
    %1785 = vmatprep.subr.bf16.mxu0 0
    %1786 = vmatpush1.bf16.msra.mxu0 0
    %1787 = vmatprep.subr.bf16.mxu0 0
    %1788 = vmatpush1.bf16.msra.mxu0 0
    %1789 = vmatprep.subr.bf16.mxu0 0
    %1790 = vmatpush1.bf16.msra.mxu0 0
    %1791 = vmatprep.mubr.bf16.mxu0 0
    %1792 = vmatmul.mubr.bf16.gmra.mrb[0].mxu0 %v1758
    %v1793 = vpop.f32.mrb[0].mxu0
    %v1794 = vadd.f32 %v796, %v1793
    %v1795 = vpop.f32.mrb[0].mxu0
    %v1796 = vadd.f32 %v800, %v1795
    %v1797 = vpop.f32.mrb[0].mxu0
    %v1798 = vpop.f32.mrb[0].mxu0
    %1799 = vdwg.mxu0
    %1800 = vmatprep.subr.bf16.mxu0 %v912
    %1801 = vmatpush1.bf16.msra.mxu0 %v911
    %1802 = vmatprep.subr.bf16.mxu0 %v916
    %1803 = vmatpush1.bf16.msra.mxu0 %v915
    %1804 = vmatprep.subr.bf16.mxu0 %v920
    %1805 = vmatpush1.bf16.msra.mxu0 %v919
    %1806 = vmatprep.subr.bf16.mxu0 %v924
    %1807 = vmatpush1.bf16.msra.mxu0 %v923
    %1808 = vmatprep.subr.bf16.mxu0 %v928
    %1809 = vmatpush1.bf16.msra.mxu0 %v927
    %1810 = vmatprep.subr.bf16.mxu0 %v932
    %1811 = vmatpush1.bf16.msra.mxu0 %v931
    %1812 = vmatprep.subr.bf16.mxu0 %v936
    %1813 = vmatpush1.bf16.msra.mxu0 %v935
    %1814 = vmatprep.subr.bf16.mxu0 %v940
    %1815 = vmatpush1.bf16.msra.mxu0 %v939
    %1816 = vmatprep.subr.bf16.mxu0 0
    %1817 = vmatpush1.bf16.msra.mxu0 0
    %1818 = vmatprep.subr.bf16.mxu0 0
    %1819 = vmatpush1.bf16.msra.mxu0 0
    %1820 = vmatprep.subr.bf16.mxu0 0
    %1821 = vmatpush1.bf16.msra.mxu0 0
    %1822 = vmatprep.subr.bf16.mxu0 0
    %1823 = vmatpush1.bf16.msra.mxu0 0
    %1824 = vmatprep.subr.bf16.mxu0 0
    %1825 = vmatpush1.bf16.msra.mxu0 0
    %1826 = vmatprep.subr.bf16.mxu0 0
    %1827 = vmatpush1.bf16.msra.mxu0 0
    %1828 = vmatprep.subr.bf16.mxu0 0
    %1829 = vmatpush1.bf16.msra.mxu0 0
    %1830 = vmatprep.subr.bf16.mxu0 0
    %1831 = vmatpush1.bf16.msra.mxu0 0
    %1832 = vmatprep.mubr.bf16.mxu0 0
    %1833 = vmatmul.mubr.bf16.gmra.mrb[0].mxu0 %v1758
    %v1834 = vpop.f32.mrb[0].mxu0
    %v1835 = vadd.f32 %v804, %v1834
    %v1836 = vpop.f32.mrb[0].mxu0
    %v1837 = vadd.f32 %v808, %v1836
    %v1838 = vpop.f32.mrb[0].mxu0
    %v1839 = vpop.f32.mrb[0].mxu0
    %1840 = vdwg.mxu0
    %v1841 = vpack.c.bf16 %v1648, %v1648
    %1842 = vmatprep.subr.bf16.mxu0 %v1185
    %1843 = vmatpush1.bf16.msra.mxu0 %v1184
    %1844 = vmatprep.subr.bf16.mxu0 %v1189
    %1845 = vmatpush1.bf16.msra.mxu0 %v1188
    %1846 = vmatprep.subr.bf16.mxu0 %v1193
    %1847 = vmatpush1.bf16.msra.mxu0 %v1192
    %1848 = vmatprep.subr.bf16.mxu0 %v1197
    %1849 = vmatpush1.bf16.msra.mxu0 %v1196
    %1850 = vmatprep.subr.bf16.mxu0 %v1201
    %1851 = vmatpush1.bf16.msra.mxu0 %v1200
    %1852 = vmatprep.subr.bf16.mxu0 %v1205
    %1853 = vmatpush1.bf16.msra.mxu0 %v1204
    %1854 = vmatprep.subr.bf16.mxu0 %v1209
    %1855 = vmatpush1.bf16.msra.mxu0 %v1208
    %1856 = vmatprep.subr.bf16.mxu0 %v1213
    %1857 = vmatpush1.bf16.msra.mxu0 %v1212
    %1858 = vmatprep.subr.bf16.mxu0 0
    %1859 = vmatpush1.bf16.msra.mxu0 0
    %1860 = vmatprep.subr.bf16.mxu0 0
    %1861 = vmatpush1.bf16.msra.mxu0 0
    %1862 = vmatprep.subr.bf16.mxu0 0
    %1863 = vmatpush1.bf16.msra.mxu0 0
    %1864 = vmatprep.subr.bf16.mxu0 0
    %1865 = vmatpush1.bf16.msra.mxu0 0
    %1866 = vmatprep.subr.bf16.mxu0 0
    %1867 = vmatpush1.bf16.msra.mxu0 0
    %1868 = vmatprep.subr.bf16.mxu0 0
    %1869 = vmatpush1.bf16.msra.mxu0 0
    %1870 = vmatprep.subr.bf16.mxu0 0
    %1871 = vmatpush1.bf16.msra.mxu0 0
    %1872 = vmatprep.subr.bf16.mxu0 0
    %1873 = vmatpush1.bf16.msra.mxu0 0
    %1874 = vmatprep.mubr.bf16.mxu0 0
    %1875 = vmatmul.mubr.bf16.gmra.mrb[0].mxu0 %v1841
    %v1876 = vpop.f32.mrb[0].mxu0
    %v1877 = vadd.f32 0.0, %v1876
    %v1878 = vpop.f32.mrb[0].mxu0
    %v1879 = vadd.f32 0.0, %v1878
    %v1880 = vpop.f32.mrb[0].mxu0
    %v1881 = vpop.f32.mrb[0].mxu0
    %1882 = vdwg.mxu0
    %1883 = vmatprep.subr.bf16.mxu0 %v1187
    %1884 = vmatpush1.bf16.msra.mxu0 %v1186
    %1885 = vmatprep.subr.bf16.mxu0 %v1191
    %1886 = vmatpush1.bf16.msra.mxu0 %v1190
    %1887 = vmatprep.subr.bf16.mxu0 %v1195
    %1888 = vmatpush1.bf16.msra.mxu0 %v1194
    %1889 = vmatprep.subr.bf16.mxu0 %v1199
    %1890 = vmatpush1.bf16.msra.mxu0 %v1198
    %1891 = vmatprep.subr.bf16.mxu0 %v1203
    %1892 = vmatpush1.bf16.msra.mxu0 %v1202
    %1893 = vmatprep.subr.bf16.mxu0 %v1207
    %1894 = vmatpush1.bf16.msra.mxu0 %v1206
    %1895 = vmatprep.subr.bf16.mxu0 %v1211
    %1896 = vmatpush1.bf16.msra.mxu0 %v1210
    %1897 = vmatprep.subr.bf16.mxu0 %v1215
    %1898 = vmatpush1.bf16.msra.mxu0 %v1214
    %1899 = vmatprep.subr.bf16.mxu0 0
    %1900 = vmatpush1.bf16.msra.mxu0 0
    %1901 = vmatprep.subr.bf16.mxu0 0
    %1902 = vmatpush1.bf16.msra.mxu0 0
    %1903 = vmatprep.subr.bf16.mxu0 0
    %1904 = vmatpush1.bf16.msra.mxu0 0
    %1905 = vmatprep.subr.bf16.mxu0 0
    %1906 = vmatpush1.bf16.msra.mxu0 0
    %1907 = vmatprep.subr.bf16.mxu0 0
    %1908 = vmatpush1.bf16.msra.mxu0 0
    %1909 = vmatprep.subr.bf16.mxu0 0
    %1910 = vmatpush1.bf16.msra.mxu0 0
    %1911 = vmatprep.subr.bf16.mxu0 0
    %1912 = vmatpush1.bf16.msra.mxu0 0
    %1913 = vmatprep.subr.bf16.mxu0 0
    %1914 = vmatpush1.bf16.msra.mxu0 0
    %1915 = vmatprep.mubr.bf16.mxu0 0
    %1916 = vmatmul.mubr.bf16.gmra.mrb[0].mxu0 %v1841
    %v1917 = vpop.f32.mrb[0].mxu0
    %v1918 = vadd.f32 0.0, %v1917
    %v1919 = vpop.f32.mrb[0].mxu0
    %v1920 = vadd.f32 0.0, %v1919
    %v1921 = vpop.f32.mrb[0].mxu0
    %v1922 = vpop.f32.mrb[0].mxu0
    %1923 = vdwg.mxu0
    %v1924 = vadd.f32 %v1794, %v1877
    %v1925 = vadd.f32 %v1796, %v1879
    %v1926 = vadd.f32 %v1835, %v1918
    %v1927 = vadd.f32 %v1837, %v1920
    %v1928 = vmul.f32 %v1924, 0.5
    %v1929 = vmul.f32 %v1925, 0.5
    %v1930 = vmul.f32 %v1926, 0.5
    %v1931 = vtanh.pop %v1928
    %v1932 = vtanh.pop %v1929
    %v1933 = vtanh.pop %v1930
    %v1934 = vmul.f32 %v1931, 0.5
    %v1935 = vmul.f32 %v1932, 0.5
    %v1936 = vmul.f32 %v1933, 0.5
    %v1937 = vadd.f32 %v1934, 0.5
    %v1938 = vadd.f32 %v1935, 0.5
    %v1939 = vadd.f32 %v1936, 0.5
    %v1940 = vtanh.pop %v1927
    %v1941 = vmul.f32 %v1938, %v1646
    %v1942 = vmul.f32 %v1937, %v1940
    %v1943 = vadd.f32 %v1941, %v1942
    %v1944 = vtanh.pop %v1943
    %v1945 = vmul.f32 %v1939, %v1944
    %s1946 = scalar_lea.vmem [#allocation2], 96
    %v1947 = vld [vmem:[%s1946] sm:$0xff]
    %v1948 = vld [vmem:[%s1946 + $0x8] sm:$0xff]
    %v1949 = vld [vmem:[%s1946 + $0x10] sm:$0xff]
    %v1950 = vld [vmem:[%s1946 + $0x18] sm:$0xff]
    %1951 = vmatprep.subr.bf16.mxu0 %v589
    %1952 = vmatpush1.bf16.msra.mxu0 %v588
    %1953 = vmatprep.subr.bf16.mxu0 %v593
    %1954 = vmatpush1.bf16.msra.mxu0 %v592
    %1955 = vmatprep.subr.bf16.mxu0 %v597
    %1956 = vmatpush1.bf16.msra.mxu0 %v596
    %1957 = vmatprep.subr.bf16.mxu0 %v601
    %1958 = vmatpush1.bf16.msra.mxu0 %v600
    %1959 = vmatprep.subr.bf16.mxu0 %v605
    %1960 = vmatpush1.bf16.msra.mxu0 %v604
    %1961 = vmatprep.subr.bf16.mxu0 %v609
    %1962 = vmatpush1.bf16.msra.mxu0 %v608
    %1963 = vmatprep.subr.bf16.mxu0 %v613
    %1964 = vmatpush1.bf16.msra.mxu0 %v612
    %1965 = vmatprep.subr.bf16.mxu0 %v617
    %1966 = vmatpush1.bf16.msra.mxu0 %v616
    %1967 = vmatprep.subr.bf16.mxu0 0
    %1968 = vmatpush1.bf16.msra.mxu0 0
    %1969 = vmatprep.subr.bf16.mxu0 0
    %1970 = vmatpush1.bf16.msra.mxu0 0
    %1971 = vmatprep.subr.bf16.mxu0 0
    %1972 = vmatpush1.bf16.msra.mxu0 0
    %1973 = vmatprep.subr.bf16.mxu0 0
    %1974 = vmatpush1.bf16.msra.mxu0 0
    %1975 = vmatprep.subr.bf16.mxu0 0
    %1976 = vmatpush1.bf16.msra.mxu0 0
    %1977 = vmatprep.subr.bf16.mxu0 0
    %1978 = vmatpush1.bf16.msra.mxu0 0
    %1979 = vmatprep.subr.bf16.mxu0 0
    %1980 = vmatpush1.bf16.msra.mxu0 0
    %1981 = vmatprep.subr.bf16.mxu0 0
    %1982 = vmatpush1.bf16.msra.mxu0 0
    %1983 = vmatprep.mubr.bf16.mxu0 0
    %1984 = vmatmul.mubr.bf16.gmra.mrb[0].mxu0 %v1758
    %v1985 = vpop.f32.mrb[0].mxu0
    %v1986 = vadd.f32 0.0, %v1985
    %v1987 = vpop.f32.mrb[0].mxu0
    %v1988 = vadd.f32 0.0, %v1987
    %v1989 = vpop.f32.mrb[0].mxu0
    %v1990 = vpop.f32.mrb[0].mxu0
    %1991 = vdwg.mxu0
    %1992 = vmatprep.subr.bf16.mxu0 %v591
    %1993 = vmatpush1.bf16.msra.mxu0 %v590
    %1994 = vmatprep.subr.bf16.mxu0 %v595
    %1995 = vmatpush1.bf16.msra.mxu0 %v594
    %1996 = vmatprep.subr.bf16.mxu0 %v599
    %1997 = vmatpush1.bf16.msra.mxu0 %v598
    %1998 = vmatprep.subr.bf16.mxu0 %v603
    %1999 = vmatpush1.bf16.msra.mxu0 %v602
    %2000 = vmatprep.subr.bf16.mxu0 %v607
    %2001 = vmatpush1.bf16.msra.mxu0 %v606
    %2002 = vmatprep.subr.bf16.mxu0 %v611
    %2003 = vmatpush1.bf16.msra.mxu0 %v610
    %2004 = vmatprep.subr.bf16.mxu0 %v615
    %2005 = vmatpush1.bf16.msra.mxu0 %v614
    %2006 = vmatprep.subr.bf16.mxu0 %v619
    %2007 = vmatpush1.bf16.msra.mxu0 %v618
    %2008 = vmatprep.subr.bf16.mxu0 0
    %2009 = vmatpush1.bf16.msra.mxu0 0
    %2010 = vmatprep.subr.bf16.mxu0 0
    %2011 = vmatpush1.bf16.msra.mxu0 0
    %2012 = vmatprep.subr.bf16.mxu0 0
    %2013 = vmatpush1.bf16.msra.mxu0 0
    %2014 = vmatprep.subr.bf16.mxu0 0
    %2015 = vmatpush1.bf16.msra.mxu0 0
    %2016 = vmatprep.subr.bf16.mxu0 0
    %2017 = vmatpush1.bf16.msra.mxu0 0
    %2018 = vmatprep.subr.bf16.mxu0 0
    %2019 = vmatpush1.bf16.msra.mxu0 0
    %2020 = vmatprep.subr.bf16.mxu0 0
    %2021 = vmatpush1.bf16.msra.mxu0 0
    %2022 = vmatprep.subr.bf16.mxu0 0
    %2023 = vmatpush1.bf16.msra.mxu0 0
    %2024 = vmatprep.mubr.bf16.mxu0 0
    %2025 = vmatmul.mubr.bf16.gmra.mrb[0].mxu0 %v1758
    %v2026 = vpop.f32.mrb[0].mxu0
    %v2027 = vadd.f32 0.0, %v2026
    %v2028 = vpop.f32.mrb[0].mxu0
    %v2029 = vadd.f32 0.0, %v2028
    %v2030 = vpop.f32.mrb[0].mxu0
    %v2031 = vpop.f32.mrb[0].mxu0
    %2032 = vdwg.mxu0
    %v2033 = vadd.f32 %v1947, %v1986
    %v2034 = vadd.f32 %v1948, %v1988
    %v2035 = vadd.f32 %v1949, %v2027
    %v2036 = vadd.f32 %v1950, %v2029
    %v2037 = vmul.f32 %v2033, 0.5
    %v2038 = vmul.f32 %v2034, 0.5
    %v2039 = vmul.f32 %v2035, 0.5
    %v2040 = vtanh.pop %v2037
    %v2041 = vtanh.pop %v2038
    %v2042 = vtanh.pop %v2039
    %v2043 = vmul.f32 %v2040, 0.5
    %v2044 = vmul.f32 %v2041, 0.5
    %v2045 = vmul.f32 %v2042, 0.5
    %v2046 = vadd.f32 %v2043, 0.5
    %v2047 = vadd.f32 %v2044, 0.5
    %v2048 = vadd.f32 %v2045, 0.5
    %v2049 = vtanh.pop %v2036
    %v2050 = vmul.f32 %v2047, %v1755
    %v2051 = vmul.f32 %v2046, %v2049
    %v2052 = vadd.f32 %v2050, %v2051
    %v2053 = vtanh.pop %v2052
    %v2054 = vmul.f32 %v2048, %v2053
    %v2055 = vpack.c.bf16 %v2054, %v2054
    %2056 = vmatprep.subr.bf16.mxu0 %v910
    %2057 = vmatpush1.bf16.msra.mxu0 %v909
    %2058 = vmatprep.subr.bf16.mxu0 %v914
    %2059 = vmatpush1.bf16.msra.mxu0 %v913
    %2060 = vmatprep.subr.bf16.mxu0 %v918
    %2061 = vmatpush1.bf16.msra.mxu0 %v917
    %2062 = vmatprep.subr.bf16.mxu0 %v922
    %2063 = vmatpush1.bf16.msra.mxu0 %v921
    %2064 = vmatprep.subr.bf16.mxu0 %v926
    %2065 = vmatpush1.bf16.msra.mxu0 %v925
    %2066 = vmatprep.subr.bf16.mxu0 %v930
    %2067 = vmatpush1.bf16.msra.mxu0 %v929
    %2068 = vmatprep.subr.bf16.mxu0 %v934
    %2069 = vmatpush1.bf16.msra.mxu0 %v933
    %2070 = vmatprep.subr.bf16.mxu0 %v938
    %2071 = vmatpush1.bf16.msra.mxu0 %v937
    %2072 = vmatprep.subr.bf16.mxu0 0
    %2073 = vmatpush1.bf16.msra.mxu0 0
    %2074 = vmatprep.subr.bf16.mxu0 0
    %2075 = vmatpush1.bf16.msra.mxu0 0
    %2076 = vmatprep.subr.bf16.mxu0 0
    %2077 = vmatpush1.bf16.msra.mxu0 0
    %2078 = vmatprep.subr.bf16.mxu0 0
    %2079 = vmatpush1.bf16.msra.mxu0 0
    %2080 = vmatprep.subr.bf16.mxu0 0
    %2081 = vmatpush1.bf16.msra.mxu0 0
    %2082 = vmatprep.subr.bf16.mxu0 0
    %2083 = vmatpush1.bf16.msra.mxu0 0
    %2084 = vmatprep.subr.bf16.mxu0 0
    %2085 = vmatpush1.bf16.msra.mxu0 0
    %2086 = vmatprep.subr.bf16.mxu0 0
    %2087 = vmatpush1.bf16.msra.mxu0 0
    %2088 = vmatprep.mubr.bf16.mxu0 0
    %2089 = vmatmul.mubr.bf16.gmra.mrb[0].mxu0 %v2055
    %v2090 = vpop.f32.mrb[0].mxu0
    %v2091 = vadd.f32 %v796, %v2090
    %v2092 = vpop.f32.mrb[0].mxu0
    %v2093 = vadd.f32 %v800, %v2092
    %v2094 = vpop.f32.mrb[0].mxu0
    %v2095 = vpop.f32.mrb[0].mxu0
    %2096 = vdwg.mxu0
    %2097 = vmatprep.subr.bf16.mxu0 %v912
    %2098 = vmatpush1.bf16.msra.mxu0 %v911
    %2099 = vmatprep.subr.bf16.mxu0 %v916
    %2100 = vmatpush1.bf16.msra.mxu0 %v915
    %2101 = vmatprep.subr.bf16.mxu0 %v920
    %2102 = vmatpush1.bf16.msra.mxu0 %v919
    %2103 = vmatprep.subr.bf16.mxu0 %v924
    %2104 = vmatpush1.bf16.msra.mxu0 %v923
    %2105 = vmatprep.subr.bf16.mxu0 %v928
    %2106 = vmatpush1.bf16.msra.mxu0 %v927
    %2107 = vmatprep.subr.bf16.mxu0 %v932
    %2108 = vmatpush1.bf16.msra.mxu0 %v931
    %2109 = vmatprep.subr.bf16.mxu0 %v936
    %2110 = vmatpush1.bf16.msra.mxu0 %v935
    %2111 = vmatprep.subr.bf16.mxu0 %v940
    %2112 = vmatpush1.bf16.msra.mxu0 %v939
    %2113 = vmatprep.subr.bf16.mxu0 0
    %2114 = vmatpush1.bf16.msra.mxu0 0
    %2115 = vmatprep.subr.bf16.mxu0 0
    %2116 = vmatpush1.bf16.msra.mxu0 0
    %2117 = vmatprep.subr.bf16.mxu0 0
    %2118 = vmatpush1.bf16.msra.mxu0 0
    %2119 = vmatprep.subr.bf16.mxu0 0
    %2120 = vmatpush1.bf16.msra.mxu0 0
    %2121 = vmatprep.subr.bf16.mxu0 0
    %2122 = vmatpush1.bf16.msra.mxu0 0
    %2123 = vmatprep.subr.bf16.mxu0 0
    %2124 = vmatpush1.bf16.msra.mxu0 0
    %2125 = vmatprep.subr.bf16.mxu0 0
    %2126 = vmatpush1.bf16.msra.mxu0 0
    %2127 = vmatprep.subr.bf16.mxu0 0
    %2128 = vmatpush1.bf16.msra.mxu0 0
    %2129 = vmatprep.mubr.bf16.mxu0 0
    %2130 = vmatmul.mubr.bf16.gmra.mrb[0].mxu0 %v2055
    %v2131 = vpop.f32.mrb[0].mxu0
    %v2132 = vadd.f32 %v804, %v2131
    %v2133 = vpop.f32.mrb[0].mxu0
    %v2134 = vadd.f32 %v808, %v2133
    %v2135 = vpop.f32.mrb[0].mxu0
    %v2136 = vpop.f32.mrb[0].mxu0
    %2137 = vdwg.mxu0
    %v2138 = vpack.c.bf16 %v1945, %v1945
    %2139 = vmatprep.subr.bf16.mxu0 %v1185
    %2140 = vmatpush1.bf16.msra.mxu0 %v1184
    %2141 = vmatprep.subr.bf16.mxu0 %v1189
    %2142 = vmatpush1.bf16.msra.mxu0 %v1188
    %2143 = vmatprep.subr.bf16.mxu0 %v1193
    %2144 = vmatpush1.bf16.msra.mxu0 %v1192
    %2145 = vmatprep.subr.bf16.mxu0 %v1197
    %2146 = vmatpush1.bf16.msra.mxu0 %v1196
    %2147 = vmatprep.subr.bf16.mxu0 %v1201
    %2148 = vmatpush1.bf16.msra.mxu0 %v1200
    %2149 = vmatprep.subr.bf16.mxu0 %v1205
    %2150 = vmatpush1.bf16.msra.mxu0 %v1204
    %2151 = vmatprep.subr.bf16.mxu0 %v1209
    %2152 = vmatpush1.bf16.msra.mxu0 %v1208
    %2153 = vmatprep.subr.bf16.mxu0 %v1213
    %2154 = vmatpush1.bf16.msra.mxu0 %v1212
    %2155 = vmatprep.subr.bf16.mxu0 0
    %2156 = vmatpush1.bf16.msra.mxu0 0
    %2157 = vmatprep.subr.bf16.mxu0 0
    %2158 = vmatpush1.bf16.msra.mxu0 0
    %2159 = vmatprep.subr.bf16.mxu0 0
    %2160 = vmatpush1.bf16.msra.mxu0 0
    %2161 = vmatprep.subr.bf16.mxu0 0
    %2162 = vmatpush1.bf16.msra.mxu0 0
    %2163 = vmatprep.subr.bf16.mxu0 0
    %2164 = vmatpush1.bf16.msra.mxu0 0
    %2165 = vmatprep.subr.bf16.mxu0 0
    %2166 = vmatpush1.bf16.msra.mxu0 0
    %2167 = vmatprep.subr.bf16.mxu0 0
    %2168 = vmatpush1.bf16.msra.mxu0 0
    %2169 = vmatprep.subr.bf16.mxu0 0
    %2170 = vmatpush1.bf16.msra.mxu0 0
    %2171 = vmatprep.mubr.bf16.mxu0 0
    %2172 = vmatmul.mubr.bf16.gmra.mrb[0].mxu0 %v2138
    %v2173 = vpop.f32.mrb[0].mxu0
    %v2174 = vadd.f32 0.0, %v2173
    %v2175 = vpop.f32.mrb[0].mxu0
    %v2176 = vadd.f32 0.0, %v2175
    %v2177 = vpop.f32.mrb[0].mxu0
    %v2178 = vpop.f32.mrb[0].mxu0
    %2179 = vdwg.mxu0
    %2180 = vmatprep.subr.bf16.mxu0 %v1187
    %2181 = vmatpush1.bf16.msra.mxu0 %v1186
    %2182 = vmatprep.subr.bf16.mxu0 %v1191
    %2183 = vmatpush1.bf16.msra.mxu0 %v1190
    %2184 = vmatprep.subr.bf16.mxu0 %v1195
    %2185 = vmatpush1.bf16.msra.mxu0 %v1194
    %2186 = vmatprep.subr.bf16.mxu0 %v1199
    %2187 = vmatpush1.bf16.msra.mxu0 %v1198
    %2188 = vmatprep.subr.bf16.mxu0 %v1203
    %2189 = vmatpush1.bf16.msra.mxu0 %v1202
    %2190 = vmatprep.subr.bf16.mxu0 %v1207
    %2191 = vmatpush1.bf16.msra.mxu0 %v1206
    %2192 = vmatprep.subr.bf16.mxu0 %v1211
    %2193 = vmatpush1.bf16.msra.mxu0 %v1210
    %2194 = vmatprep.subr.bf16.mxu0 %v1215
    %2195 = vmatpush1.bf16.msra.mxu0 %v1214
    %2196 = vmatprep.subr.bf16.mxu0 0
    %2197 = vmatpush1.bf16.msra.mxu0 0
    %2198 = vmatprep.subr.bf16.mxu0 0
    %2199 = vmatpush1.bf16.msra.mxu0 0
    %2200 = vmatprep.subr.bf16.mxu0 0
    %2201 = vmatpush1.bf16.msra.mxu0 0
    %2202 = vmatprep.subr.bf16.mxu0 0
    %2203 = vmatpush1.bf16.msra.mxu0 0
    %2204 = vmatprep.subr.bf16.mxu0 0
    %2205 = vmatpush1.bf16.msra.mxu0 0
    %2206 = vmatprep.subr.bf16.mxu0 0
    %2207 = vmatpush1.bf16.msra.mxu0 0
    %2208 = vmatprep.subr.bf16.mxu0 0
    %2209 = vmatpush1.bf16.msra.mxu0 0
    %2210 = vmatprep.subr.bf16.mxu0 0
    %2211 = vmatpush1.bf16.msra.mxu0 0
    %2212 = vmatprep.mubr.bf16.mxu0 0
    %2213 = vmatmul.mubr.bf16.gmra.mrb[0].mxu0 %v2138
    %v2214 = vpop.f32.mrb[0].mxu0
    %v2215 = vadd.f32 0.0, %v2214
    %v2216 = vpop.f32.mrb[0].mxu0
    %v2217 = vadd.f32 0.0, %v2216
    %v2218 = vpop.f32.mrb[0].mxu0
    %v2219 = vpop.f32.mrb[0].mxu0
    %2220 = vdwg.mxu0
    %v2221 = vadd.f32 %v2091, %v2174
    %v2222 = vadd.f32 %v2093, %v2176
    %v2223 = vadd.f32 %v2132, %v2215
    %v2224 = vadd.f32 %v2134, %v2217
    %v2225 = vmul.f32 %v2221, 0.5
    %v2226 = vmul.f32 %v2222, 0.5
    %v2227 = vmul.f32 %v2223, 0.5
    %v2228 = vtanh.pop %v2225
    %v2229 = vtanh.pop %v2226
    %v2230 = vtanh.pop %v2227
    %v2231 = vmul.f32 %v2228, 0.5
    %v2232 = vmul.f32 %v2229, 0.5
    %v2233 = vmul.f32 %v2230, 0.5
    %v2234 = vadd.f32 %v2231, 0.5
    %v2235 = vadd.f32 %v2232, 0.5
    %v2236 = vadd.f32 %v2233, 0.5
    %v2237 = vtanh.pop %v2224
    %v2238 = vmul.f32 %v2235, %v1943
    %v2239 = vmul.f32 %v2234, %v2237
    %v2240 = vadd.f32 %v2238, %v2239
    %v2241 = vtanh.pop %v2240
    %v2242 = vmul.f32 %v2236, %v2241
    %s2243 = scalar_lea.vmem [#allocation2], 128
    %v2244 = vld [vmem:[%s2243] sm:$0xff]
    %v2245 = vld [vmem:[%s2243 + $0x8] sm:$0xff]
    %v2246 = vld [vmem:[%s2243 + $0x10] sm:$0xff]
    %v2247 = vld [vmem:[%s2243 + $0x18] sm:$0xff]
    %2248 = vmatprep.subr.bf16.mxu0 %v589
    %2249 = vmatpush1.bf16.msra.mxu0 %v588
    %2250 = vmatprep.subr.bf16.mxu0 %v593
    %2251 = vmatpush1.bf16.msra.mxu0 %v592
    %2252 = vmatprep.subr.bf16.mxu0 %v597
    %2253 = vmatpush1.bf16.msra.mxu0 %v596
    %2254 = vmatprep.subr.bf16.mxu0 %v601
    %2255 = vmatpush1.bf16.msra.mxu0 %v600
    %2256 = vmatprep.subr.bf16.mxu0 %v605
    %2257 = vmatpush1.bf16.msra.mxu0 %v604
    %2258 = vmatprep.subr.bf16.mxu0 %v609
    %2259 = vmatpush1.bf16.msra.mxu0 %v608
    %2260 = vmatprep.subr.bf16.mxu0 %v613
    %2261 = vmatpush1.bf16.msra.mxu0 %v612
    %2262 = vmatprep.subr.bf16.mxu0 %v617
    %2263 = vmatpush1.bf16.msra.mxu0 %v616
    %2264 = vmatprep.subr.bf16.mxu0 0
    %2265 = vmatpush1.bf16.msra.mxu0 0
    %2266 = vmatprep.subr.bf16.mxu0 0
    %2267 = vmatpush1.bf16.msra.mxu0 0
    %2268 = vmatprep.subr.bf16.mxu0 0
    %2269 = vmatpush1.bf16.msra.mxu0 0
    %2270 = vmatprep.subr.bf16.mxu0 0
    %2271 = vmatpush1.bf16.msra.mxu0 0
    %2272 = vmatprep.subr.bf16.mxu0 0
    %2273 = vmatpush1.bf16.msra.mxu0 0
    %2274 = vmatprep.subr.bf16.mxu0 0
    %2275 = vmatpush1.bf16.msra.mxu0 0
    %2276 = vmatprep.subr.bf16.mxu0 0
    %2277 = vmatpush1.bf16.msra.mxu0 0
    %2278 = vmatprep.subr.bf16.mxu0 0
    %2279 = vmatpush1.bf16.msra.mxu0 0
    %2280 = vmatprep.mubr.bf16.mxu0 0
    %2281 = vmatmul.mubr.bf16.gmra.mrb[0].mxu0 %v2055
    %v2282 = vpop.f32.mrb[0].mxu0
    %v2283 = vadd.f32 0.0, %v2282
    %v2284 = vpop.f32.mrb[0].mxu0
    %v2285 = vadd.f32 0.0, %v2284
    %v2286 = vpop.f32.mrb[0].mxu0
    %v2287 = vpop.f32.mrb[0].mxu0
    %2288 = vdwg.mxu0
    %2289 = vmatprep.subr.bf16.mxu0 %v591
    %2290 = vmatpush1.bf16.msra.mxu0 %v590
    %2291 = vmatprep.subr.bf16.mxu0 %v595
    %2292 = vmatpush1.bf16.msra.mxu0 %v594
    %2293 = vmatprep.subr.bf16.mxu0 %v599
    %2294 = vmatpush1.bf16.msra.mxu0 %v598
    %2295 = vmatprep.subr.bf16.mxu0 %v603
    %2296 = vmatpush1.bf16.msra.mxu0 %v602
    %2297 = vmatprep.subr.bf16.mxu0 %v607
    %2298 = vmatpush1.bf16.msra.mxu0 %v606
    %2299 = vmatprep.subr.bf16.mxu0 %v611
    %2300 = vmatpush1.bf16.msra.mxu0 %v610
    %2301 = vmatprep.subr.bf16.mxu0 %v615
    %2302 = vmatpush1.bf16.msra.mxu0 %v614
    %2303 = vmatprep.subr.bf16.mxu0 %v619
    %2304 = vmatpush1.bf16.msra.mxu0 %v618
    %2305 = vmatprep.subr.bf16.mxu0 0
    %2306 = vmatpush1.bf16.msra.mxu0 0
    %2307 = vmatprep.subr.bf16.mxu0 0
    %2308 = vmatpush1.bf16.msra.mxu0 0
    %2309 = vmatprep.subr.bf16.mxu0 0
    %2310 = vmatpush1.bf16.msra.mxu0 0
    %2311 = vmatprep.subr.bf16.mxu0 0
    %2312 = vmatpush1.bf16.msra.mxu0 0
    %2313 = vmatprep.subr.bf16.mxu0 0
    %2314 = vmatpush1.bf16.msra.mxu0 0
    %2315 = vmatprep.subr.bf16.mxu0 0
    %2316 = vmatpush1.bf16.msra.mxu0 0
    %2317 = vmatprep.subr.bf16.mxu0 0
    %2318 = vmatpush1.bf16.msra.mxu0 0
    %2319 = vmatprep.subr.bf16.mxu0 0
    %2320 = vmatpush1.bf16.msra.mxu0 0
    %2321 = vmatprep.mubr.bf16.mxu0 0
    %2322 = vmatmul.mubr.bf16.gmra.mrb[0].mxu0 %v2055
    %v2323 = vpop.f32.mrb[0].mxu0
    %v2324 = vadd.f32 0.0, %v2323
    %v2325 = vpop.f32.mrb[0].mxu0
    %v2326 = vadd.f32 0.0, %v2325
    %v2327 = vpop.f32.mrb[0].mxu0
    %v2328 = vpop.f32.mrb[0].mxu0
    %2329 = vdwg.mxu0
    %v2330 = vadd.f32 %v2244, %v2283
    %v2331 = vadd.f32 %v2245, %v2285
    %v2332 = vadd.f32 %v2246, %v2324
    %v2333 = vadd.f32 %v2247, %v2326
    %v2334 = vmul.f32 %v2330, 0.5
    %v2335 = vmul.f32 %v2331, 0.5
    %v2336 = vmul.f32 %v2332, 0.5
    %v2337 = vtanh.pop %v2334
    %v2338 = vtanh.pop %v2335
    %v2339 = vtanh.pop %v2336
    %v2340 = vmul.f32 %v2337, 0.5
    %v2341 = vmul.f32 %v2338, 0.5
    %v2342 = vmul.f32 %v2339, 0.5
    %v2343 = vadd.f32 %v2340, 0.5
    %v2344 = vadd.f32 %v2341, 0.5
    %v2345 = vadd.f32 %v2342, 0.5
    %v2346 = vtanh.pop %v2333
    %v2347 = vmul.f32 %v2344, %v2052
    %v2348 = vmul.f32 %v2343, %v2346
    %v2349 = vadd.f32 %v2347, %v2348
    %v2350 = vtanh.pop %v2349
    %v2351 = vmul.f32 %v2345, %v2350
    %v2352 = vpack.c.bf16 %v2351, %v2351
    %2353 = vmatprep.subr.bf16.mxu0 %v910
    %2354 = vmatpush1.bf16.msra.mxu0 %v909
    %2355 = vmatprep.subr.bf16.mxu0 %v914
    %2356 = vmatpush1.bf16.msra.mxu0 %v913
    %2357 = vmatprep.subr.bf16.mxu0 %v918
    %2358 = vmatpush1.bf16.msra.mxu0 %v917
    %2359 = vmatprep.subr.bf16.mxu0 %v922
    %2360 = vmatpush1.bf16.msra.mxu0 %v921
    %2361 = vmatprep.subr.bf16.mxu0 %v926
    %2362 = vmatpush1.bf16.msra.mxu0 %v925
    %2363 = vmatprep.subr.bf16.mxu0 %v930
    %2364 = vmatpush1.bf16.msra.mxu0 %v929
    %2365 = vmatprep.subr.bf16.mxu0 %v934
    %2366 = vmatpush1.bf16.msra.mxu0 %v933
    %2367 = vmatprep.subr.bf16.mxu0 %v938
    %2368 = vmatpush1.bf16.msra.mxu0 %v937
    %2369 = vmatprep.subr.bf16.mxu0 0
    %2370 = vmatpush1.bf16.msra.mxu0 0
    %2371 = vmatprep.subr.bf16.mxu0 0
    %2372 = vmatpush1.bf16.msra.mxu0 0
    %2373 = vmatprep.subr.bf16.mxu0 0
    %2374 = vmatpush1.bf16.msra.mxu0 0
    %2375 = vmatprep.subr.bf16.mxu0 0
    %2376 = vmatpush1.bf16.msra.mxu0 0
    %2377 = vmatprep.subr.bf16.mxu0 0
    %2378 = vmatpush1.bf16.msra.mxu0 0
    %2379 = vmatprep.subr.bf16.mxu0 0
    %2380 = vmatpush1.bf16.msra.mxu0 0
    %2381 = vmatprep.subr.bf16.mxu0 0
    %2382 = vmatpush1.bf16.msra.mxu0 0
    %2383 = vmatprep.subr.bf16.mxu0 0
    %2384 = vmatpush1.bf16.msra.mxu0 0
    %2385 = vmatprep.mubr.bf16.mxu0 0
    %2386 = vmatmul.mubr.bf16.gmra.mrb[0].mxu0 %v2352
    %v2387 = vpop.f32.mrb[0].mxu0
    %v2388 = vadd.f32 %v796, %v2387
    %v2389 = vpop.f32.mrb[0].mxu0
    %v2390 = vadd.f32 %v800, %v2389
    %v2391 = vpop.f32.mrb[0].mxu0
    %v2392 = vpop.f32.mrb[0].mxu0
    %2393 = vdwg.mxu0
    %2394 = vmatprep.subr.bf16.mxu0 %v912
    %2395 = vmatpush1.bf16.msra.mxu0 %v911
    %2396 = vmatprep.subr.bf16.mxu0 %v916
    %2397 = vmatpush1.bf16.msra.mxu0 %v915
    %2398 = vmatprep.subr.bf16.mxu0 %v920
    %2399 = vmatpush1.bf16.msra.mxu0 %v919
    %2400 = vmatprep.subr.bf16.mxu0 %v924
    %2401 = vmatpush1.bf16.msra.mxu0 %v923
    %2402 = vmatprep.subr.bf16.mxu0 %v928
    %2403 = vmatpush1.bf16.msra.mxu0 %v927
    %2404 = vmatprep.subr.bf16.mxu0 %v932
    %2405 = vmatpush1.bf16.msra.mxu0 %v931
    %2406 = vmatprep.subr.bf16.mxu0 %v936
    %2407 = vmatpush1.bf16.msra.mxu0 %v935
    %2408 = vmatprep.subr.bf16.mxu0 %v940
    %2409 = vmatpush1.bf16.msra.mxu0 %v939
    %2410 = vmatprep.subr.bf16.mxu0 0
    %2411 = vmatpush1.bf16.msra.mxu0 0
    %2412 = vmatprep.subr.bf16.mxu0 0
    %2413 = vmatpush1.bf16.msra.mxu0 0
    %2414 = vmatprep.subr.bf16.mxu0 0
    %2415 = vmatpush1.bf16.msra.mxu0 0
    %2416 = vmatprep.subr.bf16.mxu0 0
    %2417 = vmatpush1.bf16.msra.mxu0 0
    %2418 = vmatprep.subr.bf16.mxu0 0
    %2419 = vmatpush1.bf16.msra.mxu0 0
    %2420 = vmatprep.subr.bf16.mxu0 0
    %2421 = vmatpush1.bf16.msra.mxu0 0
    %2422 = vmatprep.subr.bf16.mxu0 0
    %2423 = vmatpush1.bf16.msra.mxu0 0
    %2424 = vmatprep.subr.bf16.mxu0 0
    %2425 = vmatpush1.bf16.msra.mxu0 0
    %2426 = vmatprep.mubr.bf16.mxu0 0
    %2427 = vmatmul.mubr.bf16.gmra.mrb[0].mxu0 %v2352
    %v2428 = vpop.f32.mrb[0].mxu0
    %v2429 = vadd.f32 %v804, %v2428
    %v2430 = vpop.f32.mrb[0].mxu0
    %v2431 = vadd.f32 %v808, %v2430
    %v2432 = vpop.f32.mrb[0].mxu0
    %v2433 = vpop.f32.mrb[0].mxu0
    %2434 = vdwg.mxu0
    %v2435 = vpack.c.bf16 %v2242, %v2242
    %2436 = vmatprep.subr.bf16.mxu0 %v1185
    %2437 = vmatpush1.bf16.msra.mxu0 %v1184
    %2438 = vmatprep.subr.bf16.mxu0 %v1189
    %2439 = vmatpush1.bf16.msra.mxu0 %v1188
    %2440 = vmatprep.subr.bf16.mxu0 %v1193
    %2441 = vmatpush1.bf16.msra.mxu0 %v1192
    %2442 = vmatprep.subr.bf16.mxu0 %v1197
    %2443 = vmatpush1.bf16.msra.mxu0 %v1196
    %2444 = vmatprep.subr.bf16.mxu0 %v1201
    %2445 = vmatpush1.bf16.msra.mxu0 %v1200
    %2446 = vmatprep.subr.bf16.mxu0 %v1205
    %2447 = vmatpush1.bf16.msra.mxu0 %v1204
    %2448 = vmatprep.subr.bf16.mxu0 %v1209
    %2449 = vmatpush1.bf16.msra.mxu0 %v1208
    %2450 = vmatprep.subr.bf16.mxu0 %v1213
    %2451 = vmatpush1.bf16.msra.mxu0 %v1212
    %2452 = vmatprep.subr.bf16.mxu0 0
    %2453 = vmatpush1.bf16.msra.mxu0 0
    %2454 = vmatprep.subr.bf16.mxu0 0
    %2455 = vmatpush1.bf16.msra.mxu0 0
    %2456 = vmatprep.subr.bf16.mxu0 0
    %2457 = vmatpush1.bf16.msra.mxu0 0
    %2458 = vmatprep.subr.bf16.mxu0 0
    %2459 = vmatpush1.bf16.msra.mxu0 0
    %2460 = vmatprep.subr.bf16.mxu0 0
    %2461 = vmatpush1.bf16.msra.mxu0 0
    %2462 = vmatprep.subr.bf16.mxu0 0
    %2463 = vmatpush1.bf16.msra.mxu0 0
    %2464 = vmatprep.subr.bf16.mxu0 0
    %2465 = vmatpush1.bf16.msra.mxu0 0
    %2466 = vmatprep.subr.bf16.mxu0 0
    %2467 = vmatpush1.bf16.msra.mxu0 0
    %2468 = vmatprep.mubr.bf16.mxu0 0
    %2469 = vmatmul.mubr.bf16.gmra.mrb[0].mxu0 %v2435
    %v2470 = vpop.f32.mrb[0].mxu0
    %v2471 = vadd.f32 0.0, %v2470
    %v2472 = vpop.f32.mrb[0].mxu0
    %v2473 = vadd.f32 0.0, %v2472
    %v2474 = vpop.f32.mrb[0].mxu0
    %v2475 = vpop.f32.mrb[0].mxu0
    %2476 = vdwg.mxu0
    %2477 = vmatprep.subr.bf16.mxu0 %v1187
    %2478 = vmatpush1.bf16.msra.mxu0 %v1186
    %2479 = vmatprep.subr.bf16.mxu0 %v1191
    %2480 = vmatpush1.bf16.msra.mxu0 %v1190
    %2481 = vmatprep.subr.bf16.mxu0 %v1195
    %2482 = vmatpush1.bf16.msra.mxu0 %v1194
    %2483 = vmatprep.subr.bf16.mxu0 %v1199
    %2484 = vmatpush1.bf16.msra.mxu0 %v1198
    %2485 = vmatprep.subr.bf16.mxu0 %v1203
    %2486 = vmatpush1.bf16.msra.mxu0 %v1202
    %2487 = vmatprep.subr.bf16.mxu0 %v1207
    %2488 = vmatpush1.bf16.msra.mxu0 %v1206
    %2489 = vmatprep.subr.bf16.mxu0 %v1211
    %2490 = vmatpush1.bf16.msra.mxu0 %v1210
    %2491 = vmatprep.subr.bf16.mxu0 %v1215
    %2492 = vmatpush1.bf16.msra.mxu0 %v1214
    %2493 = vmatprep.subr.bf16.mxu0 0
    %2494 = vmatpush1.bf16.msra.mxu0 0
    %2495 = vmatprep.subr.bf16.mxu0 0
    %2496 = vmatpush1.bf16.msra.mxu0 0
    %2497 = vmatprep.subr.bf16.mxu0 0
    %2498 = vmatpush1.bf16.msra.mxu0 0
    %2499 = vmatprep.subr.bf16.mxu0 0
    %2500 = vmatpush1.bf16.msra.mxu0 0
    %2501 = vmatprep.subr.bf16.mxu0 0
    %2502 = vmatpush1.bf16.msra.mxu0 0
    %2503 = vmatprep.subr.bf16.mxu0 0
    %2504 = vmatpush1.bf16.msra.mxu0 0
    %2505 = vmatprep.subr.bf16.mxu0 0
    %2506 = vmatpush1.bf16.msra.mxu0 0
    %2507 = vmatprep.subr.bf16.mxu0 0
    %2508 = vmatpush1.bf16.msra.mxu0 0
    %2509 = vmatprep.mubr.bf16.mxu0 0
    %2510 = vmatmul.mubr.bf16.gmra.mrb[0].mxu0 %v2435
    %v2511 = vpop.f32.mrb[0].mxu0
    %v2512 = vadd.f32 0.0, %v2511
    %v2513 = vpop.f32.mrb[0].mxu0
    %v2514 = vadd.f32 0.0, %v2513
    %v2515 = vpop.f32.mrb[0].mxu0
    %v2516 = vpop.f32.mrb[0].mxu0
    %2517 = vdwg.mxu0
    %v2518 = vadd.f32 %v2388, %v2471
    %v2519 = vadd.f32 %v2390, %v2473
    %v2520 = vadd.f32 %v2429, %v2512
    %v2521 = vadd.f32 %v2431, %v2514
    %v2522 = vmul.f32 %v2518, 0.5
    %v2523 = vmul.f32 %v2519, 0.5
    %v2524 = vmul.f32 %v2520, 0.5
    %v2525 = vtanh.pop %v2522
    %v2526 = vtanh.pop %v2523
    %v2527 = vtanh.pop %v2524
    %v2528 = vmul.f32 %v2525, 0.5
    %v2529 = vmul.f32 %v2526, 0.5
    %v2530 = vmul.f32 %v2527, 0.5
    %v2531 = vadd.f32 %v2528, 0.5
    %v2532 = vadd.f32 %v2529, 0.5
    %v2533 = vadd.f32 %v2530, 0.5
    %v2534 = vtanh.pop %v2521
    %v2535 = vmul.f32 %v2532, %v2240
    %v2536 = vmul.f32 %v2531, %v2534
    %v2537 = vadd.f32 %v2535, %v2536
    %v2538 = vtanh.pop %v2537
    %v2539 = vmul.f32 %v2533, %v2538
    %s2540 = scalar_lea.vmem [#allocation2], 160
    %v2541 = vld [vmem:[%s2540] sm:$0xff]
    %v2542 = vld [vmem:[%s2540 + $0x8] sm:$0xff]
    %v2543 = vld [vmem:[%s2540 + $0x10] sm:$0xff]
    %v2544 = vld [vmem:[%s2540 + $0x18] sm:$0xff]
    %2545 = vmatprep.subr.bf16.mxu0 %v589
    %2546 = vmatpush1.bf16.msra.mxu0 %v588
    %2547 = vmatprep.subr.bf16.mxu0 %v593
    %2548 = vmatpush1.bf16.msra.mxu0 %v592
    %2549 = vmatprep.subr.bf16.mxu0 %v597
    %2550 = vmatpush1.bf16.msra.mxu0 %v596
    %2551 = vmatprep.subr.bf16.mxu0 %v601
    %2552 = vmatpush1.bf16.msra.mxu0 %v600
    %2553 = vmatprep.subr.bf16.mxu0 %v605
    %2554 = vmatpush1.bf16.msra.mxu0 %v604
    %2555 = vmatprep.subr.bf16.mxu0 %v609
    %2556 = vmatpush1.bf16.msra.mxu0 %v608
    %2557 = vmatprep.subr.bf16.mxu0 %v613
    %2558 = vmatpush1.bf16.msra.mxu0 %v612
    %2559 = vmatprep.subr.bf16.mxu0 %v617
    %2560 = vmatpush1.bf16.msra.mxu0 %v616
    %2561 = vmatprep.subr.bf16.mxu0 0
    %2562 = vmatpush1.bf16.msra.mxu0 0
    %2563 = vmatprep.subr.bf16.mxu0 0
    %2564 = vmatpush1.bf16.msra.mxu0 0
    %2565 = vmatprep.subr.bf16.mxu0 0
    %2566 = vmatpush1.bf16.msra.mxu0 0
    %2567 = vmatprep.subr.bf16.mxu0 0
    %2568 = vmatpush1.bf16.msra.mxu0 0
    %2569 = vmatprep.subr.bf16.mxu0 0
    %2570 = vmatpush1.bf16.msra.mxu0 0
    %2571 = vmatprep.subr.bf16.mxu0 0
    %2572 = vmatpush1.bf16.msra.mxu0 0
    %2573 = vmatprep.subr.bf16.mxu0 0
    %2574 = vmatpush1.bf16.msra.mxu0 0
    %2575 = vmatprep.subr.bf16.mxu0 0
    %2576 = vmatpush1.bf16.msra.mxu0 0
    %2577 = vmatprep.mubr.bf16.mxu0 0
    %2578 = vmatmul.mubr.bf16.gmra.mrb[0].mxu0 %v2352
    %v2579 = vpop.f32.mrb[0].mxu0
    %v2580 = vadd.f32 0.0, %v2579
    %v2581 = vpop.f32.mrb[0].mxu0
    %v2582 = vadd.f32 0.0, %v2581
    %v2583 = vpop.f32.mrb[0].mxu0
    %v2584 = vpop.f32.mrb[0].mxu0
    %2585 = vdwg.mxu0
    %2586 = vmatprep.subr.bf16.mxu0 %v591
    %2587 = vmatpush1.bf16.msra.mxu0 %v590
    %2588 = vmatprep.subr.bf16.mxu0 %v595
    %2589 = vmatpush1.bf16.msra.mxu0 %v594
    %2590 = vmatprep.subr.bf16.mxu0 %v599
    %2591 = vmatpush1.bf16.msra.mxu0 %v598
    %2592 = vmatprep.subr.bf16.mxu0 %v603
    %2593 = vmatpush1.bf16.msra.mxu0 %v602
    %2594 = vmatprep.subr.bf16.mxu0 %v607
    %2595 = vmatpush1.bf16.msra.mxu0 %v606
    %2596 = vmatprep.subr.bf16.mxu0 %v611
    %2597 = vmatpush1.bf16.msra.mxu0 %v610
    %2598 = vmatprep.subr.bf16.mxu0 %v615
    %2599 = vmatpush1.bf16.msra.mxu0 %v614
    %2600 = vmatprep.subr.bf16.mxu0 %v619
    %2601 = vmatpush1.bf16.msra.mxu0 %v618
    %2602 = vmatprep.subr.bf16.mxu0 0
    %2603 = vmatpush1.bf16.msra.mxu0 0
    %2604 = vmatprep.subr.bf16.mxu0 0
    %2605 = vmatpush1.bf16.msra.mxu0 0
    %2606 = vmatprep.subr.bf16.mxu0 0
    %2607 = vmatpush1.bf16.msra.mxu0 0
    %2608 = vmatprep.subr.bf16.mxu0 0
    %2609 = vmatpush1.bf16.msra.mxu0 0
    %2610 = vmatprep.subr.bf16.mxu0 0
    %2611 = vmatpush1.bf16.msra.mxu0 0
    %2612 = vmatprep.subr.bf16.mxu0 0
    %2613 = vmatpush1.bf16.msra.mxu0 0
    %2614 = vmatprep.subr.bf16.mxu0 0
    %2615 = vmatpush1.bf16.msra.mxu0 0
    %2616 = vmatprep.subr.bf16.mxu0 0
    %2617 = vmatpush1.bf16.msra.mxu0 0
    %2618 = vmatprep.mubr.bf16.mxu0 0
    %2619 = vmatmul.mubr.bf16.gmra.mrb[0].mxu0 %v2352
    %v2620 = vpop.f32.mrb[0].mxu0
    %v2621 = vadd.f32 0.0, %v2620
    %v2622 = vpop.f32.mrb[0].mxu0
    %v2623 = vadd.f32 0.0, %v2622
    %v2624 = vpop.f32.mrb[0].mxu0
    %v2625 = vpop.f32.mrb[0].mxu0
    %2626 = vdwg.mxu0
    %v2627 = vadd.f32 %v2541, %v2580
    %v2628 = vadd.f32 %v2542, %v2582
    %v2629 = vadd.f32 %v2543, %v2621
    %v2630 = vadd.f32 %v2544, %v2623
    %v2631 = vmul.f32 %v2627, 0.5
    %v2632 = vmul.f32 %v2628, 0.5
    %v2633 = vmul.f32 %v2629, 0.5
    %v2634 = vtanh.pop %v2631
    %v2635 = vtanh.pop %v2632
    %v2636 = vtanh.pop %v2633
    %v2637 = vmul.f32 %v2634, 0.5
    %v2638 = vmul.f32 %v2635, 0.5
    %v2639 = vmul.f32 %v2636, 0.5
    %v2640 = vadd.f32 %v2637, 0.5
    %v2641 = vadd.f32 %v2638, 0.5
    %v2642 = vadd.f32 %v2639, 0.5
    %v2643 = vtanh.pop %v2630
    %v2644 = vmul.f32 %v2641, %v2349
    %v2645 = vmul.f32 %v2640, %v2643
    %v2646 = vadd.f32 %v2644, %v2645
    %v2647 = vtanh.pop %v2646
    %v2648 = vmul.f32 %v2642, %v2647
    %v2649 = vpack.c.bf16 %v2648, %v2648
    %2650 = vmatprep.subr.bf16.mxu0 %v910
    %2651 = vmatpush1.bf16.msra.mxu0 %v909
    %2652 = vmatprep.subr.bf16.mxu0 %v914
    %2653 = vmatpush1.bf16.msra.mxu0 %v913
    %2654 = vmatprep.subr.bf16.mxu0 %v918
    %2655 = vmatpush1.bf16.msra.mxu0 %v917
    %2656 = vmatprep.subr.bf16.mxu0 %v922
    %2657 = vmatpush1.bf16.msra.mxu0 %v921
    %2658 = vmatprep.subr.bf16.mxu0 %v926
    %2659 = vmatpush1.bf16.msra.mxu0 %v925
    %2660 = vmatprep.subr.bf16.mxu0 %v930
    %2661 = vmatpush1.bf16.msra.mxu0 %v929
    %2662 = vmatprep.subr.bf16.mxu0 %v934
    %2663 = vmatpush1.bf16.msra.mxu0 %v933
    %2664 = vmatprep.subr.bf16.mxu0 %v938
    %2665 = vmatpush1.bf16.msra.mxu0 %v937
    %2666 = vmatprep.subr.bf16.mxu0 0
    %2667 = vmatpush1.bf16.msra.mxu0 0
    %2668 = vmatprep.subr.bf16.mxu0 0
    %2669 = vmatpush1.bf16.msra.mxu0 0
    %2670 = vmatprep.subr.bf16.mxu0 0
    %2671 = vmatpush1.bf16.msra.mxu0 0
    %2672 = vmatprep.subr.bf16.mxu0 0
    %2673 = vmatpush1.bf16.msra.mxu0 0
    %2674 = vmatprep.subr.bf16.mxu0 0
    %2675 = vmatpush1.bf16.msra.mxu0 0
    %2676 = vmatprep.subr.bf16.mxu0 0
    %2677 = vmatpush1.bf16.msra.mxu0 0
    %2678 = vmatprep.subr.bf16.mxu0 0
    %2679 = vmatpush1.bf16.msra.mxu0 0
    %2680 = vmatprep.subr.bf16.mxu0 0
    %2681 = vmatpush1.bf16.msra.mxu0 0
    %2682 = vmatprep.mubr.bf16.mxu0 0
    %2683 = vmatmul.mubr.bf16.gmra.mrb[0].mxu0 %v2649
    %v2684 = vpop.f32.mrb[0].mxu0
    %v2685 = vadd.f32 %v796, %v2684
    %v2686 = vpop.f32.mrb[0].mxu0
    %v2687 = vadd.f32 %v800, %v2686
    %v2688 = vpop.f32.mrb[0].mxu0
    %v2689 = vpop.f32.mrb[0].mxu0
    %2690 = vdwg.mxu0
    %2691 = vmatprep.subr.bf16.mxu0 %v912
    %2692 = vmatpush1.bf16.msra.mxu0 %v911
    %2693 = vmatprep.subr.bf16.mxu0 %v916
    %2694 = vmatpush1.bf16.msra.mxu0 %v915
    %2695 = vmatprep.subr.bf16.mxu0 %v920
    %2696 = vmatpush1.bf16.msra.mxu0 %v919
    %2697 = vmatprep.subr.bf16.mxu0 %v924
    %2698 = vmatpush1.bf16.msra.mxu0 %v923
    %2699 = vmatprep.subr.bf16.mxu0 %v928
    %2700 = vmatpush1.bf16.msra.mxu0 %v927
    %2701 = vmatprep.subr.bf16.mxu0 %v932
    %2702 = vmatpush1.bf16.msra.mxu0 %v931
    %2703 = vmatprep.subr.bf16.mxu0 %v936
    %2704 = vmatpush1.bf16.msra.mxu0 %v935
    %2705 = vmatprep.subr.bf16.mxu0 %v940
    %2706 = vmatpush1.bf16.msra.mxu0 %v939
    %2707 = vmatprep.subr.bf16.mxu0 0
    %2708 = vmatpush1.bf16.msra.mxu0 0
    %2709 = vmatprep.subr.bf16.mxu0 0
    %2710 = vmatpush1.bf16.msra.mxu0 0
    %2711 = vmatprep.subr.bf16.mxu0 0
    %2712 = vmatpush1.bf16.msra.mxu0 0
    %2713 = vmatprep.subr.bf16.mxu0 0
    %2714 = vmatpush1.bf16.msra.mxu0 0
    %2715 = vmatprep.subr.bf16.mxu0 0
    %2716 = vmatpush1.bf16.msra.mxu0 0
    %2717 = vmatprep.subr.bf16.mxu0 0
    %2718 = vmatpush1.bf16.msra.mxu0 0
    %2719 = vmatprep.subr.bf16.mxu0 0
    %2720 = vmatpush1.bf16.msra.mxu0 0
    %2721 = vmatprep.subr.bf16.mxu0 0
    %2722 = vmatpush1.bf16.msra.mxu0 0
    %2723 = vmatprep.mubr.bf16.mxu0 0
    %2724 = vmatmul.mubr.bf16.gmra.mrb[0].mxu0 %v2649
    %v2725 = vpop.f32.mrb[0].mxu0
    %v2726 = vadd.f32 %v804, %v2725
    %v2727 = vpop.f32.mrb[0].mxu0
    %v2728 = vadd.f32 %v808, %v2727
    %v2729 = vpop.f32.mrb[0].mxu0
    %v2730 = vpop.f32.mrb[0].mxu0
    %2731 = vdwg.mxu0
    %v2732 = vpack.c.bf16 %v2539, %v2539
    %2733 = vmatprep.subr.bf16.mxu0 %v1185
    %2734 = vmatpush1.bf16.msra.mxu0 %v1184
    %2735 = vmatprep.subr.bf16.mxu0 %v1189
    %2736 = vmatpush1.bf16.msra.mxu0 %v1188
    %2737 = vmatprep.subr.bf16.mxu0 %v1193
    %2738 = vmatpush1.bf16.msra.mxu0 %v1192
    %2739 = vmatprep.subr.bf16.mxu0 %v1197
    %2740 = vmatpush1.bf16.msra.mxu0 %v1196
    %2741 = vmatprep.subr.bf16.mxu0 %v1201
    %2742 = vmatpush1.bf16.msra.mxu0 %v1200
    %2743 = vmatprep.subr.bf16.mxu0 %v1205
    %2744 = vmatpush1.bf16.msra.mxu0 %v1204
    %2745 = vmatprep.subr.bf16.mxu0 %v1209
    %2746 = vmatpush1.bf16.msra.mxu0 %v1208
    %2747 = vmatprep.subr.bf16.mxu0 %v1213
    %2748 = vmatpush1.bf16.msra.mxu0 %v1212
    %2749 = vmatprep.subr.bf16.mxu0 0
    %2750 = vmatpush1.bf16.msra.mxu0 0
    %2751 = vmatprep.subr.bf16.mxu0 0
    %2752 = vmatpush1.bf16.msra.mxu0 0
    %2753 = vmatprep.subr.bf16.mxu0 0
    %2754 = vmatpush1.bf16.msra.mxu0 0
    %2755 = vmatprep.subr.bf16.mxu0 0
    %2756 = vmatpush1.bf16.msra.mxu0 0
    %2757 = vmatprep.subr.bf16.mxu0 0
    %2758 = vmatpush1.bf16.msra.mxu0 0
    %2759 = vmatprep.subr.bf16.mxu0 0
    %2760 = vmatpush1.bf16.msra.mxu0 0
    %2761 = vmatprep.subr.bf16.mxu0 0
    %2762 = vmatpush1.bf16.msra.mxu0 0
    %2763 = vmatprep.subr.bf16.mxu0 0
    %2764 = vmatpush1.bf16.msra.mxu0 0
    %2765 = vmatprep.mubr.bf16.mxu0 0
    %2766 = vmatmul.mubr.bf16.gmra.mrb[0].mxu0 %v2732
    %v2767 = vpop.f32.mrb[0].mxu0
    %v2768 = vadd.f32 0.0, %v2767
    %v2769 = vpop.f32.mrb[0].mxu0
    %v2770 = vadd.f32 0.0, %v2769
    %v2771 = vpop.f32.mrb[0].mxu0
    %v2772 = vpop.f32.mrb[0].mxu0
    %2773 = vdwg.mxu0
    %2774 = vmatprep.subr.bf16.mxu0 %v1187
    %2775 = vmatpush1.bf16.msra.mxu0 %v1186
    %2776 = vmatprep.subr.bf16.mxu0 %v1191
    %2777 = vmatpush1.bf16.msra.mxu0 %v1190
    %2778 = vmatprep.subr.bf16.mxu0 %v1195
    %2779 = vmatpush1.bf16.msra.mxu0 %v1194
    %2780 = vmatprep.subr.bf16.mxu0 %v1199
    %2781 = vmatpush1.bf16.msra.mxu0 %v1198
    %2782 = vmatprep.subr.bf16.mxu0 %v1203
    %2783 = vmatpush1.bf16.msra.mxu0 %v1202
    %2784 = vmatprep.subr.bf16.mxu0 %v1207
    %2785 = vmatpush1.bf16.msra.mxu0 %v1206
    %2786 = vmatprep.subr.bf16.mxu0 %v1211
    %2787 = vmatpush1.bf16.msra.mxu0 %v1210
    %2788 = vmatprep.subr.bf16.mxu0 %v1215
    %2789 = vmatpush1.bf16.msra.mxu0 %v1214
    %2790 = vmatprep.subr.bf16.mxu0 0
    %2791 = vmatpush1.bf16.msra.mxu0 0
    %2792 = vmatprep.subr.bf16.mxu0 0
    %2793 = vmatpush1.bf16.msra.mxu0 0
    %2794 = vmatprep.subr.bf16.mxu0 0
    %2795 = vmatpush1.bf16.msra.mxu0 0
    %2796 = vmatprep.subr.bf16.mxu0 0
    %2797 = vmatpush1.bf16.msra.mxu0 0
    %2798 = vmatprep.subr.bf16.mxu0 0
    %2799 = vmatpush1.bf16.msra.mxu0 0
    %2800 = vmatprep.subr.bf16.mxu0 0
    %2801 = vmatpush1.bf16.msra.mxu0 0
    %2802 = vmatprep.subr.bf16.mxu0 0
    %2803 = vmatpush1.bf16.msra.mxu0 0
    %2804 = vmatprep.subr.bf16.mxu0 0
    %2805 = vmatpush1.bf16.msra.mxu0 0
    %2806 = vmatprep.mubr.bf16.mxu0 0
    %2807 = vmatmul.mubr.bf16.gmra.mrb[0].mxu0 %v2732
    %v2808 = vpop.f32.mrb[0].mxu0
    %v2809 = vadd.f32 0.0, %v2808
    %v2810 = vpop.f32.mrb[0].mxu0
    %v2811 = vadd.f32 0.0, %v2810
    %v2812 = vpop.f32.mrb[0].mxu0
    %v2813 = vpop.f32.mrb[0].mxu0
    %2814 = vdwg.mxu0
    %v2815 = vadd.f32 %v2685, %v2768
    %v2816 = vadd.f32 %v2687, %v2770
    %v2817 = vadd.f32 %v2726, %v2809
    %v2818 = vadd.f32 %v2728, %v2811
    %v2819 = vmul.f32 %v2815, 0.5
    %v2820 = vmul.f32 %v2816, 0.5
    %v2821 = vmul.f32 %v2817, 0.5
    %v2822 = vtanh.pop %v2819
    %v2823 = vtanh.pop %v2820
    %v2824 = vtanh.pop %v2821
    %v2825 = vmul.f32 %v2822, 0.5
    %v2826 = vmul.f32 %v2823, 0.5
    %v2827 = vmul.f32 %v2824, 0.5
    %v2828 = vadd.f32 %v2825, 0.5
    %v2829 = vadd.f32 %v2826, 0.5
    %v2830 = vadd.f32 %v2827, 0.5
    %v2831 = vtanh.pop %v2818
    %v2832 = vmul.f32 %v2829, %v2537
    %v2833 = vmul.f32 %v2828, %v2831
    %v2834 = vadd.f32 %v2832, %v2833
    %v2835 = vtanh.pop %v2834
    %v2836 = vmul.f32 %v2830, %v2835
    %s2837 = scalar_lea.vmem [#allocation2], 192
    %v2838 = vld [vmem:[%s2837] sm:$0xff]
    %v2839 = vld [vmem:[%s2837 + $0x8] sm:$0xff]
    %v2840 = vld [vmem:[%s2837 + $0x10] sm:$0xff]
    %v2841 = vld [vmem:[%s2837 + $0x18] sm:$0xff]
    %2842 = vmatprep.subr.bf16.mxu0 %v589
    %2843 = vmatpush1.bf16.msra.mxu0 %v588
    %2844 = vmatprep.subr.bf16.mxu0 %v593
    %2845 = vmatpush1.bf16.msra.mxu0 %v592
    %2846 = vmatprep.subr.bf16.mxu0 %v597
    %2847 = vmatpush1.bf16.msra.mxu0 %v596
    %2848 = vmatprep.subr.bf16.mxu0 %v601
    %2849 = vmatpush1.bf16.msra.mxu0 %v600
    %2850 = vmatprep.subr.bf16.mxu0 %v605
    %2851 = vmatpush1.bf16.msra.mxu0 %v604
    %2852 = vmatprep.subr.bf16.mxu0 %v609
    %2853 = vmatpush1.bf16.msra.mxu0 %v608
    %2854 = vmatprep.subr.bf16.mxu0 %v613
    %2855 = vmatpush1.bf16.msra.mxu0 %v612
    %2856 = vmatprep.subr.bf16.mxu0 %v617
    %2857 = vmatpush1.bf16.msra.mxu0 %v616
    %2858 = vmatprep.subr.bf16.mxu0 0
    %2859 = vmatpush1.bf16.msra.mxu0 0
    %2860 = vmatprep.subr.bf16.mxu0 0
    %2861 = vmatpush1.bf16.msra.mxu0 0
    %2862 = vmatprep.subr.bf16.mxu0 0
    %2863 = vmatpush1.bf16.msra.mxu0 0
    %2864 = vmatprep.subr.bf16.mxu0 0
    %2865 = vmatpush1.bf16.msra.mxu0 0
    %2866 = vmatprep.subr.bf16.mxu0 0
    %2867 = vmatpush1.bf16.msra.mxu0 0
    %2868 = vmatprep.subr.bf16.mxu0 0
    %2869 = vmatpush1.bf16.msra.mxu0 0
    %2870 = vmatprep.subr.bf16.mxu0 0
    %2871 = vmatpush1.bf16.msra.mxu0 0
    %2872 = vmatprep.subr.bf16.mxu0 0
    %2873 = vmatpush1.bf16.msra.mxu0 0
    %2874 = vmatprep.mubr.bf16.mxu0 0
    %2875 = vmatmul.mubr.bf16.gmra.mrb[0].mxu0 %v2649
    %v2876 = vpop.f32.mrb[0].mxu0
    %v2877 = vadd.f32 0.0, %v2876
    %v2878 = vpop.f32.mrb[0].mxu0
    %v2879 = vadd.f32 0.0, %v2878
    %v2880 = vpop.f32.mrb[0].mxu0
    %v2881 = vpop.f32.mrb[0].mxu0
    %2882 = vdwg.mxu0
    %2883 = vmatprep.subr.bf16.mxu0 %v591
    %2884 = vmatpush1.bf16.msra.mxu0 %v590
    %2885 = vmatprep.subr.bf16.mxu0 %v595
    %2886 = vmatpush1.bf16.msra.mxu0 %v594
    %2887 = vmatprep.subr.bf16.mxu0 %v599
    %2888 = vmatpush1.bf16.msra.mxu0 %v598
    %2889 = vmatprep.subr.bf16.mxu0 %v603
    %2890 = vmatpush1.bf16.msra.mxu0 %v602
    %2891 = vmatprep.subr.bf16.mxu0 %v607
    %2892 = vmatpush1.bf16.msra.mxu0 %v606
    %2893 = vmatprep.subr.bf16.mxu0 %v611
    %2894 = vmatpush1.bf16.msra.mxu0 %v610
    %2895 = vmatprep.subr.bf16.mxu0 %v615
    %2896 = vmatpush1.bf16.msra.mxu0 %v614
    %2897 = vmatprep.subr.bf16.mxu0 %v619
    %2898 = vmatpush1.bf16.msra.mxu0 %v618
    %2899 = vmatprep.subr.bf16.mxu0 0
    %2900 = vmatpush1.bf16.msra.mxu0 0
    %2901 = vmatprep.subr.bf16.mxu0 0
    %2902 = vmatpush1.bf16.msra.mxu0 0
    %2903 = vmatprep.subr.bf16.mxu0 0
    %2904 = vmatpush1.bf16.msra.mxu0 0
    %2905 = vmatprep.subr.bf16.mxu0 0
    %2906 = vmatpush1.bf16.msra.mxu0 0
    %2907 = vmatprep.subr.bf16.mxu0 0
    %2908 = vmatpush1.bf16.msra.mxu0 0
    %2909 = vmatprep.subr.bf16.mxu0 0
    %2910 = vmatpush1.bf16.msra.mxu0 0
    %2911 = vmatprep.subr.bf16.mxu0 0
    %2912 = vmatpush1.bf16.msra.mxu0 0
    %2913 = vmatprep.subr.bf16.mxu0 0
    %2914 = vmatpush1.bf16.msra.mxu0 0
    %2915 = vmatprep.mubr.bf16.mxu0 0
    %2916 = vmatmul.mubr.bf16.gmra.mrb[0].mxu0 %v2649
    %v2917 = vpop.f32.mrb[0].mxu0
    %v2918 = vadd.f32 0.0, %v2917
    %v2919 = vpop.f32.mrb[0].mxu0
    %v2920 = vadd.f32 0.0, %v2919
    %v2921 = vpop.f32.mrb[0].mxu0
    %v2922 = vpop.f32.mrb[0].mxu0
    %2923 = vdwg.mxu0
    %v2924 = vadd.f32 %v2838, %v2877
    %v2925 = vadd.f32 %v2839, %v2879
    %v2926 = vadd.f32 %v2840, %v2918
    %v2927 = vadd.f32 %v2841, %v2920
    %v2928 = vmul.f32 %v2924, 0.5
    %v2929 = vmul.f32 %v2925, 0.5
    %v2930 = vmul.f32 %v2926, 0.5
    %v2931 = vtanh.pop %v2928
    %v2932 = vtanh.pop %v2929
    %v2933 = vtanh.pop %v2930
    %v2934 = vmul.f32 %v2931, 0.5
    %v2935 = vmul.f32 %v2932, 0.5
    %v2936 = vmul.f32 %v2933, 0.5
    %v2937 = vadd.f32 %v2934, 0.5
    %v2938 = vadd.f32 %v2935, 0.5
    %v2939 = vadd.f32 %v2936, 0.5
    %v2940 = vtanh.pop %v2927
    %v2941 = vmul.f32 %v2938, %v2646
    %v2942 = vmul.f32 %v2937, %v2940
    %v2943 = vadd.f32 %v2941, %v2942
    %v2944 = vtanh.pop %v2943
    %v2945 = vmul.f32 %v2939, %v2944
    %v2946 = vpack.c.bf16 %v2945, %v2945
    %2947 = vmatprep.subr.bf16.mxu0 %v910
    %2948 = vmatpush1.bf16.msra.mxu0 %v909
    %2949 = vmatprep.subr.bf16.mxu0 %v914
    %2950 = vmatpush1.bf16.msra.mxu0 %v913
    %2951 = vmatprep.subr.bf16.mxu0 %v918
    %2952 = vmatpush1.bf16.msra.mxu0 %v917
    %2953 = vmatprep.subr.bf16.mxu0 %v922
    %2954 = vmatpush1.bf16.msra.mxu0 %v921
    %2955 = vmatprep.subr.bf16.mxu0 %v926
    %2956 = vmatpush1.bf16.msra.mxu0 %v925
    %2957 = vmatprep.subr.bf16.mxu0 %v930
    %2958 = vmatpush1.bf16.msra.mxu0 %v929
    %2959 = vmatprep.subr.bf16.mxu0 %v934
    %2960 = vmatpush1.bf16.msra.mxu0 %v933
    %2961 = vmatprep.subr.bf16.mxu0 %v938
    %2962 = vmatpush1.bf16.msra.mxu0 %v937
    %2963 = vmatprep.subr.bf16.mxu0 0
    %2964 = vmatpush1.bf16.msra.mxu0 0
    %2965 = vmatprep.subr.bf16.mxu0 0
    %2966 = vmatpush1.bf16.msra.mxu0 0
    %2967 = vmatprep.subr.bf16.mxu0 0
    %2968 = vmatpush1.bf16.msra.mxu0 0
    %2969 = vmatprep.subr.bf16.mxu0 0
    %2970 = vmatpush1.bf16.msra.mxu0 0
    %2971 = vmatprep.subr.bf16.mxu0 0
    %2972 = vmatpush1.bf16.msra.mxu0 0
    %2973 = vmatprep.subr.bf16.mxu0 0
    %2974 = vmatpush1.bf16.msra.mxu0 0
    %2975 = vmatprep.subr.bf16.mxu0 0
    %2976 = vmatpush1.bf16.msra.mxu0 0
    %2977 = vmatprep.subr.bf16.mxu0 0
    %2978 = vmatpush1.bf16.msra.mxu0 0
    %2979 = vmatprep.mubr.bf16.mxu0 0
    %2980 = vmatmul.mubr.bf16.gmra.mrb[0].mxu0 %v2946
    %v2981 = vpop.f32.mrb[0].mxu0
    %v2982 = vadd.f32 %v796, %v2981
    %v2983 = vpop.f32.mrb[0].mxu0
    %v2984 = vadd.f32 %v800, %v2983
    %v2985 = vpop.f32.mrb[0].mxu0
    %v2986 = vpop.f32.mrb[0].mxu0
    %2987 = vdwg.mxu0
    %2988 = vmatprep.subr.bf16.mxu0 %v912
    %2989 = vmatpush1.bf16.msra.mxu0 %v911
    %2990 = vmatprep.subr.bf16.mxu0 %v916
    %2991 = vmatpush1.bf16.msra.mxu0 %v915
    %2992 = vmatprep.subr.bf16.mxu0 %v920
    %2993 = vmatpush1.bf16.msra.mxu0 %v919
    %2994 = vmatprep.subr.bf16.mxu0 %v924
    %2995 = vmatpush1.bf16.msra.mxu0 %v923
    %2996 = vmatprep.subr.bf16.mxu0 %v928
    %2997 = vmatpush1.bf16.msra.mxu0 %v927
    %2998 = vmatprep.subr.bf16.mxu0 %v932
    %2999 = vmatpush1.bf16.msra.mxu0 %v931
    %3000 = vmatprep.subr.bf16.mxu0 %v936
    %3001 = vmatpush1.bf16.msra.mxu0 %v935
    %3002 = vmatprep.subr.bf16.mxu0 %v940
    %3003 = vmatpush1.bf16.msra.mxu0 %v939
    %3004 = vmatprep.subr.bf16.mxu0 0
    %3005 = vmatpush1.bf16.msra.mxu0 0
    %3006 = vmatprep.subr.bf16.mxu0 0
    %3007 = vmatpush1.bf16.msra.mxu0 0
    %3008 = vmatprep.subr.bf16.mxu0 0
    %3009 = vmatpush1.bf16.msra.mxu0 0
    %3010 = vmatprep.subr.bf16.mxu0 0
    %3011 = vmatpush1.bf16.msra.mxu0 0
    %3012 = vmatprep.subr.bf16.mxu0 0
    %3013 = vmatpush1.bf16.msra.mxu0 0
    %3014 = vmatprep.subr.bf16.mxu0 0
    %3015 = vmatpush1.bf16.msra.mxu0 0
    %3016 = vmatprep.subr.bf16.mxu0 0
    %3017 = vmatpush1.bf16.msra.mxu0 0
    %3018 = vmatprep.subr.bf16.mxu0 0
    %3019 = vmatpush1.bf16.msra.mxu0 0
    %3020 = vmatprep.mubr.bf16.mxu0 0
    %3021 = vmatmul.mubr.bf16.gmra.mrb[0].mxu0 %v2946
    %v3022 = vpop.f32.mrb[0].mxu0
    %v3023 = vadd.f32 %v804, %v3022
    %v3024 = vpop.f32.mrb[0].mxu0
    %v3025 = vadd.f32 %v808, %v3024
    %v3026 = vpop.f32.mrb[0].mxu0
    %v3027 = vpop.f32.mrb[0].mxu0
    %3028 = vdwg.mxu0
    %v3029 = vpack.c.bf16 %v2836, %v2836
    %3030 = vmatprep.subr.bf16.mxu0 %v1185
    %3031 = vmatpush1.bf16.msra.mxu0 %v1184
    %3032 = vmatprep.subr.bf16.mxu0 %v1189
    %3033 = vmatpush1.bf16.msra.mxu0 %v1188
    %3034 = vmatprep.subr.bf16.mxu0 %v1193
    %3035 = vmatpush1.bf16.msra.mxu0 %v1192
    %3036 = vmatprep.subr.bf16.mxu0 %v1197
    %3037 = vmatpush1.bf16.msra.mxu0 %v1196
    %3038 = vmatprep.subr.bf16.mxu0 %v1201
    %3039 = vmatpush1.bf16.msra.mxu0 %v1200
    %3040 = vmatprep.subr.bf16.mxu0 %v1205
    %3041 = vmatpush1.bf16.msra.mxu0 %v1204
    %3042 = vmatprep.subr.bf16.mxu0 %v1209
    %3043 = vmatpush1.bf16.msra.mxu0 %v1208
    %3044 = vmatprep.subr.bf16.mxu0 %v1213
    %3045 = vmatpush1.bf16.msra.mxu0 %v1212
    %3046 = vmatprep.subr.bf16.mxu0 0
    %3047 = vmatpush1.bf16.msra.mxu0 0
    %3048 = vmatprep.subr.bf16.mxu0 0
    %3049 = vmatpush1.bf16.msra.mxu0 0
    %3050 = vmatprep.subr.bf16.mxu0 0
    %3051 = vmatpush1.bf16.msra.mxu0 0
    %3052 = vmatprep.subr.bf16.mxu0 0
    %3053 = vmatpush1.bf16.msra.mxu0 0
    %3054 = vmatprep.subr.bf16.mxu0 0
    %3055 = vmatpush1.bf16.msra.mxu0 0
    %3056 = vmatprep.subr.bf16.mxu0 0
    %3057 = vmatpush1.bf16.msra.mxu0 0
    %3058 = vmatprep.subr.bf16.mxu0 0
    %3059 = vmatpush1.bf16.msra.mxu0 0
    %3060 = vmatprep.subr.bf16.mxu0 0
    %3061 = vmatpush1.bf16.msra.mxu0 0
    %3062 = vmatprep.mubr.bf16.mxu0 0
    %3063 = vmatmul.mubr.bf16.gmra.mrb[0].mxu0 %v3029
    %v3064 = vpop.f32.mrb[0].mxu0
    %v3065 = vadd.f32 0.0, %v3064
    %v3066 = vpop.f32.mrb[0].mxu0
    %v3067 = vadd.f32 0.0, %v3066
    %v3068 = vpop.f32.mrb[0].mxu0
    %v3069 = vpop.f32.mrb[0].mxu0
    %3070 = vdwg.mxu0
    %3071 = vmatprep.subr.bf16.mxu0 %v1187
    %3072 = vmatpush1.bf16.msra.mxu0 %v1186
    %3073 = vmatprep.subr.bf16.mxu0 %v1191
    %3074 = vmatpush1.bf16.msra.mxu0 %v1190
    %3075 = vmatprep.subr.bf16.mxu0 %v1195
    %3076 = vmatpush1.bf16.msra.mxu0 %v1194
    %3077 = vmatprep.subr.bf16.mxu0 %v1199
    %3078 = vmatpush1.bf16.msra.mxu0 %v1198
    %3079 = vmatprep.subr.bf16.mxu0 %v1203
    %3080 = vmatpush1.bf16.msra.mxu0 %v1202
    %3081 = vmatprep.subr.bf16.mxu0 %v1207
    %3082 = vmatpush1.bf16.msra.mxu0 %v1206
    %3083 = vmatprep.subr.bf16.mxu0 %v1211
    %3084 = vmatpush1.bf16.msra.mxu0 %v1210
    %3085 = vmatprep.subr.bf16.mxu0 %v1215
    %3086 = vmatpush1.bf16.msra.mxu0 %v1214
    %3087 = vmatprep.subr.bf16.mxu0 0
    %3088 = vmatpush1.bf16.msra.mxu0 0
    %3089 = vmatprep.subr.bf16.mxu0 0
    %3090 = vmatpush1.bf16.msra.mxu0 0
    %3091 = vmatprep.subr.bf16.mxu0 0
    %3092 = vmatpush1.bf16.msra.mxu0 0
    %3093 = vmatprep.subr.bf16.mxu0 0
    %3094 = vmatpush1.bf16.msra.mxu0 0
    %3095 = vmatprep.subr.bf16.mxu0 0
    %3096 = vmatpush1.bf16.msra.mxu0 0
    %3097 = vmatprep.subr.bf16.mxu0 0
    %3098 = vmatpush1.bf16.msra.mxu0 0
    %3099 = vmatprep.subr.bf16.mxu0 0
    %3100 = vmatpush1.bf16.msra.mxu0 0
    %3101 = vmatprep.subr.bf16.mxu0 0
    %3102 = vmatpush1.bf16.msra.mxu0 0
    %3103 = vmatprep.mubr.bf16.mxu0 0
    %3104 = vmatmul.mubr.bf16.gmra.mrb[0].mxu0 %v3029
    %v3105 = vpop.f32.mrb[0].mxu0
    %v3106 = vadd.f32 0.0, %v3105
    %v3107 = vpop.f32.mrb[0].mxu0
    %v3108 = vadd.f32 0.0, %v3107
    %v3109 = vpop.f32.mrb[0].mxu0
    %v3110 = vpop.f32.mrb[0].mxu0
    %3111 = vdwg.mxu0
    %v3112 = vadd.f32 %v2982, %v3065
    %v3113 = vadd.f32 %v2984, %v3067
    %v3114 = vadd.f32 %v3023, %v3106
    %v3115 = vadd.f32 %v3025, %v3108
    %v3116 = vmul.f32 %v3112, 0.5
    %v3117 = vmul.f32 %v3113, 0.5
    %v3118 = vmul.f32 %v3114, 0.5
    %v3119 = vtanh.pop %v3116
    %v3120 = vtanh.pop %v3117
    %v3121 = vtanh.pop %v3118
    %v3122 = vmul.f32 %v3119, 0.5
    %v3123 = vmul.f32 %v3120, 0.5
    %v3124 = vmul.f32 %v3121, 0.5
    %v3125 = vadd.f32 %v3122, 0.5
    %v3126 = vadd.f32 %v3123, 0.5
    %v3127 = vadd.f32 %v3124, 0.5
    %v3128 = vtanh.pop %v3115
    %v3129 = vmul.f32 %v3126, %v2834
    %v3130 = vmul.f32 %v3125, %v3128
    %v3131 = vadd.f32 %v3129, %v3130
    %v3132 = vtanh.pop %v3131
    %v3133 = vmul.f32 %v3127, %v3132
    %s3134 = scalar_lea.vmem [#allocation2], 224
    %v3135 = vld [vmem:[%s3134] sm:$0xff]
    %v3136 = vld [vmem:[%s3134 + $0x8] sm:$0xff]
    %v3137 = vld [vmem:[%s3134 + $0x10] sm:$0xff]
    %v3138 = vld [vmem:[%s3134 + $0x18] sm:$0xff]
    %3139 = vmatprep.subr.bf16.mxu0 %v589
    %3140 = vmatpush1.bf16.msra.mxu0 %v588
    %3141 = vmatprep.subr.bf16.mxu0 %v593
    %3142 = vmatpush1.bf16.msra.mxu0 %v592
    %3143 = vmatprep.subr.bf16.mxu0 %v597
    %3144 = vmatpush1.bf16.msra.mxu0 %v596
    %3145 = vmatprep.subr.bf16.mxu0 %v601
    %3146 = vmatpush1.bf16.msra.mxu0 %v600
    %3147 = vmatprep.subr.bf16.mxu0 %v605
    %3148 = vmatpush1.bf16.msra.mxu0 %v604
    %3149 = vmatprep.subr.bf16.mxu0 %v609
    %3150 = vmatpush1.bf16.msra.mxu0 %v608
    %3151 = vmatprep.subr.bf16.mxu0 %v613
    %3152 = vmatpush1.bf16.msra.mxu0 %v612
    %3153 = vmatprep.subr.bf16.mxu0 %v617
    %3154 = vmatpush1.bf16.msra.mxu0 %v616
    %3155 = vmatprep.subr.bf16.mxu0 0
    %3156 = vmatpush1.bf16.msra.mxu0 0
    %3157 = vmatprep.subr.bf16.mxu0 0
    %3158 = vmatpush1.bf16.msra.mxu0 0
    %3159 = vmatprep.subr.bf16.mxu0 0
    %3160 = vmatpush1.bf16.msra.mxu0 0
    %3161 = vmatprep.subr.bf16.mxu0 0
    %3162 = vmatpush1.bf16.msra.mxu0 0
    %3163 = vmatprep.subr.bf16.mxu0 0
    %3164 = vmatpush1.bf16.msra.mxu0 0
    %3165 = vmatprep.subr.bf16.mxu0 0
    %3166 = vmatpush1.bf16.msra.mxu0 0
    %3167 = vmatprep.subr.bf16.mxu0 0
    %3168 = vmatpush1.bf16.msra.mxu0 0
    %3169 = vmatprep.subr.bf16.mxu0 0
    %3170 = vmatpush1.bf16.msra.mxu0 0
    %3171 = vmatprep.mubr.bf16.mxu0 0
    %3172 = vmatmul.mubr.bf16.gmra.mrb[0].mxu0 %v2946
    %v3173 = vpop.f32.mrb[0].mxu0
    %v3174 = vadd.f32 0.0, %v3173
    %v3175 = vpop.f32.mrb[0].mxu0
    %v3176 = vadd.f32 0.0, %v3175
    %v3177 = vpop.f32.mrb[0].mxu0
    %v3178 = vpop.f32.mrb[0].mxu0
    %3179 = vdwg.mxu0
    %3180 = vmatprep.subr.bf16.mxu0 %v591
    %3181 = vmatpush1.bf16.msra.mxu0 %v590
    %3182 = vmatprep.subr.bf16.mxu0 %v595
    %3183 = vmatpush1.bf16.msra.mxu0 %v594
    %3184 = vmatprep.subr.bf16.mxu0 %v599
    %3185 = vmatpush1.bf16.msra.mxu0 %v598
    %3186 = vmatprep.subr.bf16.mxu0 %v603
    %3187 = vmatpush1.bf16.msra.mxu0 %v602
    %3188 = vmatprep.subr.bf16.mxu0 %v607
    %3189 = vmatpush1.bf16.msra.mxu0 %v606
    %3190 = vmatprep.subr.bf16.mxu0 %v611
    %3191 = vmatpush1.bf16.msra.mxu0 %v610
    %3192 = vmatprep.subr.bf16.mxu0 %v615
    %3193 = vmatpush1.bf16.msra.mxu0 %v614
    %3194 = vmatprep.subr.bf16.mxu0 %v619
    %3195 = vmatpush1.bf16.msra.mxu0 %v618
    %3196 = vmatprep.subr.bf16.mxu0 0
    %3197 = vmatpush1.bf16.msra.mxu0 0
    %3198 = vmatprep.subr.bf16.mxu0 0
    %3199 = vmatpush1.bf16.msra.mxu0 0
    %3200 = vmatprep.subr.bf16.mxu0 0
    %3201 = vmatpush1.bf16.msra.mxu0 0
    %3202 = vmatprep.subr.bf16.mxu0 0
    %3203 = vmatpush1.bf16.msra.mxu0 0
    %3204 = vmatprep.subr.bf16.mxu0 0
    %3205 = vmatpush1.bf16.msra.mxu0 0
    %3206 = vmatprep.subr.bf16.mxu0 0
    %3207 = vmatpush1.bf16.msra.mxu0 0
    %3208 = vmatprep.subr.bf16.mxu0 0
    %3209 = vmatpush1.bf16.msra.mxu0 0
    %3210 = vmatprep.subr.bf16.mxu0 0
    %3211 = vmatpush1.bf16.msra.mxu0 0
    %3212 = vmatprep.mubr.bf16.mxu0 0
    %3213 = vmatmul.mubr.bf16.gmra.mrb[0].mxu0 %v2946
    %v3214 = vpop.f32.mrb[0].mxu0
    %v3215 = vadd.f32 0.0, %v3214
    %v3216 = vpop.f32.mrb[0].mxu0
    %v3217 = vadd.f32 0.0, %v3216
    %v3218 = vpop.f32.mrb[0].mxu0
    %v3219 = vpop.f32.mrb[0].mxu0
    %3220 = vdwg.mxu0
    %v3221 = vadd.f32 %v3135, %v3174
    %v3222 = vadd.f32 %v3136, %v3176
    %v3223 = vadd.f32 %v3137, %v3215
    %v3224 = vadd.f32 %v3138, %v3217
    %v3225 = vmul.f32 %v3221, 0.5
    %v3226 = vmul.f32 %v3222, 0.5
    %v3227 = vmul.f32 %v3223, 0.5
    %v3228 = vtanh.pop %v3225
    %v3229 = vtanh.pop %v3226
    %v3230 = vtanh.pop %v3227
    %v3231 = vmul.f32 %v3228, 0.5
    %v3232 = vmul.f32 %v3229, 0.5
    %v3233 = vmul.f32 %v3230, 0.5
    %v3234 = vadd.f32 %v3231, 0.5
    %v3235 = vadd.f32 %v3232, 0.5
    %v3236 = vadd.f32 %v3233, 0.5
    %v3237 = vtanh.pop %v3224
    %v3238 = vmul.f32 %v3235, %v2943
    %v3239 = vmul.f32 %v3234, %v3237
    %v3240 = vadd.f32 %v3238, %v3239
    %v3241 = vtanh.pop %v3240
    %v3242 = vmul.f32 %v3236, %v3241
    %v3243 = vpack.c.bf16 %v3242, %v3242
    %3244 = vmatprep.subr.bf16.mxu0 %v910
    %3245 = vmatpush1.bf16.msra.mxu0 %v909
    %3246 = vmatprep.subr.bf16.mxu0 %v914
    %3247 = vmatpush1.bf16.msra.mxu0 %v913
    %3248 = vmatprep.subr.bf16.mxu0 %v918
    %3249 = vmatpush1.bf16.msra.mxu0 %v917
    %3250 = vmatprep.subr.bf16.mxu0 %v922
    %3251 = vmatpush1.bf16.msra.mxu0 %v921
    %3252 = vmatprep.subr.bf16.mxu0 %v926
    %3253 = vmatpush1.bf16.msra.mxu0 %v925
    %3254 = vmatprep.subr.bf16.mxu0 %v930
    %3255 = vmatpush1.bf16.msra.mxu0 %v929
    %3256 = vmatprep.subr.bf16.mxu0 %v934
    %3257 = vmatpush1.bf16.msra.mxu0 %v933
    %3258 = vmatprep.subr.bf16.mxu0 %v938
    %3259 = vmatpush1.bf16.msra.mxu0 %v937
    %3260 = vmatprep.subr.bf16.mxu0 0
    %3261 = vmatpush1.bf16.msra.mxu0 0
    %3262 = vmatprep.subr.bf16.mxu0 0
    %3263 = vmatpush1.bf16.msra.mxu0 0
    %3264 = vmatprep.subr.bf16.mxu0 0
    %3265 = vmatpush1.bf16.msra.mxu0 0
    %3266 = vmatprep.subr.bf16.mxu0 0
    %3267 = vmatpush1.bf16.msra.mxu0 0
    %3268 = vmatprep.subr.bf16.mxu0 0
    %3269 = vmatpush1.bf16.msra.mxu0 0
    %3270 = vmatprep.subr.bf16.mxu0 0
    %3271 = vmatpush1.bf16.msra.mxu0 0
    %3272 = vmatprep.subr.bf16.mxu0 0
    %3273 = vmatpush1.bf16.msra.mxu0 0
    %3274 = vmatprep.subr.bf16.mxu0 0
    %3275 = vmatpush1.bf16.msra.mxu0 0
    %3276 = vmatprep.mubr.bf16.mxu0 0
    %3277 = vmatmul.mubr.bf16.gmra.mrb[0].mxu0 %v3243
    %v3278 = vpop.f32.mrb[0].mxu0
    %v3279 = vadd.f32 %v796, %v3278
    %v3280 = vpop.f32.mrb[0].mxu0
    %v3281 = vadd.f32 %v800, %v3280
    %v3282 = vpop.f32.mrb[0].mxu0
    %v3283 = vpop.f32.mrb[0].mxu0
    %3284 = vdwg.mxu0
    %3285 = vmatprep.subr.bf16.mxu0 %v912
    %3286 = vmatpush1.bf16.msra.mxu0 %v911
    %3287 = vmatprep.subr.bf16.mxu0 %v916
    %3288 = vmatpush1.bf16.msra.mxu0 %v915
    %3289 = vmatprep.subr.bf16.mxu0 %v920
    %3290 = vmatpush1.bf16.msra.mxu0 %v919
    %3291 = vmatprep.subr.bf16.mxu0 %v924
    %3292 = vmatpush1.bf16.msra.mxu0 %v923
    %3293 = vmatprep.subr.bf16.mxu0 %v928
    %3294 = vmatpush1.bf16.msra.mxu0 %v927
    %3295 = vmatprep.subr.bf16.mxu0 %v932
    %3296 = vmatpush1.bf16.msra.mxu0 %v931
    %3297 = vmatprep.subr.bf16.mxu0 %v936
    %3298 = vmatpush1.bf16.msra.mxu0 %v935
    %3299 = vmatprep.subr.bf16.mxu0 %v940
    %3300 = vmatpush1.bf16.msra.mxu0 %v939
    %3301 = vmatprep.subr.bf16.mxu0 0
    %3302 = vmatpush1.bf16.msra.mxu0 0
    %3303 = vmatprep.subr.bf16.mxu0 0
    %3304 = vmatpush1.bf16.msra.mxu0 0
    %3305 = vmatprep.subr.bf16.mxu0 0
    %3306 = vmatpush1.bf16.msra.mxu0 0
    %3307 = vmatprep.subr.bf16.mxu0 0
    %3308 = vmatpush1.bf16.msra.mxu0 0
    %3309 = vmatprep.subr.bf16.mxu0 0
    %3310 = vmatpush1.bf16.msra.mxu0 0
    %3311 = vmatprep.subr.bf16.mxu0 0
    %3312 = vmatpush1.bf16.msra.mxu0 0
    %3313 = vmatprep.subr.bf16.mxu0 0
    %3314 = vmatpush1.bf16.msra.mxu0 0
    %3315 = vmatprep.subr.bf16.mxu0 0
    %3316 = vmatpush1.bf16.msra.mxu0 0
    %3317 = vmatprep.mubr.bf16.mxu0 0
    %3318 = vmatmul.mubr.bf16.gmra.mrb[0].mxu0 %v3243
    %v3319 = vpop.f32.mrb[0].mxu0
    %v3320 = vadd.f32 %v804, %v3319
    %v3321 = vpop.f32.mrb[0].mxu0
    %v3322 = vadd.f32 %v808, %v3321
    %v3323 = vpop.f32.mrb[0].mxu0
    %v3324 = vpop.f32.mrb[0].mxu0
    %3325 = vdwg.mxu0
    %v3326 = vpack.c.bf16 %v3133, %v3133
    %3327 = vmatprep.subr.bf16.mxu0 %v1185
    %3328 = vmatpush1.bf16.msra.mxu0 %v1184
    %3329 = vmatprep.subr.bf16.mxu0 %v1189
    %3330 = vmatpush1.bf16.msra.mxu0 %v1188
    %3331 = vmatprep.subr.bf16.mxu0 %v1193
    %3332 = vmatpush1.bf16.msra.mxu0 %v1192
    %3333 = vmatprep.subr.bf16.mxu0 %v1197
    %3334 = vmatpush1.bf16.msra.mxu0 %v1196
    %3335 = vmatprep.subr.bf16.mxu0 %v1201
    %3336 = vmatpush1.bf16.msra.mxu0 %v1200
    %3337 = vmatprep.subr.bf16.mxu0 %v1205
    %3338 = vmatpush1.bf16.msra.mxu0 %v1204
    %3339 = vmatprep.subr.bf16.mxu0 %v1209
    %3340 = vmatpush1.bf16.msra.mxu0 %v1208
    %3341 = vmatprep.subr.bf16.mxu0 %v1213
    %3342 = vmatpush1.bf16.msra.mxu0 %v1212
    %3343 = vmatprep.subr.bf16.mxu0 0
    %3344 = vmatpush1.bf16.msra.mxu0 0
    %3345 = vmatprep.subr.bf16.mxu0 0
    %3346 = vmatpush1.bf16.msra.mxu0 0
    %3347 = vmatprep.subr.bf16.mxu0 0
    %3348 = vmatpush1.bf16.msra.mxu0 0
    %3349 = vmatprep.subr.bf16.mxu0 0
    %3350 = vmatpush1.bf16.msra.mxu0 0
    %3351 = vmatprep.subr.bf16.mxu0 0
    %3352 = vmatpush1.bf16.msra.mxu0 0
    %3353 = vmatprep.subr.bf16.mxu0 0
    %3354 = vmatpush1.bf16.msra.mxu0 0
    %3355 = vmatprep.subr.bf16.mxu0 0
    %3356 = vmatpush1.bf16.msra.mxu0 0
    %3357 = vmatprep.subr.bf16.mxu0 0
    %3358 = vmatpush1.bf16.msra.mxu0 0
    %3359 = vmatprep.mubr.bf16.mxu0 0
    %3360 = vmatmul.mubr.bf16.gmra.mrb[0].mxu0 %v3326
    %v3361 = vpop.f32.mrb[0].mxu0
    %v3362 = vadd.f32 0.0, %v3361
    %v3363 = vpop.f32.mrb[0].mxu0
    %v3364 = vadd.f32 0.0, %v3363
    %v3365 = vpop.f32.mrb[0].mxu0
    %v3366 = vpop.f32.mrb[0].mxu0
    %3367 = vdwg.mxu0
    %3368 = vmatprep.subr.bf16.mxu0 %v1187
    %3369 = vmatpush1.bf16.msra.mxu0 %v1186
    %3370 = vmatprep.subr.bf16.mxu0 %v1191
    %3371 = vmatpush1.bf16.msra.mxu0 %v1190
    %3372 = vmatprep.subr.bf16.mxu0 %v1195
    %3373 = vmatpush1.bf16.msra.mxu0 %v1194
    %3374 = vmatprep.subr.bf16.mxu0 %v1199
    %3375 = vmatpush1.bf16.msra.mxu0 %v1198
    %3376 = vmatprep.subr.bf16.mxu0 %v1203
    %3377 = vmatpush1.bf16.msra.mxu0 %v1202
    %3378 = vmatprep.subr.bf16.mxu0 %v1207
    %3379 = vmatpush1.bf16.msra.mxu0 %v1206
    %3380 = vmatprep.subr.bf16.mxu0 %v1211
    %3381 = vmatpush1.bf16.msra.mxu0 %v1210
    %3382 = vmatprep.subr.bf16.mxu0 %v1215
    %3383 = vmatpush1.bf16.msra.mxu0 %v1214
    %3384 = vmatprep.subr.bf16.mxu0 0
    %3385 = vmatpush1.bf16.msra.mxu0 0
    %3386 = vmatprep.subr.bf16.mxu0 0
    %3387 = vmatpush1.bf16.msra.mxu0 0
    %3388 = vmatprep.subr.bf16.mxu0 0
    %3389 = vmatpush1.bf16.msra.mxu0 0
    %3390 = vmatprep.subr.bf16.mxu0 0
    %3391 = vmatpush1.bf16.msra.mxu0 0
    %3392 = vmatprep.subr.bf16.mxu0 0
    %3393 = vmatpush1.bf16.msra.mxu0 0
    %3394 = vmatprep.subr.bf16.mxu0 0
    %3395 = vmatpush1.bf16.msra.mxu0 0
    %3396 = vmatprep.subr.bf16.mxu0 0
    %3397 = vmatpush1.bf16.msra.mxu0 0
    %3398 = vmatprep.subr.bf16.mxu0 0
    %3399 = vmatpush1.bf16.msra.mxu0 0
    %3400 = vmatprep.mubr.bf16.mxu0 0
    %3401 = vmatmul.mubr.bf16.gmra.mrb[0].mxu0 %v3326
    %v3402 = vpop.f32.mrb[0].mxu0
    %v3403 = vadd.f32 0.0, %v3402
    %v3404 = vpop.f32.mrb[0].mxu0
    %v3405 = vadd.f32 0.0, %v3404
    %v3406 = vpop.f32.mrb[0].mxu0
    %v3407 = vpop.f32.mrb[0].mxu0
    %3408 = vdwg.mxu0
    %v3409 = vadd.f32 %v3279, %v3362
    %v3410 = vadd.f32 %v3281, %v3364
    %v3411 = vadd.f32 %v3320, %v3403
    %v3412 = vadd.f32 %v3322, %v3405
    %v3413 = vmul.f32 %v3409, 0.5
    %v3414 = vmul.f32 %v3410, 0.5
    %v3415 = vmul.f32 %v3411, 0.5
    %v3416 = vtanh.pop %v3413
    %v3417 = vtanh.pop %v3414
    %v3418 = vtanh.pop %v3415
    %v3419 = vmul.f32 %v3416, 0.5
    %v3420 = vmul.f32 %v3417, 0.5
    %v3421 = vmul.f32 %v3418, 0.5
    %v3422 = vadd.f32 %v3419, 0.5
    %v3423 = vadd.f32 %v3420, 0.5
    %v3424 = vadd.f32 %v3421, 0.5
    %v3425 = vtanh.pop %v3412
    %v3426 = vmul.f32 %v3423, %v3131
    %v3427 = vmul.f32 %v3422, %v3425
    %v3428 = vadd.f32 %v3426, %v3427
    %v3429 = vtanh.pop %v3428
    %v3430 = vmul.f32 %v3424, %v3429
    %v3431 = vpack.c.bf16 %v3430, %v3430
    %v3432 = vld [vmem:[%s4] sm:$0xf]
    %v3433 = vld [vmem:[%s4 + $0x4] sm:$0xf]
    %v3434 = vld [vmem:[%s4 + $0x8] sm:$0xf]
    %v3435 = vld [vmem:[%s4 + $0xc] sm:$0xf]
    %v3436 = vld [vmem:[%s4 + $0x10] sm:$0xf]
    %v3437 = vld [vmem:[%s4 + $0x14] sm:$0xf]
    %v3438 = vld [vmem:[%s4 + $0x18] sm:$0xf]
    %v3439 = vld [vmem:[%s4 + $0x1c] sm:$0xf]
    %v3440 = vld [vmem:[%s4 + $0x20] sm:$0xf]
    %v3441 = vld [vmem:[%s4 + $0x24] sm:$0xf]
    %v3442 = vld [vmem:[%s4 + $0x28] sm:$0xf]
    %v3443 = vld [vmem:[%s4 + $0x2c] sm:$0xf]
    %v3444 = vld [vmem:[%s4 + $0x30] sm:$0xf]
    %v3445 = vld [vmem:[%s4 + $0x34] sm:$0xf]
    %v3446 = vld [vmem:[%s4 + $0x38] sm:$0xf]
    %v3447 = vld [vmem:[%s4 + $0x3c] sm:$0xf]
    %v3448 = vld [vmem:[%s5] sm:$0x1]
    %v3450 = vlaneseq
    %v3451 = vshrl.u32 %v3450, 7
    %v3452 = vsub.s32 0, %v3451
    %v3453 = vrot.slane %v3448, %v3452
    %v3471 = vunpack.c.l.b16 %v3432
    %v3472 = vunpack.c.l.b16 %v3433
    %v3473 = vunpack.c.l.b16 %v3434
    %v3474 = vunpack.c.l.b16 %v3435
    %v3475 = vunpack.c.l.b16 %v3436
    %v3476 = vunpack.c.l.b16 %v3437
    %v3477 = vunpack.c.l.b16 %v3438
    %v3478 = vunpack.c.l.b16 %v3439
    %v3479 = vunpack.c.l.b16 %v3440
    %v3480 = vunpack.c.l.b16 %v3441
    %v3481 = vunpack.c.l.b16 %v3442
    %v3482 = vunpack.c.l.b16 %v3443
    %v3483 = vunpack.c.l.b16 %v3444
    %v3484 = vunpack.c.l.b16 %v3445
    %v3485 = vunpack.c.l.b16 %v3446
    %v3486 = vunpack.c.l.b16 %v3447
    %v3487 = vpack.c.b16 %v3472, %v3471
    %v3488 = vpack.c.b16 %v3474, %v3473
    %v3489 = vpack.c.b16 %v3476, %v3475
    %v3490 = vpack.c.b16 %v3478, %v3477
    %v3491 = vpack.c.b16 %v3480, %v3479
    %v3492 = vpack.c.b16 %v3482, %v3481
    %v3493 = vpack.c.b16 %v3484, %v3483
    %v3494 = vpack.c.b16 %v3486, %v3485
    %3503 = vmatprep.subr.bf16.mxu0 0
    %3504 = vmatpush1.bf16.msra.mxu0 %v3487
    %3505 = vmatprep.subr.bf16.mxu0 0
    %3506 = vmatpush1.bf16.msra.mxu0 %v3488
    %3507 = vmatprep.subr.bf16.mxu0 0
    %3508 = vmatpush1.bf16.msra.mxu0 %v3489
    %3509 = vmatprep.subr.bf16.mxu0 0
    %3510 = vmatpush1.bf16.msra.mxu0 %v3490
    %3511 = vmatprep.subr.bf16.mxu0 0
    %3512 = vmatpush1.bf16.msra.mxu0 %v3491
    %3513 = vmatprep.subr.bf16.mxu0 0
    %3514 = vmatpush1.bf16.msra.mxu0 %v3492
    %3515 = vmatprep.subr.bf16.mxu0 0
    %3516 = vmatpush1.bf16.msra.mxu0 %v3493
    %3517 = vmatprep.subr.bf16.mxu0 0
    %3518 = vmatpush1.bf16.msra.mxu0 %v3494
    %3519 = vmatprep.subr.bf16.mxu0 0
    %3520 = vmatpush1.bf16.msra.mxu0 0
    %3521 = vmatprep.subr.bf16.mxu0 0
    %3522 = vmatpush1.bf16.msra.mxu0 0
    %3523 = vmatprep.subr.bf16.mxu0 0
    %3524 = vmatpush1.bf16.msra.mxu0 0
    %3525 = vmatprep.subr.bf16.mxu0 0
    %3526 = vmatpush1.bf16.msra.mxu0 0
    %3527 = vmatprep.subr.bf16.mxu0 0
    %3528 = vmatpush1.bf16.msra.mxu0 0
    %3529 = vmatprep.subr.bf16.mxu0 0
    %3530 = vmatpush1.bf16.msra.mxu0 0
    %3531 = vmatprep.subr.bf16.mxu0 0
    %3532 = vmatpush1.bf16.msra.mxu0 0
    %3533 = vmatprep.subr.bf16.mxu0 0
    %3534 = vmatpush1.bf16.msra.mxu0 0
    %3535 = vmatprep.mubr.bf16.mxu0 0
    %3536 = vmatmul.mubr.bf16.gmra.mrb[0].mxu0 %v3431
    %v3537 = vpop.f32.mrb[0].mxu0
    %v3538 = vadd.f32 %v3453, %v3537
    %v3539 = vpop.f32.mrb[0].mxu0
    %v3540 = vpop.f32.mrb[0].mxu0
    %v3541 = vpop.f32.mrb[0].mxu0
    %3542 = vdwg.mxu0
    %3543 = vst [vmem:[%s6] sm:$0xff] %v3538
    // Predicated region
    $region34: #{net_forward.1} parent=1 // pred_check
      _
    $region35: #{net_forward.1} parent=1 // pred_check_branch
      %3545 = sbr.rel (0) target = $region37
    $region36: #{net_forward.1} parent=1 // pred_region
      _
    $region37: #{net_forward.1} parent=1 // pred_fallthru
      _
    // Predicated region
    $region38: #{net_forward.1} parent=1 // pred_check
      _
    $region39: #{net_forward.1} parent=1 // pred_check_branch
      %3547 = sbr.rel (0) target = $region41
    $region40: #{net_forward.1} parent=1 // pred_region
      _
    $region41: #{net_forward.1} parent=1 // pred_fallthru
      _
    %3548 = vsyncpa [#allocation4], 1
    %3549 = vsyncpa [#allocation6], 1

</llo_original>
